<compile_context>
chip_gen: v7x
topology: tpu7x:2x2x1
jax: 0.10.0
libtpu: 0.0.40
codegen_flags: <defaults>
</compile_context>

<pallas_src>
import functools
import math

import jax
import jax.numpy as jnp
from jax.experimental import pallas as pl
from jax.experimental.pallas import tpu as pltpu


def _decoder_block_kernel(x_ref, w1_ref, b1_ref, w2_ref, b2_ref, o_ref,
                          mbuf, *, height, width):
    """One batch element per grid step (lane-dense NCHW, spatial on lanes).

    x_ref:  (Cin, H*W + 2*m)   bf16, zero margins pre-padded in HBM by wrapper
    w1_ref: (9, Cmid, Cin)     bf16 conv1 taps, BN scale folded in
    b1_ref: (Cmid, 1)          f32 folded BN shift
    w2_ref: (9, Cout, Cmid)    bf16 conv2 taps, BN scale folded in
    b2_ref: (Cout, 1)          f32 folded BN shift
    o_ref:  (Cout, H*W)        f32 output tile
    mbuf:   (Cmid, H*W + 2*m)  bf16 VMEM scratch for the intermediate activation
    """
    h, w = height, width
    l = h * w
    m = w + 1  # margin = max |flattened 3x3 tap offset|

    # Column masks kill the left/right wrap-around of the flattened rows; rows
    # over/underflow lands in the zero margins.  Masks are applied once per
    # dc-group on the (Cout, L) accumulator (2 masked groups per conv).
    col = jax.lax.broadcasted_iota(jnp.int32, (1, l), 1) % w
    not_first_col = (col != 0).astype(jnp.float32)
    not_last_col = (col != (w - 1)).astype(jnp.float32)

    def conv3x3_bn_relu(read_patch, w_ref, b_ref):
        c_out = w_ref.shape[1]
        acc = jnp.zeros((c_out, l), jnp.float32)
        for dc in (-1, 0, 1):                       # group taps by column shift
            gacc = jnp.zeros((c_out, l), jnp.float32)
            for dr in (-1, 0, 1):
                tap = (dr + 1) * 3 + (dc + 1)
                patch = read_patch(dr * w + dc)     # (Csrc, L) bf16
                gacc = gacc + jnp.dot(w_ref[tap], patch,
                                      preferred_element_type=jnp.float32)
            if dc == -1:
                gacc = gacc * not_first_col
            elif dc == 1:
                gacc = gacc * not_last_col
            acc = acc + gacc
        # Folded BN shift (scale already in the weights) + ReLU, in f32.
        # (Bias stays a tiny (C,1) f32 VMEM tile -- negligible at these sizes.)
        return jnp.maximum(acc + b_ref[...], 0.0)

    # --- conv1: taps read straight from the HBM-padded input block
    #            (no staging copy, no scratch zeroing).
    y1 = conv3x3_bn_relu(lambda s: x_ref[:, pl.ds(m + s, l)], w1_ref, b1_ref)

    # --- conv2: intermediate stays in VMEM; only the two zero margins are
    #            rewritten each step, then the interior is overwritten.
    zeros_margin = jnp.zeros((mbuf.shape[0], m), mbuf.dtype)
    mbuf[:, pl.ds(0, m)] = zeros_margin
    mbuf[:, pl.ds(m + l, m)] = zeros_margin
    mbuf[:, pl.ds(m, l)] = y1.astype(mbuf.dtype)
    y2 = conv3x3_bn_relu(lambda s: mbuf[:, pl.ds(m + s, l)], w2_ref, b2_ref)

    o_ref[...] = y2.astype(o_ref.dtype)             # lane-dense (Cout, L) store


def _fold_bn(weight_oihw, gamma, beta, running_mean, running_var, eps):
    """Fold BN (inference form) scale into conv weights; return taps + shift."""
    c_out, c_in = weight_oihw.shape[0], weight_oihw.shape[1]
    scale = (gamma.astype(jnp.float32) /
             jnp.sqrt(running_var.astype(jnp.float32) + eps))
    w = weight_oihw.astype(jnp.float32) * scale[:, None, None, None]
    # OIHW -> (KH*KW, Cout, Cin): each tap is a ready-to-use (Cout, Cin) matrix.
    w_taps = jnp.transpose(w, (2, 3, 0, 1)).reshape(-1, c_out, c_in)
    shift = (beta.astype(jnp.float32) -
             running_mean.astype(jnp.float32) * scale).reshape(c_out, 1)
    return w_taps, shift


def _nearest_upsample(x, scale_factor):
    """PyTorch F.interpolate(mode='nearest') equivalent (NCHW)."""
    n, c, h, w = x.shape
    out_h = int(math.floor(h * scale_factor))
    out_w = int(math.floor(w * scale_factor))
    rows = jnp.floor(jnp.arange(out_h) * (h / out_h)).astype(jnp.int32)
    cols = jnp.floor(jnp.arange(out_w) * (w / out_w)).astype(jnp.int32)
    return jnp.take(jnp.take(x, rows, axis=2), cols, axis=3)


def decoder_block_forward(x, skip, conv1_w, bn1, conv2_w, bn2,
                          *, scale_factor=2.0, eps=1e-5):
    """DecoderBlock forward: upsample -> concat(skip) -> ConvBnReLU x2 (NCHW)."""
    # TODO(synk): fuse the upsample/concat/pad staging into the kernel at
    # production resolutions to avoid materializing the concat activation.
    if scale_factor != 1.0:
        x = _nearest_upsample(x, scale_factor)
    if skip is not None:
        x = jnp.concatenate([x, skip], axis=1)

    n, c_in, h, w = x.shape
    c_mid = conv1_w.shape[0]
    c_out = conv2_w.shape[0]
    l = h * w
    margin = w + 1

    w1_taps, b1 = _fold_bn(conv1_w, *bn1, eps)
    w2_taps, b2 = _fold_bn(conv2_w, *bn2, eps)
    # bf16 MXU inputs (accumulation stays f32 via preferred_element_type).
    w1_taps = w1_taps.astype(jnp.bfloat16)
    w2_taps = w2_taps.astype(jnp.bfloat16)

    # Flatten NCHW spatial onto lanes and pre-pad the zero row-margins in HBM
    # so the kernel reads conv1 tap slices directly from its input block.
    x_pad = jnp.pad(x.astype(jnp.bfloat16).reshape(n, c_in, l),
                    ((0, 0), (0, 0), (margin, margin)))

    kernel = functools.partial(_decoder_block_kernel, height=h, width=w)

    flops = 2 * 9 * n * l * (c_in * c_mid + c_mid * c_out)
    bytes_accessed = (2 * (x_pad.size + w1_taps.size + w2_taps.size)
                      + 4 * (b1.size + b2.size + n * c_out * l))

    out_flat = pl.pallas_call(
        kernel,
        out_shape=jax.ShapeDtypeStruct((n, c_out, l), jnp.float32),
        grid_spec=pltpu.PrefetchScalarGridSpec(
            num_scalar_prefetch=0,
            grid=(n,),
            in_specs=[
                pl.BlockSpec((None, c_in, l + 2 * margin), lambda i: (i, 0, 0)),
                pl.BlockSpec((9, c_mid, c_in), lambda i: (0, 0, 0)),
                pl.BlockSpec((c_mid, 1), lambda i: (0, 0)),
                pl.BlockSpec((9, c_out, c_mid), lambda i: (0, 0, 0)),
                pl.BlockSpec((c_out, 1), lambda i: (0, 0)),
            ],
            out_specs=pl.BlockSpec((None, c_out, l), lambda i: (i, 0, 0)),
            scratch_shapes=[
                pltpu.VMEM((c_mid, l + 2 * margin), jnp.bfloat16),
            ],
        ),
        compiler_params=pltpu.CompilerParams(
            dimension_semantics=("parallel",)),
        cost_estimate=pl.CostEstimate(
            flops=flops, transcendentals=0, bytes_accessed=bytes_accessed),
    )(x_pad, w1_taps, b1, w2_taps, b2)

    # Split the flattened spatial dim back out: NCHW, matches PyTorch layout.
    return out_flat.reshape(n, c_out, h, w)


if __name__ == "__main__":
    # DecoderBlock(in_channels=8, out_channels=8, scale_factor=2.0)
    #   x:    (2, 4, 16, 16)  -> upsampled to (2, 4, 32, 32)
    #   skip: (2, 4, 32, 32)  -> concat => 8 input channels for conv1.
    batch, c_x, c_skip, h0, w0 = 2, 4, 4, 16, 16
    in_channels = c_x + c_skip
    out_channels = 8
    scale_factor = 2.0
    eps = 1e-5

    key = jax.random.PRNGKey(0)
    kx, ks, k1, k2 = jax.random.split(key, 4)
    x = jax.random.normal(kx, (batch, c_x, h0, w0), dtype=jnp.float32)
    skip = jax.random.normal(ks, (batch, c_skip, 2 * h0, 2 * w0),
                             dtype=jnp.float32)
    conv1_w = 0.1 * jax.random.normal(
        k1, (out_channels, in_channels, 3, 3), dtype=jnp.float32)
    conv2_w = 0.1 * jax.random.normal(
        k2, (out_channels, out_channels, 3, 3), dtype=jnp.float32)

    # PyTorch BatchNorm2d default parameters / running stats (inference form).
    def default_bn(c):
        return (jnp.ones((c,), jnp.float32), jnp.zeros((c,), jnp.float32),
                jnp.zeros((c,), jnp.float32), jnp.ones((c,), jnp.float32))

    bn1 = default_bn(out_channels)
    bn2 = default_bn(out_channels)

    fwd = jax.jit(functools.partial(decoder_block_forward,
                                    scale_factor=scale_factor, eps=eps))
    out = fwd(x, skip, conv1_w, bn1, conv2_w, bn2)
    out = jax.block_until_ready(out)

    # ---- plain-JAX f32 reference (same semantics as the PyTorch module) ----
    xu = jnp.repeat(jnp.repeat(x, 2, axis=2), 2, axis=3)   # nearest, scale=2
    xc = jnp.concatenate([xu, skip], axis=1)

    def conv_bn_relu_ref(inp, weight, bn):
        gamma, beta, mean, var = bn
        y = jax.lax.conv_general_dilated(
            inp, weight, window_strides=(1, 1),
            padding=((1, 1), (1, 1)),
            dimension_numbers=("NCHW", "OIHW", "NCHW"),
            precision=jax.lax.Precision.HIGHEST)
        b = (1, weight.shape[0], 1, 1)
        y = (gamma.reshape(b) * (y - mean.reshape(b)) /
             jnp.sqrt(var.reshape(b) + eps) + beta.reshape(b))
        return jnp.maximum(y, 0.0)

    ref = conv_bn_relu_ref(conv_bn_relu_ref(xc, conv1_w, bn1), conv2_w, bn2)

    assert out.shape == ref.shape, (out.shape, ref.shape)
    max_err = float(jnp.max(jnp.abs(out - ref)))
    # Tolerance sized for two chained 3x3 convs with bf16 MXU inputs
    # (f32 accumulation) vs the f32 HIGHEST-precision reference.
    assert jnp.allclose(out, ref, rtol=2e-2, atol=2e-2), max_err

    print("KERNEL_OK")
</pallas_src>

<mosaic_0001>
module attributes {stable_mosaic.version = 11 : i64} {
  func.func @_decoder_block_kernel(%arg0: i32, %arg1: memref<1x8x1090xbf16, #tpu.memory_space<vmem>>, %arg2: memref<9x8x8xbf16, #tpu.memory_space<vmem>>, %arg3: memref<8x1xf32, #tpu.memory_space<vmem>>, %arg4: memref<9x8x8xbf16, #tpu.memory_space<vmem>>, %arg5: memref<8x1xf32, #tpu.memory_space<vmem>>, %arg6: memref<1x8x1024xf32, #tpu.memory_space<vmem>>, %arg7: memref<8x1090xbf16, #tpu.memory_space<vmem>>) attributes {dimension_semantics = [#tpu.dimension_semantics<parallel>], iteration_bounds = array<i64: 2>, scalar_prefetch = 0 : i64, scratch_operands = 1 : i64, tpu.core_type = #tpu.core_type<tc>, window_params = [{transform_indices = @transform_0, window_bounds = array<i64: 1, 8, 1090>}, {pipeline_mode = #tpu.pipeline_mode<synchronous>, transform_indices = @transform_1, window_bounds = array<i64: 9, 8, 8>}, {pipeline_mode = #tpu.pipeline_mode<synchronous>, transform_indices = @transform_2, window_bounds = array<i64: 8, 1>}, {pipeline_mode = #tpu.pipeline_mode<synchronous>, transform_indices = @transform_3, window_bounds = array<i64: 9, 8, 8>}, {pipeline_mode = #tpu.pipeline_mode<synchronous>, transform_indices = @transform_4, window_bounds = array<i64: 8, 1>}, {transform_indices = @transform_5, window_bounds = array<i64: 1, 8, 1024>}]} {
    %0 = tpu.iota {dimensions = array<i32: 1>} : vector<1x1024xi32>
    %c32_i32 = arith.constant 32 : i32
    %c0_i32 = arith.constant 0 : i32
    %1 = arith.cmpi eq, %c32_i32, %c0_i32 : i32
    %c1_i32 = arith.constant 1 : i32
    %2 = arith.select %1, %c1_i32, %c32_i32 : i32
    %3 = vector.broadcast %2 : i32 to vector<1x1024xi32>
    %4 = arith.remsi %0, %3 : vector<1x1024xi32>
    %c0_i32_0 = arith.constant 0 : i32
    %5 = vector.broadcast %c0_i32_0 : i32 to vector<1x1024xi32>
    %6 = arith.cmpi ne, %4, %5 : vector<1x1024xi32>
    %c0_i32_1 = arith.constant 0 : i32
    %7 = vector.broadcast %c0_i32_1 : i32 to vector<1x1024xi32>
    %8 = arith.cmpi slt, %4, %7 : vector<1x1024xi32>
    %c0_i32_2 = arith.constant 0 : i32
    %9 = arith.cmpi slt, %2, %c0_i32_2 : i32
    %10 = vector.broadcast %9 : i1 to vector<1x1024xi1>
    %11 = vector.broadcast %10 : vector<1x1024xi1> to vector<1x1024xi1>
    %12 = arith.xori %8, %11 : vector<1x1024xi1>
    %13 = arith.andi %12, %6 : vector<1x1024xi1>
    %14 = vector.broadcast %2 : i32 to vector<1x1024xi32>
    %15 = arith.addi %4, %14 : vector<1x1024xi32>
    %16 = arith.select %13, %15, %4 : vector<1x1024xi1>, vector<1x1024xi32>
    %c0_i32_3 = arith.constant 0 : i32
    %17 = vector.broadcast %c0_i32_3 : i32 to vector<1x1024xi32>
    %18 = arith.cmpi ne, %16, %17 : vector<1x1024xi32>
    %19 = arith.extui %18 : vector<1x1024xi1> to vector<1x1024xi32>
    %20 = arith.sitofp %19 : vector<1x1024xi32> to vector<1x1024xf32>
    %c31_i32 = arith.constant 31 : i32
    %21 = vector.broadcast %c31_i32 : i32 to vector<1x1024xi32>
    %22 = arith.cmpi ne, %16, %21 : vector<1x1024xi32>
    %23 = arith.extui %22 : vector<1x1024xi1> to vector<1x1024xi32>
    %24 = arith.sitofp %23 : vector<1x1024xi32> to vector<1x1024xf32>
    %cst = arith.constant 0.000000e+00 : f32
    %25 = vector.broadcast %cst : f32 to vector<8x1024xf32>
    %cst_4 = arith.constant 0.000000e+00 : f32
    %26 = vector.broadcast %cst_4 : f32 to vector<8x1024xf32>
    %c0 = arith.constant 0 : index
    %c0_5 = arith.constant 0 : index
    %c0_6 = arith.constant 0 : index
    %27 = vector.load %arg1[%c0, %c0_5, %c0_6] : memref<1x8x1090xbf16, #tpu.memory_space<vmem>>, vector<1x8x1024xbf16>
    %28 = vector.shape_cast %27 : vector<1x8x1024xbf16> to vector<8x1024xbf16>
    %c0_7 = arith.constant 0 : index
    %c0_8 = arith.constant 0 : index
    %c0_9 = arith.constant 0 : index
    %29 = vector.load %arg2[%c0_7, %c0_8, %c0_9] : memref<9x8x8xbf16, #tpu.memory_space<vmem>>, vector<1x8x8xbf16>
    %30 = vector.shape_cast %29 : vector<1x8x8xbf16> to vector<8x8xbf16>
    %cst_10 = arith.constant dense<0.000000e+00> : vector<8x1024xf32>
    %31 = tpu.matmul %30, %28, %cst_10 {dimension_numbers = #tpu.dot_dimension_numbers<[1], [0], [0], [1], [0, 0, 1, 1], [], []>} : vector<8x8xbf16>, vector<8x1024xbf16>, vector<8x1024xf32> -> vector<8x1024xf32>
    %32 = arith.addf %26, %31 : vector<8x1024xf32>
    %c0_11 = arith.constant 0 : index
    %c0_12 = arith.constant 0 : index
    %c32 = arith.constant 32 : index
    %33 = vector.load %arg1[%c0_11, %c0_12, %c32] : memref<1x8x1090xbf16, #tpu.memory_space<vmem>>, vector<1x8x1024xbf16>
    %34 = vector.shape_cast %33 : vector<1x8x1024xbf16> to vector<8x1024xbf16>
    %c3 = arith.constant 3 : index
    %c0_13 = arith.constant 0 : index
    %c0_14 = arith.constant 0 : index
    %35 = vector.load %arg2[%c3, %c0_13, %c0_14] : memref<9x8x8xbf16, #tpu.memory_space<vmem>>, vector<1x8x8xbf16>
    %36 = vector.shape_cast %35 : vector<1x8x8xbf16> to vector<8x8xbf16>
    %cst_15 = arith.constant dense<0.000000e+00> : vector<8x1024xf32>
    %37 = tpu.matmul %36, %34, %cst_15 {dimension_numbers = #tpu.dot_dimension_numbers<[1], [0], [0], [1], [0, 0, 1, 1], [], []>} : vector<8x8xbf16>, vector<8x1024xbf16>, vector<8x1024xf32> -> vector<8x1024xf32>
    %38 = arith.addf %32, %37 : vector<8x1024xf32>
    %c0_16 = arith.constant 0 : index
    %c0_17 = arith.constant 0 : index
    %c64 = arith.constant 64 : index
    %39 = vector.load %arg1[%c0_16, %c0_17, %c64] : memref<1x8x1090xbf16, #tpu.memory_space<vmem>>, vector<1x8x1024xbf16>
    %40 = vector.shape_cast %39 : vector<1x8x1024xbf16> to vector<8x1024xbf16>
    %c6 = arith.constant 6 : index
    %c0_18 = arith.constant 0 : index
    %c0_19 = arith.constant 0 : index
    %41 = vector.load %arg2[%c6, %c0_18, %c0_19] : memref<9x8x8xbf16, #tpu.memory_space<vmem>>, vector<1x8x8xbf16>
    %42 = vector.shape_cast %41 : vector<1x8x8xbf16> to vector<8x8xbf16>
    %cst_20 = arith.constant dense<0.000000e+00> : vector<8x1024xf32>
    %43 = tpu.matmul %42, %40, %cst_20 {dimension_numbers = #tpu.dot_dimension_numbers<[1], [0], [0], [1], [0, 0, 1, 1], [], []>} : vector<8x8xbf16>, vector<8x1024xbf16>, vector<8x1024xf32> -> vector<8x1024xf32>
    %44 = arith.addf %38, %43 : vector<8x1024xf32>
    %45 = vector.broadcast %20 : vector<1x1024xf32> to vector<8x1024xf32>
    %46 = arith.mulf %44, %45 : vector<8x1024xf32>
    %47 = arith.addf %25, %46 : vector<8x1024xf32>
    %cst_21 = arith.constant 0.000000e+00 : f32
    %48 = vector.broadcast %cst_21 : f32 to vector<8x1024xf32>
    %c0_22 = arith.constant 0 : index
    %c0_23 = arith.constant 0 : index
    %c1 = arith.constant 1 : index
    %49 = vector.load %arg1[%c0_22, %c0_23, %c1] : memref<1x8x1090xbf16, #tpu.memory_space<vmem>>, vector<1x8x1024xbf16>
    %50 = vector.shape_cast %49 : vector<1x8x1024xbf16> to vector<8x1024xbf16>
    %c1_24 = arith.constant 1 : index
    %c0_25 = arith.constant 0 : index
    %c0_26 = arith.constant 0 : index
    %51 = vector.load %arg2[%c1_24, %c0_25, %c0_26] : memref<9x8x8xbf16, #tpu.memory_space<vmem>>, vector<1x8x8xbf16>
    %52 = vector.shape_cast %51 : vector<1x8x8xbf16> to vector<8x8xbf16>
    %cst_27 = arith.constant dense<0.000000e+00> : vector<8x1024xf32>
    %53 = tpu.matmul %52, %50, %cst_27 {dimension_numbers = #tpu.dot_dimension_numbers<[1], [0], [0], [1], [0, 0, 1, 1], [], []>} : vector<8x8xbf16>, vector<8x1024xbf16>, vector<8x1024xf32> -> vector<8x1024xf32>
    %54 = arith.addf %48, %53 : vector<8x1024xf32>
    %c0_28 = arith.constant 0 : index
    %c0_29 = arith.constant 0 : index
    %c33 = arith.constant 33 : index
    %55 = vector.load %arg1[%c0_28, %c0_29, %c33] : memref<1x8x1090xbf16, #tpu.memory_space<vmem>>, vector<1x8x1024xbf16>
    %56 = vector.shape_cast %55 : vector<1x8x1024xbf16> to vector<8x1024xbf16>
    %c4 = arith.constant 4 : index
    %c0_30 = arith.constant 0 : index
    %c0_31 = arith.constant 0 : index
    %57 = vector.load %arg2[%c4, %c0_30, %c0_31] : memref<9x8x8xbf16, #tpu.memory_space<vmem>>, vector<1x8x8xbf16>
    %58 = vector.shape_cast %57 : vector<1x8x8xbf16> to vector<8x8xbf16>
    %cst_32 = arith.constant dense<0.000000e+00> : vector<8x1024xf32>
    %59 = tpu.matmul %58, %56, %cst_32 {dimension_numbers = #tpu.dot_dimension_numbers<[1], [0], [0], [1], [0, 0, 1, 1], [], []>} : vector<8x8xbf16>, vector<8x1024xbf16>, vector<8x1024xf32> -> vector<8x1024xf32>
    %60 = arith.addf %54, %59 : vector<8x1024xf32>
    %c0_33 = arith.constant 0 : index
    %c0_34 = arith.constant 0 : index
    %c65 = arith.constant 65 : index
    %61 = vector.load %arg1[%c0_33, %c0_34, %c65] : memref<1x8x1090xbf16, #tpu.memory_space<vmem>>, vector<1x8x1024xbf16>
    %62 = vector.shape_cast %61 : vector<1x8x1024xbf16> to vector<8x1024xbf16>
    %c7 = arith.constant 7 : index
    %c0_35 = arith.constant 0 : index
    %c0_36 = arith.constant 0 : index
    %63 = vector.load %arg2[%c7, %c0_35, %c0_36] : memref<9x8x8xbf16, #tpu.memory_space<vmem>>, vector<1x8x8xbf16>
    %64 = vector.shape_cast %63 : vector<1x8x8xbf16> to vector<8x8xbf16>
    %cst_37 = arith.constant dense<0.000000e+00> : vector<8x1024xf32>
    %65 = tpu.matmul %64, %62, %cst_37 {dimension_numbers = #tpu.dot_dimension_numbers<[1], [0], [0], [1], [0, 0, 1, 1], [], []>} : vector<8x8xbf16>, vector<8x1024xbf16>, vector<8x1024xf32> -> vector<8x1024xf32>
    %66 = arith.addf %60, %65 : vector<8x1024xf32>
    %67 = arith.addf %47, %66 : vector<8x1024xf32>
    %cst_38 = arith.constant 0.000000e+00 : f32
    %68 = vector.broadcast %cst_38 : f32 to vector<8x1024xf32>
    %c0_39 = arith.constant 0 : index
    %c0_40 = arith.constant 0 : index
    %c2 = arith.constant 2 : index
    %69 = vector.load %arg1[%c0_39, %c0_40, %c2] : memref<1x8x1090xbf16, #tpu.memory_space<vmem>>, vector<1x8x1024xbf16>
    %70 = vector.shape_cast %69 : vector<1x8x1024xbf16> to vector<8x1024xbf16>
    %c2_41 = arith.constant 2 : index
    %c0_42 = arith.constant 0 : index
    %c0_43 = arith.constant 0 : index
    %71 = vector.load %arg2[%c2_41, %c0_42, %c0_43] : memref<9x8x8xbf16, #tpu.memory_space<vmem>>, vector<1x8x8xbf16>
    %72 = vector.shape_cast %71 : vector<1x8x8xbf16> to vector<8x8xbf16>
    %cst_44 = arith.constant dense<0.000000e+00> : vector<8x1024xf32>
    %73 = tpu.matmul %72, %70, %cst_44 {dimension_numbers = #tpu.dot_dimension_numbers<[1], [0], [0], [1], [0, 0, 1, 1], [], []>} : vector<8x8xbf16>, vector<8x1024xbf16>, vector<8x1024xf32> -> vector<8x1024xf32>
    %74 = arith.addf %68, %73 : vector<8x1024xf32>
    %c0_45 = arith.constant 0 : index
    %c0_46 = arith.constant 0 : index
    %c34 = arith.constant 34 : index
    %75 = vector.load %arg1[%c0_45, %c0_46, %c34] : memref<1x8x1090xbf16, #tpu.memory_space<vmem>>, vector<1x8x1024xbf16>
    %76 = vector.shape_cast %75 : vector<1x8x1024xbf16> to vector<8x1024xbf16>
    %c5 = arith.constant 5 : index
    %c0_47 = arith.constant 0 : index
    %c0_48 = arith.constant 0 : index
    %77 = vector.load %arg2[%c5, %c0_47, %c0_48] : memref<9x8x8xbf16, #tpu.memory_space<vmem>>, vector<1x8x8xbf16>
    %78 = vector.shape_cast %77 : vector<1x8x8xbf16> to vector<8x8xbf16>
    %cst_49 = arith.constant dense<0.000000e+00> : vector<8x1024xf32>
    %79 = tpu.matmul %78, %76, %cst_49 {dimension_numbers = #tpu.dot_dimension_numbers<[1], [0], [0], [1], [0, 0, 1, 1], [], []>} : vector<8x8xbf16>, vector<8x1024xbf16>, vector<8x1024xf32> -> vector<8x1024xf32>
    %80 = arith.addf %74, %79 : vector<8x1024xf32>
    %c0_50 = arith.constant 0 : index
    %c0_51 = arith.constant 0 : index
    %c66 = arith.constant 66 : index
    %81 = vector.load %arg1[%c0_50, %c0_51, %c66] : memref<1x8x1090xbf16, #tpu.memory_space<vmem>>, vector<1x8x1024xbf16>
    %82 = vector.shape_cast %81 : vector<1x8x1024xbf16> to vector<8x1024xbf16>
    %c8 = arith.constant 8 : index
    %c0_52 = arith.constant 0 : index
    %c0_53 = arith.constant 0 : index
    %83 = vector.load %arg2[%c8, %c0_52, %c0_53] : memref<9x8x8xbf16, #tpu.memory_space<vmem>>, vector<1x8x8xbf16>
    %84 = vector.shape_cast %83 : vector<1x8x8xbf16> to vector<8x8xbf16>
    %cst_54 = arith.constant dense<0.000000e+00> : vector<8x1024xf32>
    %85 = tpu.matmul %84, %82, %cst_54 {dimension_numbers = #tpu.dot_dimension_numbers<[1], [0], [0], [1], [0, 0, 1, 1], [], []>} : vector<8x8xbf16>, vector<8x1024xbf16>, vector<8x1024xf32> -> vector<8x1024xf32>
    %86 = arith.addf %80, %85 : vector<8x1024xf32>
    %87 = vector.broadcast %24 : vector<1x1024xf32> to vector<8x1024xf32>
    %88 = arith.mulf %86, %87 : vector<8x1024xf32>
    %89 = arith.addf %67, %88 : vector<8x1024xf32>
    %c0_55 = arith.constant 0 : index
    %c0_56 = arith.constant 0 : index
    %90 = vector.load %arg3[%c0_55, %c0_56] : memref<8x1xf32, #tpu.memory_space<vmem>>, vector<8x1xf32>
    %91 = vector.broadcast %90 : vector<8x1xf32> to vector<8x1024xf32>
    %92 = arith.addf %89, %91 : vector<8x1024xf32>
    %cst_57 = arith.constant 0.000000e+00 : f32
    %93 = vector.broadcast %cst_57 : f32 to vector<8x1024xf32>
    %94 = arith.maximumf %92, %93 : vector<8x1024xf32>
    %cst_58 = arith.constant 0.000000e+00 : bf16
    %95 = vector.broadcast %cst_58 : bf16 to vector<8x33xbf16>
    %c0_59 = arith.constant 0 : index
    %c0_60 = arith.constant 0 : index
    %96 = vector.load %arg7[%c0_59, %c0_60] : memref<8x1090xbf16, #tpu.memory_space<vmem>>, vector<8x33xbf16>
    tpu.vector_store %arg7[%c0_59, %c0_60], %95 {strides = array<i32>} : memref<8x1090xbf16, #tpu.memory_space<vmem>>, vector<8x33xbf16>,
    %c0_61 = arith.constant 0 : index
    %c1057 = arith.constant 1057 : index
    %97 = vector.load %arg7[%c0_61, %c1057] : memref<8x1090xbf16, #tpu.memory_space<vmem>>, vector<8x33xbf16>
    tpu.vector_store %arg7[%c0_61, %c1057], %95 {strides = array<i32>} : memref<8x1090xbf16, #tpu.memory_space<vmem>>, vector<8x33xbf16>,
    %98 = arith.truncf %94 : vector<8x1024xf32> to vector<8x1024xbf16>
    %c0_62 = arith.constant 0 : index
    %c33_63 = arith.constant 33 : index
    %99 = vector.load %arg7[%c0_62, %c33_63] : memref<8x1090xbf16, #tpu.memory_space<vmem>>, vector<8x1024xbf16>
    tpu.vector_store %arg7[%c0_62, %c33_63], %98 {strides = array<i32>} : memref<8x1090xbf16, #tpu.memory_space<vmem>>, vector<8x1024xbf16>,
    %cst_64 = arith.constant 0.000000e+00 : f32
    %100 = vector.broadcast %cst_64 : f32 to vector<8x1024xf32>
    %cst_65 = arith.constant 0.000000e+00 : f32
    %101 = vector.broadcast %cst_65 : f32 to vector<8x1024xf32>
    %c0_66 = arith.constant 0 : index
    %c0_67 = arith.constant 0 : index
    %102 = vector.load %arg7[%c0_66, %c0_67] : memref<8x1090xbf16, #tpu.memory_space<vmem>>, vector<8x1024xbf16>
    %c0_68 = arith.constant 0 : index
    %c0_69 = arith.constant 0 : index
    %c0_70 = arith.constant 0 : index
    %103 = vector.load %arg4[%c0_68, %c0_69, %c0_70] : memref<9x8x8xbf16, #tpu.memory_space<vmem>>, vector<1x8x8xbf16>
    %104 = vector.shape_cast %103 : vector<1x8x8xbf16> to vector<8x8xbf16>
    %cst_71 = arith.constant dense<0.000000e+00> : vector<8x1024xf32>
    %105 = tpu.matmul %104, %102, %cst_71 {dimension_numbers = #tpu.dot_dimension_numbers<[1], [0], [0], [1], [0, 0, 1, 1], [], []>} : vector<8x8xbf16>, vector<8x1024xbf16>, vector<8x1024xf32> -> vector<8x1024xf32>
    %106 = arith.addf %101, %105 : vector<8x1024xf32>
    %c0_72 = arith.constant 0 : index
    %c32_73 = arith.constant 32 : index
    %107 = vector.load %arg7[%c0_72, %c32_73] : memref<8x1090xbf16, #tpu.memory_space<vmem>>, vector<8x1024xbf16>
    %c3_74 = arith.constant 3 : index
    %c0_75 = arith.constant 0 : index
    %c0_76 = arith.constant 0 : index
    %108 = vector.load %arg4[%c3_74, %c0_75, %c0_76] : memref<9x8x8xbf16, #tpu.memory_space<vmem>>, vector<1x8x8xbf16>
    %109 = vector.shape_cast %108 : vector<1x8x8xbf16> to vector<8x8xbf16>
    %cst_77 = arith.constant dense<0.000000e+00> : vector<8x1024xf32>
    %110 = tpu.matmul %109, %107, %cst_77 {dimension_numbers = #tpu.dot_dimension_numbers<[1], [0], [0], [1], [0, 0, 1, 1], [], []>} : vector<8x8xbf16>, vector<8x1024xbf16>, vector<8x1024xf32> -> vector<8x1024xf32>
    %111 = arith.addf %106, %110 : vector<8x1024xf32>
    %c0_78 = arith.constant 0 : index
    %c64_79 = arith.constant 64 : index
    %112 = vector.load %arg7[%c0_78, %c64_79] : memref<8x1090xbf16, #tpu.memory_space<vmem>>, vector<8x1024xbf16>
    %c6_80 = arith.constant 6 : index
    %c0_81 = arith.constant 0 : index
    %c0_82 = arith.constant 0 : index
    %113 = vector.load %arg4[%c6_80, %c0_81, %c0_82] : memref<9x8x8xbf16, #tpu.memory_space<vmem>>, vector<1x8x8xbf16>
    %114 = vector.shape_cast %113 : vector<1x8x8xbf16> to vector<8x8xbf16>
    %cst_83 = arith.constant dense<0.000000e+00> : vector<8x1024xf32>
    %115 = tpu.matmul %114, %112, %cst_83 {dimension_numbers = #tpu.dot_dimension_numbers<[1], [0], [0], [1], [0, 0, 1, 1], [], []>} : vector<8x8xbf16>, vector<8x1024xbf16>, vector<8x1024xf32> -> vector<8x1024xf32>
    %116 = arith.addf %111, %115 : vector<8x1024xf32>
    %117 = vector.broadcast %20 : vector<1x1024xf32> to vector<8x1024xf32>
    %118 = arith.mulf %116, %117 : vector<8x1024xf32>
    %119 = arith.addf %100, %118 : vector<8x1024xf32>
    %cst_84 = arith.constant 0.000000e+00 : f32
    %120 = vector.broadcast %cst_84 : f32 to vector<8x1024xf32>
    %c0_85 = arith.constant 0 : index
    %c1_86 = arith.constant 1 : index
    %121 = vector.load %arg7[%c0_85, %c1_86] : memref<8x1090xbf16, #tpu.memory_space<vmem>>, vector<8x1024xbf16>
    %c1_87 = arith.constant 1 : index
    %c0_88 = arith.constant 0 : index
    %c0_89 = arith.constant 0 : index
    %122 = vector.load %arg4[%c1_87, %c0_88, %c0_89] : memref<9x8x8xbf16, #tpu.memory_space<vmem>>, vector<1x8x8xbf16>
    %123 = vector.shape_cast %122 : vector<1x8x8xbf16> to vector<8x8xbf16>
    %cst_90 = arith.constant dense<0.000000e+00> : vector<8x1024xf32>
    %124 = tpu.matmul %123, %121, %cst_90 {dimension_numbers = #tpu.dot_dimension_numbers<[1], [0], [0], [1], [0, 0, 1, 1], [], []>} : vector<8x8xbf16>, vector<8x1024xbf16>, vector<8x1024xf32> -> vector<8x1024xf32>
    %125 = arith.addf %120, %124 : vector<8x1024xf32>
    %c0_91 = arith.constant 0 : index
    %c33_92 = arith.constant 33 : index
    %126 = vector.load %arg7[%c0_91, %c33_92] : memref<8x1090xbf16, #tpu.memory_space<vmem>>, vector<8x1024xbf16>
    %c4_93 = arith.constant 4 : index
    %c0_94 = arith.constant 0 : index
    %c0_95 = arith.constant 0 : index
    %127 = vector.load %arg4[%c4_93, %c0_94, %c0_95] : memref<9x8x8xbf16, #tpu.memory_space<vmem>>, vector<1x8x8xbf16>
    %128 = vector.shape_cast %127 : vector<1x8x8xbf16> to vector<8x8xbf16>
    %cst_96 = arith.constant dense<0.000000e+00> : vector<8x1024xf32>
    %129 = tpu.matmul %128, %126, %cst_96 {dimension_numbers = #tpu.dot_dimension_numbers<[1], [0], [0], [1], [0, 0, 1, 1], [], []>} : vector<8x8xbf16>, vector<8x1024xbf16>, vector<8x1024xf32> -> vector<8x1024xf32>
    %130 = arith.addf %125, %129 : vector<8x1024xf32>
    %c0_97 = arith.constant 0 : index
    %c65_98 = arith.constant 65 : index
    %131 = vector.load %arg7[%c0_97, %c65_98] : memref<8x1090xbf16, #tpu.memory_space<vmem>>, vector<8x1024xbf16>
    %c7_99 = arith.constant 7 : index
    %c0_100 = arith.constant 0 : index
    %c0_101 = arith.constant 0 : index
    %132 = vector.load %arg4[%c7_99, %c0_100, %c0_101] : memref<9x8x8xbf16, #tpu.memory_space<vmem>>, vector<1x8x8xbf16>
    %133 = vector.shape_cast %132 : vector<1x8x8xbf16> to vector<8x8xbf16>
    %cst_102 = arith.constant dense<0.000000e+00> : vector<8x1024xf32>
    %134 = tpu.matmul %133, %131, %cst_102 {dimension_numbers = #tpu.dot_dimension_numbers<[1], [0], [0], [1], [0, 0, 1, 1], [], []>} : vector<8x8xbf16>, vector<8x1024xbf16>, vector<8x1024xf32> -> vector<8x1024xf32>
    %135 = arith.addf %130, %134 : vector<8x1024xf32>
    %136 = arith.addf %119, %135 : vector<8x1024xf32>
    %cst_103 = arith.constant 0.000000e+00 : f32
    %137 = vector.broadcast %cst_103 : f32 to vector<8x1024xf32>
    %c0_104 = arith.constant 0 : index
    %c2_105 = arith.constant 2 : index
    %138 = vector.load %arg7[%c0_104, %c2_105] : memref<8x1090xbf16, #tpu.memory_space<vmem>>, vector<8x1024xbf16>
    %c2_106 = arith.constant 2 : index
    %c0_107 = arith.constant 0 : index
    %c0_108 = arith.constant 0 : index
    %139 = vector.load %arg4[%c2_106, %c0_107, %c0_108] : memref<9x8x8xbf16, #tpu.memory_space<vmem>>, vector<1x8x8xbf16>
    %140 = vector.shape_cast %139 : vector<1x8x8xbf16> to vector<8x8xbf16>
    %cst_109 = arith.constant dense<0.000000e+00> : vector<8x1024xf32>
    %141 = tpu.matmul %140, %138, %cst_109 {dimension_numbers = #tpu.dot_dimension_numbers<[1], [0], [0], [1], [0, 0, 1, 1], [], []>} : vector<8x8xbf16>, vector<8x1024xbf16>, vector<8x1024xf32> -> vector<8x1024xf32>
    %142 = arith.addf %137, %141 : vector<8x1024xf32>
    %c0_110 = arith.constant 0 : index
    %c34_111 = arith.constant 34 : index
    %143 = vector.load %arg7[%c0_110, %c34_111] : memref<8x1090xbf16, #tpu.memory_space<vmem>>, vector<8x1024xbf16>
    %c5_112 = arith.constant 5 : index
    %c0_113 = arith.constant 0 : index
    %c0_114 = arith.constant 0 : index
    %144 = vector.load %arg4[%c5_112, %c0_113, %c0_114] : memref<9x8x8xbf16, #tpu.memory_space<vmem>>, vector<1x8x8xbf16>
    %145 = vector.shape_cast %144 : vector<1x8x8xbf16> to vector<8x8xbf16>
    %cst_115 = arith.constant dense<0.000000e+00> : vector<8x1024xf32>
    %146 = tpu.matmul %145, %143, %cst_115 {dimension_numbers = #tpu.dot_dimension_numbers<[1], [0], [0], [1], [0, 0, 1, 1], [], []>} : vector<8x8xbf16>, vector<8x1024xbf16>, vector<8x1024xf32> -> vector<8x1024xf32>
    %147 = arith.addf %142, %146 : vector<8x1024xf32>
    %c0_116 = arith.constant 0 : index
    %c66_117 = arith.constant 66 : index
    %148 = vector.load %arg7[%c0_116, %c66_117] : memref<8x1090xbf16, #tpu.memory_space<vmem>>, vector<8x1024xbf16>
    %c8_118 = arith.constant 8 : index
    %c0_119 = arith.constant 0 : index
    %c0_120 = arith.constant 0 : index
    %149 = vector.load %arg4[%c8_118, %c0_119, %c0_120] : memref<9x8x8xbf16, #tpu.memory_space<vmem>>, vector<1x8x8xbf16>
    %150 = vector.shape_cast %149 : vector<1x8x8xbf16> to vector<8x8xbf16>
    %cst_121 = arith.constant dense<0.000000e+00> : vector<8x1024xf32>
    %151 = tpu.matmul %150, %148, %cst_121 {dimension_numbers = #tpu.dot_dimension_numbers<[1], [0], [0], [1], [0, 0, 1, 1], [], []>} : vector<8x8xbf16>, vector<8x1024xbf16>, vector<8x1024xf32> -> vector<8x1024xf32>
    %152 = arith.addf %147, %151 : vector<8x1024xf32>
    %153 = vector.broadcast %24 : vector<1x1024xf32> to vector<8x1024xf32>
    %154 = arith.mulf %152, %153 : vector<8x1024xf32>
    %155 = arith.addf %136, %154 : vector<8x1024xf32>
    %c0_122 = arith.constant 0 : index
    %c0_123 = arith.constant 0 : index
    %156 = vector.load %arg5[%c0_122, %c0_123] : memref<8x1xf32, #tpu.memory_space<vmem>>, vector<8x1xf32>
    %157 = vector.broadcast %156 : vector<8x1xf32> to vector<8x1024xf32>
    %158 = arith.addf %155, %157 : vector<8x1024xf32>
    %cst_124 = arith.constant 0.000000e+00 : f32
    %159 = vector.broadcast %cst_124 : f32 to vector<8x1024xf32>
    %160 = arith.maximumf %158, %159 : vector<8x1024xf32>
    %c0_125 = arith.constant 0 : index
    %c0_126 = arith.constant 0 : index
    %c0_127 = arith.constant 0 : index
    %161 = vector.load %arg6[%c0_125, %c0_126, %c0_127] : memref<1x8x1024xf32, #tpu.memory_space<vmem>>, vector<1x8x1024xf32>
    %162 = vector.shape_cast %161 : vector<1x8x1024xf32> to vector<8x1024xf32>
    %163 = vector.shape_cast %160 : vector<8x1024xf32> to vector<1x8x1024xf32>
    tpu.vector_store %arg6[%c0_125, %c0_126, %c0_127], %163 {strides = array<i32>} : memref<1x8x1024xf32, #tpu.memory_space<vmem>>, vector<1x8x1024xf32>,
    return
  }
  func.func @transform_0(%arg0: i32) -> (i32, i32, i32) {
    %c0_i32 = arith.constant 0 : i32
    %c0_i32_0 = arith.constant 0 : i32
    %c0_i32_1 = arith.constant 0 : i32
    return %arg0, %c0_i32, %c0_i32_0 : i32, i32, i32
  }
  func.func @transform_1(%arg0: i32) -> (i32, i32, i32) {
    %c0_i32 = arith.constant 0 : i32
    %c0_i32_0 = arith.constant 0 : i32
    %c0_i32_1 = arith.constant 0 : i32
    %c0_i32_2 = arith.constant 0 : i32
    return %c0_i32, %c0_i32_0, %c0_i32_1 : i32, i32, i32
  }
  func.func @transform_2(%arg0: i32) -> (i32, i32) {
    %c0_i32 = arith.constant 0 : i32
    %c0_i32_0 = arith.constant 0 : i32
    %c0_i32_1 = arith.constant 0 : i32
    return %c0_i32, %c0_i32_0 : i32, i32
  }
  func.func @transform_3(%arg0: i32) -> (i32, i32, i32) {
    %c0_i32 = arith.constant 0 : i32
    %c0_i32_0 = arith.constant 0 : i32
    %c0_i32_1 = arith.constant 0 : i32
    %c0_i32_2 = arith.constant 0 : i32
    return %c0_i32, %c0_i32_0, %c0_i32_1 : i32, i32, i32
  }
  func.func @transform_4(%arg0: i32) -> (i32, i32) {
    %c0_i32 = arith.constant 0 : i32
    %c0_i32_0 = arith.constant 0 : i32
    %c0_i32_1 = arith.constant 0 : i32
    return %c0_i32, %c0_i32_0 : i32, i32
  }
  func.func @transform_5(%arg0: i32) -> (i32, i32, i32) {
    %c0_i32 = arith.constant 0 : i32
    %c0_i32_0 = arith.constant 0 : i32
    %c0_i32_1 = arith.constant 0 : i32
    return %arg0, %c0_i32, %c0_i32_0 : i32, i32, i32
  }
}

</mosaic_0001>

<llo_original>
// kernel: decoder_block_forward.1
$region0: #{decoder_block_forward.1}
  #allocation0 [shape = 'u32[]', space=smem, size = 0x4, offset = 0x4, fixed_abs, tag = 'smem constant byte address 0x4 - core index']
  #allocation1 [shape = 'u32[144,128]{1,0:T(1,128)}', space=vmem, size = 0x12000, scoped, tag = 'internal scratch']
  #allocation2 [shape = 'bf16[8,1090]{1,0:T(8,128)(2,1)}', space=vmem, size = 0x4800, scoped, tag = 'scratch operand']
  %s0 = inlined_call_operand.vmem [shape: bf16[2,8,1090], index: 0, kind: input, shape index: {}]
  %s1 = inlined_call_operand.vmem [shape: bf16[9,8,8], index: 1, kind: input, shape index: {}]
  %s2 = inlined_call_operand.vmem [shape: f32[8,1], index: 2, kind: input, shape index: {}]
  %s3 = inlined_call_operand.vmem [shape: bf16[9,8,8], index: 3, kind: input, shape index: {}]
  %s4 = inlined_call_operand.vmem [shape: f32[8,1], index: 4, kind: input, shape index: {}]
  %s5 = inlined_call_operand.vmem [shape: f32[2,8,1024], index: 5, kind: output, shape index: {}]
  %s6 = sld [smem:[#allocation0]]
  $region53: #{decoder_block_forward.1} parent=0
    _
  %s8 = ssub.s32 1, %s6
  %s9 = scalar_select 0, %s8, %s6
  loop: start=0, step=1, limit=4
  $region2: #{decoder_block_forward.1} parent=0 // loop_pre_header
    _
  $region3: #{decoder_block_forward.1} parent=0 // loop_header
    %s11 = sphi 0, %s15
    %p12 = scmp.ge.s32.totalorder %s11, 4
    %s21 = sphi 0, %s23
    %s24 = sphi 0, %s21
    %s25 = sphi 0, %s24
    %s41 = sphi 0, %s25
    %s45 = sphi 0, %s45
    %s47 = sphi 0, %s45
    %s48 = sphi 0, %s47
    %s62 = sphi 0, %s48
    %s66 = sphi 0, %s66
    %s68 = sphi 0, %s66
    %s69 = sphi 0, %s68
    %s83 = sphi 0, %s69
    %s87 = sphi 0, %s87
    %s89 = sphi 0, %s87
    %s90 = sphi 0, %s89
    %s104 = sphi 0, %s90
    %s108 = sphi 0, %s108
    %s110 = sphi 0, %s108
    %s111 = sphi 0, %s110
    %s125 = sphi 0, %s111
    %s131 = sphi 0, %s133
    %s134 = sphi 0, %s131
    %s135 = sphi 0, %s134
    %s151 = sphi 0, %s135
  $region4: #{decoder_block_forward.1} parent=0 // loop_header_branch
    %14 = sbr.rel (%p12) target = $region8
  $region5: #{decoder_block_forward.1} parent=0 // loop_body
    %s16 = ssub.s32 %s11, 1
    %s17 = ssub.s32 %s11, 2
    %s18 = sadd.s32 %s11, 1
    %s19 = ssub.s32 %s11, %s18
    %p20 = scmp.eq.s32.totalorder %s19, 0
    %s22 = sadd.s32 %s21, 1
    %s23 = scalar_select %p20, %s21, %s22
    %p26 = pneg %p20
    %p27 = scmp.eq.s32.totalorder %s11, 1
    %p28 = por %p26, %p27
    %p29 = scmp.ne.s32.totalorder %s21, %s24
    %p30 = scmp.eq.s32.totalorder %s11, 0
    %p31 = por %p29, %p30
    %p32 = scmp.ne.s32.totalorder %s21, %s24
    %p33 = scmp.eq.s32.totalorder %s16, 1
    %p34 = por %p32, %p33
    %p35 = scmp.ne.s32.totalorder %s24, %s25
    %p36 = scmp.eq.s32.totalorder %s16, 0
    %p37 = por %p35, %p36
    %p38 = scmp.ne.s32.totalorder %s24, %s25
    %p39 = scmp.eq.s32.totalorder %s17, 1
    %p40 = por %p38, %p39
    %p42 = scmp.ne.s32.totalorder %s25, %s41
    %p43 = scmp.eq.s32.totalorder %s17, 0
    %p44 = por %p42, %p43
    %s46 = sadd.s32 %s45, 1
    %p49 = scmp.eq.s32.totalorder %s11, 1
    %p50 = scmp.ne.s32.totalorder %s45, %s47
    %p51 = scmp.eq.s32.totalorder %s11, 0
    %p52 = por %p50, %p51
    %p53 = scmp.ne.s32.totalorder %s45, %s47
    %p54 = scmp.eq.s32.totalorder %s16, 1
    %p55 = por %p53, %p54
    %p56 = scmp.ne.s32.totalorder %s47, %s48
    %p57 = scmp.eq.s32.totalorder %s16, 0
    %p58 = por %p56, %p57
    %p59 = scmp.ne.s32.totalorder %s47, %s48
    %p60 = scmp.eq.s32.totalorder %s17, 1
    %p61 = por %p59, %p60
    %p63 = scmp.ne.s32.totalorder %s48, %s62
    %p64 = scmp.eq.s32.totalorder %s17, 0
    %p65 = por %p63, %p64
    %s67 = sadd.s32 %s66, 1
    %p70 = scmp.eq.s32.totalorder %s11, 1
    %p71 = scmp.ne.s32.totalorder %s66, %s68
    %p72 = scmp.eq.s32.totalorder %s11, 0
    %p73 = por %p71, %p72
    %p74 = scmp.ne.s32.totalorder %s66, %s68
    %p75 = scmp.eq.s32.totalorder %s16, 1
    %p76 = por %p74, %p75
    %p77 = scmp.ne.s32.totalorder %s68, %s69
    %p78 = scmp.eq.s32.totalorder %s16, 0
    %p79 = por %p77, %p78
    %p80 = scmp.ne.s32.totalorder %s68, %s69
    %p81 = scmp.eq.s32.totalorder %s17, 1
    %p82 = por %p80, %p81
    %p84 = scmp.ne.s32.totalorder %s69, %s83
    %p85 = scmp.eq.s32.totalorder %s17, 0
    %p86 = por %p84, %p85
    %s88 = sadd.s32 %s87, 1
    %p91 = scmp.eq.s32.totalorder %s11, 1
    %p92 = scmp.ne.s32.totalorder %s87, %s89
    %p93 = scmp.eq.s32.totalorder %s11, 0
    %p94 = por %p92, %p93
    %p95 = scmp.ne.s32.totalorder %s87, %s89
    %p96 = scmp.eq.s32.totalorder %s16, 1
    %p97 = por %p95, %p96
    %p98 = scmp.ne.s32.totalorder %s89, %s90
    %p99 = scmp.eq.s32.totalorder %s16, 0
    %p100 = por %p98, %p99
    %p101 = scmp.ne.s32.totalorder %s89, %s90
    %p102 = scmp.eq.s32.totalorder %s17, 1
    %p103 = por %p101, %p102
    %p105 = scmp.ne.s32.totalorder %s90, %s104
    %p106 = scmp.eq.s32.totalorder %s17, 0
    %p107 = por %p105, %p106
    %s109 = sadd.s32 %s108, 1
    %p112 = scmp.eq.s32.totalorder %s11, 1
    %p113 = scmp.ne.s32.totalorder %s108, %s110
    %p114 = scmp.eq.s32.totalorder %s11, 0
    %p115 = por %p113, %p114
    %p116 = scmp.ne.s32.totalorder %s108, %s110
    %p117 = scmp.eq.s32.totalorder %s16, 1
    %p118 = por %p116, %p117
    %p119 = scmp.ne.s32.totalorder %s110, %s111
    %p120 = scmp.eq.s32.totalorder %s16, 0
    %p121 = por %p119, %p120
    %p122 = scmp.ne.s32.totalorder %s110, %s111
    %p123 = scmp.eq.s32.totalorder %s17, 1
    %p124 = por %p122, %p123
    %p126 = scmp.ne.s32.totalorder %s111, %s125
    %p127 = scmp.eq.s32.totalorder %s17, 0
    %p128 = por %p126, %p127
    %s129 = ssub.s32 %s11, %s18
    %p130 = scmp.eq.s32.totalorder %s129, 0
    %s132 = sadd.s32 %s131, 1
    %s133 = scalar_select %p130, %s131, %s132
    %p136 = pneg %p130
    %p137 = scmp.eq.s32.totalorder %s11, 1
    %p138 = por %p136, %p137
    %p139 = scmp.ne.s32.totalorder %s131, %s134
    %p140 = scmp.eq.s32.totalorder %s11, 0
    %p141 = por %p139, %p140
    %p142 = scmp.ne.s32.totalorder %s131, %s134
    %p143 = scmp.eq.s32.totalorder %s16, 1
    %p144 = por %p142, %p143
    %p145 = scmp.ne.s32.totalorder %s134, %s135
    %p146 = scmp.eq.s32.totalorder %s16, 0
    %p147 = por %p145, %p146
    %p148 = scmp.ne.s32.totalorder %s134, %s135
    %p149 = scmp.eq.s32.totalorder %s17, 1
    %p150 = por %p148, %p149
    %p152 = scmp.ne.s32.totalorder %s135, %s151
    %p153 = scmp.eq.s32.totalorder %s17, 0
    %p154 = por %p152, %p153
    %p155 = scmp.le.s32.totalorder 1, %s11
    %p156 = scmp.lt.s32.totalorder %s11, 3
    %p157 = pnand %p155, %p156
    %p158 = pneg %p157
    // Predicated region
    $region9: #{decoder_block_forward.1} parent=5 // pred_check
      _
    $region10: #{decoder_block_forward.1} parent=5 // pred_check_branch
      %160 = sbr.rel (%p157) target = $region12
    $region11: #{decoder_block_forward.1} parent=5 // pred_region
      %s161 = ssub.s32 %s11, 1
      // Predicated region
      $region13: #{decoder_block_forward.1} parent=11 // pred_check
        %p162 = pneg %p58
      $region14: #{decoder_block_forward.1} parent=11 // pred_check_branch
        %164 = sbr.rel (%p162) target = $region16
      $region15: #{decoder_block_forward.1} parent=11 // pred_region
        _
      $region16: #{decoder_block_forward.1} parent=11 // pred_fallthru
        _
      // Predicated region
      $region17: #{decoder_block_forward.1} parent=11 // pred_check
        %p165 = pneg %p79
      $region18: #{decoder_block_forward.1} parent=11 // pred_check_branch
        %167 = sbr.rel (%p165) target = $region20
      $region19: #{decoder_block_forward.1} parent=11 // pred_region
        _
      $region20: #{decoder_block_forward.1} parent=11 // pred_fallthru
        _
      // Predicated region
      $region21: #{decoder_block_forward.1} parent=11 // pred_check
        %p168 = pneg %p100
      $region22: #{decoder_block_forward.1} parent=11 // pred_check_branch
        %170 = sbr.rel (%p168) target = $region24
      $region23: #{decoder_block_forward.1} parent=11 // pred_region
        _
      $region24: #{decoder_block_forward.1} parent=11 // pred_fallthru
        _
      // Predicated region
      $region25: #{decoder_block_forward.1} parent=11 // pred_check
        %p171 = pneg %p121
      $region26: #{decoder_block_forward.1} parent=11 // pred_check_branch
        %173 = sbr.rel (%p171) target = $region28
      $region27: #{decoder_block_forward.1} parent=11 // pred_region
        _
      $region28: #{decoder_block_forward.1} parent=11 // pred_fallthru
        _
    $region12: #{decoder_block_forward.1} parent=5 // pred_fallthru
      _
    %p174 = scmp.lt.s32.totalorder %s11, 2
    // Predicated region
    $region29: #{decoder_block_forward.1} parent=5 // pred_check
      %p175 = pneg %p174
    $region30: #{decoder_block_forward.1} parent=5 // pred_check_branch
      %177 = sbr.rel (%p175) target = $region32
    $region31: #{decoder_block_forward.1} parent=5 // pred_region
      // Predicated region
      $region33: #{decoder_block_forward.1} parent=31 // pred_check
        %p178 = pneg %p31
      $region34: #{decoder_block_forward.1} parent=31 // pred_check_branch
        %180 = sbr.rel (%p178) target = $region36
      $region35: #{decoder_block_forward.1} parent=31 // pred_region
        %p181 = scmp.lt.s32.totalorder %s11, 1
        %s182 = scalar_select %p181, %s11, 1
        %s183 = smul.addr %s182, 9
        %s184 = smul.addr %s183, 4
        %s185 = scalar_lea.vmem %s0, %s184
      $region36: #{decoder_block_forward.1} parent=31 // pred_fallthru
        _
    $region32: #{decoder_block_forward.1} parent=5 // pred_fallthru
      _
    %p186 = scmp.le.s32.totalorder 1, %s11
    %p187 = scmp.lt.s32.totalorder %s11, 3
    %p188 = pnand %p186, %p187
    %p189 = pneg %p188
    // Predicated region
    $region37: #{decoder_block_forward.1} parent=5 // pred_check
      _
    $region38: #{decoder_block_forward.1} parent=5 // pred_check_branch
      %191 = sbr.rel (%p188) target = $region40
    $region39: #{decoder_block_forward.1} parent=5 // pred_region
      %s192 = ssub.s32 %s11, 1
      %p193 = scmp.lt.s32.totalorder %s16, 1
      %s194 = scalar_select %p193, %s16, 1
      %s195 = smul.addr %s194, 9
      %s196 = smul.addr %s195, 4
      %s197 = scalar_lea.vmem %s0, %s196
      %p198 = pneg %p37
      %p199 = pneg %p34
      %p200 = pneg %p58
      %p201 = pneg %p55
      %p202 = pneg %p79
      %p203 = pneg %p76
      %p204 = pneg %p100
      %p205 = pneg %p97
      %p206 = pneg %p121
      %p207 = pneg %p118
      %p208 = pneg %p147
      %p209 = pneg %p144
      %p210 = scmp.lt.s32.totalorder %s16, 1
      %s211 = scalar_select %p210, %s16, 1
      %s212 = smul.addr %s211, 8
      %s213 = smul.addr %s212, 8
      %s214 = scalar_lea.vmem %s5, %s213
      %p215 = scmp.lt.s32.totalorder %s16, 1
      %s216 = scalar_select %p215, %s16, 1
      %s217 = smul.addr %s216, 9
      %s218 = smul.addr %s217, 4
      %s219 = scalar_lea.vmem %s0, %s218
      %p220 = scmp.lt.s32.totalorder %s16, 1
      %s221 = scalar_select %p220, %s16, 1
      %s222 = smul.addr %s221, 8
      %s223 = smul.addr %s222, 8
      %s224 = scalar_lea.vmem %s5, %s223
      %v226 = vlaneseq
      %v227 = vand.u32 %v226, 127
      %v228 = vadd.s32 %v227, 128
      %v229 = vadd.s32 %v227, 256
      %v230 = vadd.s32 %v227, 384
      %v231 = vadd.s32 %v227, 512
      %v232 = vadd.s32 %v227, 640
      %v233 = vadd.s32 %v227, 768
      %v234 = vadd.s32 %v227, 896
      %vm235 = vcmp.lt.s32.totalorder %v227, 0
      %v236 = vsub.s32 0, %v227
      %v237 = vsel %vm235, %v236, %v227
      %v238 = vshrl.u32 %v237, 5
      %v239 = vand.u32 %v237, 31
      %v240 = vsub.s32 0, %v239
      %v241 = vsel %vm235, %v240, %v239
      %vm242 = vcmp.lt.s32.totalorder %v228, 0
      %v243 = vsub.s32 0, %v228
      %v244 = vsel %vm242, %v243, %v228
      %v245 = vshrl.u32 %v244, 5
      %v246 = vand.u32 %v244, 31
      %v247 = vsub.s32 0, %v246
      %v248 = vsel %vm242, %v247, %v246
      %vm249 = vcmp.lt.s32.totalorder %v229, 0
      %v250 = vsub.s32 0, %v229
      %v251 = vsel %vm249, %v250, %v229
      %v252 = vshrl.u32 %v251, 5
      %v253 = vand.u32 %v251, 31
      %v254 = vsub.s32 0, %v253
      %v255 = vsel %vm249, %v254, %v253
      %vm256 = vcmp.lt.s32.totalorder %v230, 0
      %v257 = vsub.s32 0, %v230
      %v258 = vsel %vm256, %v257, %v230
      %v259 = vshrl.u32 %v258, 5
      %v260 = vand.u32 %v258, 31
      %v261 = vsub.s32 0, %v260
      %v262 = vsel %vm256, %v261, %v260
      %vm263 = vcmp.lt.s32.totalorder %v231, 0
      %v264 = vsub.s32 0, %v231
      %v265 = vsel %vm263, %v264, %v231
      %v266 = vshrl.u32 %v265, 5
      %v267 = vand.u32 %v265, 31
      %v268 = vsub.s32 0, %v267
      %v269 = vsel %vm263, %v268, %v267
      %vm270 = vcmp.lt.s32.totalorder %v232, 0
      %v271 = vsub.s32 0, %v232
      %v272 = vsel %vm270, %v271, %v232
      %v273 = vshrl.u32 %v272, 5
      %v274 = vand.u32 %v272, 31
      %v275 = vsub.s32 0, %v274
      %v276 = vsel %vm270, %v275, %v274
      %vm277 = vcmp.lt.s32.totalorder %v233, 0
      %v278 = vsub.s32 0, %v233
      %v279 = vsel %vm277, %v278, %v233
      %v280 = vshrl.u32 %v279, 5
      %v281 = vand.u32 %v279, 31
      %v282 = vsub.s32 0, %v281
      %v283 = vsel %vm277, %v282, %v281
      %vm284 = vcmp.lt.s32.totalorder %v234, 0
      %v285 = vsub.s32 0, %v234
      %v286 = vsel %vm284, %v285, %v234
      %v287 = vshrl.u32 %v286, 5
      %v288 = vand.u32 %v286, 31
      %v289 = vsub.s32 0, %v288
      %v290 = vsel %vm284, %v289, %v288
      %vm291 = vcmp.ne.s32.totalorder %v241, 0
      %vm292 = vcmp.ne.s32.totalorder %v248, 0
      %vm293 = vcmp.ne.s32.totalorder %v255, 0
      %vm294 = vcmp.ne.s32.totalorder %v262, 0
      %vm295 = vcmp.ne.s32.totalorder %v269, 0
      %vm296 = vcmp.ne.s32.totalorder %v276, 0
      %vm297 = vcmp.ne.s32.totalorder %v283, 0
      %vm298 = vcmp.ne.s32.totalorder %v290, 0
      %vm299 = vcmp.lt.s32.totalorder %v241, 0
      %vm300 = vcmp.lt.s32.totalorder %v248, 0
      %vm301 = vcmp.lt.s32.totalorder %v255, 0
      %vm302 = vcmp.lt.s32.totalorder %v262, 0
      %vm303 = vcmp.lt.s32.totalorder %v269, 0
      %vm304 = vcmp.lt.s32.totalorder %v276, 0
      %vm305 = vcmp.lt.s32.totalorder %v283, 0
      %vm306 = vcmp.lt.s32.totalorder %v290, 0
      %vm307 = vmand %vm299, %vm291
      %vm308 = vmand %vm300, %vm292
      %vm309 = vmand %vm301, %vm293
      %vm310 = vmand %vm302, %vm294
      %vm311 = vmand %vm303, %vm295
      %vm312 = vmand %vm304, %vm296
      %vm313 = vmand %vm305, %vm297
      %vm314 = vmand %vm306, %vm298
      %v315 = vadd.s32 %v241, 32
      %v316 = vadd.s32 %v248, 32
      %v317 = vadd.s32 %v255, 32
      %v318 = vadd.s32 %v262, 32
      %v319 = vadd.s32 %v269, 32
      %v320 = vadd.s32 %v276, 32
      %v321 = vadd.s32 %v283, 32
      %v322 = vadd.s32 %v290, 32
      %v323 = vsel %vm307, %v315, %v241
      %v324 = vsel %vm308, %v316, %v248
      %v325 = vsel %vm309, %v317, %v255
      %v326 = vsel %vm310, %v318, %v262
      %v327 = vsel %vm311, %v319, %v269
      %v328 = vsel %vm312, %v320, %v276
      %v329 = vsel %vm313, %v321, %v283
      %v330 = vsel %vm314, %v322, %v290
      %vm331 = vcmp.ne.s32.totalorder %v323, 0
      %vm332 = vcmp.ne.s32.totalorder %v324, 0
      %vm333 = vcmp.ne.s32.totalorder %v325, 0
      %vm334 = vcmp.ne.s32.totalorder %v326, 0
      %vm335 = vcmp.ne.s32.totalorder %v327, 0
      %vm336 = vcmp.ne.s32.totalorder %v328, 0
      %vm337 = vcmp.ne.s32.totalorder %v329, 0
      %vm338 = vcmp.ne.s32.totalorder %v330, 0
      %v339 = vsel %vm331, 1, 0
      %v340 = vsel %vm332, 1, 0
      %v341 = vsel %vm333, 1, 0
      %v342 = vsel %vm334, 1, 0
      %v343 = vsel %vm335, 1, 0
      %v344 = vsel %vm336, 1, 0
      %v345 = vsel %vm337, 1, 0
      %v346 = vsel %vm338, 1, 0
      %v347 = vcvt.s32.f32 %v339
      %v348 = vcvt.s32.f32 %v340
      %v349 = vcvt.s32.f32 %v341
      %v350 = vcvt.s32.f32 %v342
      %v351 = vcvt.s32.f32 %v343
      %v352 = vcvt.s32.f32 %v344
      %v353 = vcvt.s32.f32 %v345
      %v354 = vcvt.s32.f32 %v346
      %vm355 = vcmp.ne.s32.totalorder %v323, 31
      %vm356 = vcmp.ne.s32.totalorder %v324, 31
      %vm357 = vcmp.ne.s32.totalorder %v325, 31
      %vm358 = vcmp.ne.s32.totalorder %v326, 31
      %vm359 = vcmp.ne.s32.totalorder %v327, 31
      %vm360 = vcmp.ne.s32.totalorder %v328, 31
      %vm361 = vcmp.ne.s32.totalorder %v329, 31
      %vm362 = vcmp.ne.s32.totalorder %v330, 31
      %v363 = vsel %vm355, 1, 0
      %v364 = vsel %vm356, 1, 0
      %v365 = vsel %vm357, 1, 0
      %v366 = vsel %vm358, 1, 0
      %v367 = vsel %vm359, 1, 0
      %v368 = vsel %vm360, 1, 0
      %v369 = vsel %vm361, 1, 0
      %v370 = vsel %vm362, 1, 0
      %v371 = vcvt.s32.f32 %v363
      %v372 = vcvt.s32.f32 %v364
      %v373 = vcvt.s32.f32 %v365
      %v374 = vcvt.s32.f32 %v366
      %v375 = vcvt.s32.f32 %v367
      %v376 = vcvt.s32.f32 %v368
      %v377 = vcvt.s32.f32 %v369
      %v378 = vcvt.s32.f32 %v370
      %v379 = vld [vmem:[%s219] sm:$0xff]
      %v380 = vld [vmem:[%s219 + $0x8] sm:$0xff]
      %v381 = vld [vmem:[%s219 + $0x10] sm:$0xff]
      %v382 = vld [vmem:[%s219 + $0x18] sm:$0xff]
      %v383 = vld [vmem:[%s1] sm:$0xf]
      %v384 = vld [vmem:[%s219 + $0x20] sm:$0xf]
      %s385 = scalar_lea.vmem %s1, 12
      %v386 = vld [vmem:[%s385] sm:$0xf]
      %v392 = vunpack.c.l.b16 %v379
      %v393 = vunpack.c.h.b16 %v379
      %v394 = vunpack.c.l.b16 %v380
      %v395 = vunpack.c.h.b16 %v380
      %v396 = vunpack.c.l.b16 %v381
      %v397 = vunpack.c.h.b16 %v381
      %v398 = vunpack.c.l.b16 %v382
      %v399 = vunpack.c.h.b16 %v382
      %v400 = vunpack.c.l.b16 %v384
      %v401 = vpack.c.b16 %v392, %v392
      %v402 = vpack.c.b16 %v393, %v393
      %v403 = vpack.c.b16 %v394, %v394
      %v404 = vpack.c.b16 %v395, %v395
      %v405 = vpack.c.b16 %v396, %v396
      %v406 = vpack.c.b16 %v397, %v397
      %v407 = vpack.c.b16 %v398, %v398
      %v408 = vpack.c.b16 %v399, %v399
      %v409 = vpack.c.b16 %v400, %v400
      %410 = vrot.lane.b32.xlu0 %v401, 96
      %v411 = vpop.permute.xlu0 %410
      %412 = vrot.lane.b32.xlu0 %v402, 96
      %v413 = vpop.permute.xlu0 %412
      %414 = vrot.lane.b32.xlu0 %v403, 96
      %v415 = vpop.permute.xlu0 %414
      %416 = vrot.lane.b32.xlu0 %v404, 96
      %v417 = vpop.permute.xlu0 %416
      %418 = vrot.lane.b32.xlu0 %v405, 96
      %v419 = vpop.permute.xlu0 %418
      %420 = vrot.lane.b32.xlu0 %v406, 96
      %v421 = vpop.permute.xlu0 %420
      %422 = vrot.lane.b32.xlu0 %v407, 96
      %v423 = vpop.permute.xlu0 %422
      %424 = vrot.lane.b32.xlu0 %v408, 96
      %v425 = vpop.permute.xlu0 %424
      %426 = vrot.lane.b32.xlu0 %v409, 96
      %v427 = vpop.permute.xlu0 %426
      %vm428 = vcmask 785408
      %v429 = vsel %vm428, %v411, %v413
      %v430 = vsel %vm428, %v413, %v415
      %v431 = vsel %vm428, %v415, %v417
      %v432 = vsel %vm428, %v417, %v419
      %v433 = vsel %vm428, %v419, %v421
      %v434 = vsel %vm428, %v421, %v423
      %v435 = vsel %vm428, %v423, %v425
      %v436 = vsel %vm428, %v425, %v427
      %vm437 = vcmask 64512
      %v439 = vsel %vm437, %v386, 0
      %vm441 = vcmask 1043456
      %v443 = vsel %vm441, %v429, 0
      %v446 = vsel %vm441, %v430, 0
      %v449 = vsel %vm441, %v431, 0
      %v452 = vsel %vm441, %v432, 0
      %v455 = vsel %vm441, %v433, 0
      %v458 = vsel %vm441, %v434, 0
      %v461 = vsel %vm441, %v435, 0
      %v464 = vsel %vm441, %v436, 0
      %466 = vmatprep.subr.bf16.mxu0 %v446
      %467 = vmatpush1.bf16.msra.mxu0 %v443
      %468 = vmatprep.subr.bf16.mxu0 0
      %469 = vmatpush1.bf16.msra.mxu0 0
      %470 = vmatprep.subr.bf16.mxu0 0
      %471 = vmatpush1.bf16.msra.mxu0 0
      %472 = vmatprep.subr.bf16.mxu0 0
      %473 = vmatpush1.bf16.msra.mxu0 0
      %474 = vmatprep.subr.bf16.mxu0 0
      %475 = vmatpush1.bf16.msra.mxu0 0
      %476 = vmatprep.subr.bf16.mxu0 0
      %477 = vmatpush1.bf16.msra.mxu0 0
      %478 = vmatprep.subr.bf16.mxu0 0
      %479 = vmatpush1.bf16.msra.mxu0 0
      %480 = vmatprep.subr.bf16.mxu0 0
      %481 = vmatpush1.bf16.msra.mxu0 0
      %482 = vmatprep.subr.bf16.mxu0 0
      %483 = vmatpush1.bf16.msra.mxu0 0
      %484 = vmatprep.subr.bf16.mxu0 0
      %485 = vmatpush1.bf16.msra.mxu0 0
      %486 = vmatprep.subr.bf16.mxu0 0
      %487 = vmatpush1.bf16.msra.mxu0 0
      %488 = vmatprep.subr.bf16.mxu0 0
      %489 = vmatpush1.bf16.msra.mxu0 0
      %490 = vmatprep.subr.bf16.mxu0 0
      %491 = vmatpush1.bf16.msra.mxu0 0
      %492 = vmatprep.subr.bf16.mxu0 0
      %493 = vmatpush1.bf16.msra.mxu0 0
      %494 = vmatprep.subr.bf16.mxu0 0
      %495 = vmatpush1.bf16.msra.mxu0 0
      %496 = vmatprep.subr.bf16.mxu0 0
      %497 = vmatpush1.bf16.msra.mxu0 0
      %498 = vmatprep.mubr.bf16.mxu0 0
      %499 = vmatmul.mubr.bf16.gmra.mrb[0].mxu0 %v439
      %v500 = vpop.f32.mrb[0].mxu0
      %v501 = vadd.f32 0.0, %v500
      %v502 = vpop.f32.mrb[0].mxu0
      %v503 = vadd.f32 0.0, %v502
      %v504 = vpop.f32.mrb[0].mxu0
      %v505 = vpop.f32.mrb[0].mxu0
      %506 = vdwg.mxu0
      %507 = vmatprep.subr.bf16.mxu0 %v452
      %508 = vmatpush1.bf16.msra.mxu0 %v449
      %509 = vmatprep.subr.bf16.mxu0 0
      %510 = vmatpush1.bf16.msra.mxu0 0
      %511 = vmatprep.subr.bf16.mxu0 0
      %512 = vmatpush1.bf16.msra.mxu0 0
      %513 = vmatprep.subr.bf16.mxu0 0
      %514 = vmatpush1.bf16.msra.mxu0 0
      %515 = vmatprep.subr.bf16.mxu0 0
      %516 = vmatpush1.bf16.msra.mxu0 0
      %517 = vmatprep.subr.bf16.mxu0 0
      %518 = vmatpush1.bf16.msra.mxu0 0
      %519 = vmatprep.subr.bf16.mxu0 0
      %520 = vmatpush1.bf16.msra.mxu0 0
      %521 = vmatprep.subr.bf16.mxu0 0
      %522 = vmatpush1.bf16.msra.mxu0 0
      %523 = vmatprep.subr.bf16.mxu0 0
      %524 = vmatpush1.bf16.msra.mxu0 0
      %525 = vmatprep.subr.bf16.mxu0 0
      %526 = vmatpush1.bf16.msra.mxu0 0
      %527 = vmatprep.subr.bf16.mxu0 0
      %528 = vmatpush1.bf16.msra.mxu0 0
      %529 = vmatprep.subr.bf16.mxu0 0
      %530 = vmatpush1.bf16.msra.mxu0 0
      %531 = vmatprep.subr.bf16.mxu0 0
      %532 = vmatpush1.bf16.msra.mxu0 0
      %533 = vmatprep.subr.bf16.mxu0 0
      %534 = vmatpush1.bf16.msra.mxu0 0
      %535 = vmatprep.subr.bf16.mxu0 0
      %536 = vmatpush1.bf16.msra.mxu0 0
      %537 = vmatprep.subr.bf16.mxu0 0
      %538 = vmatpush1.bf16.msra.mxu0 0
      %539 = vmatprep.mubr.bf16.mxu0 0
      %540 = vmatmul.mubr.bf16.gmra.mrb[0].mxu0 %v439
      %v541 = vpop.f32.mrb[0].mxu0
      %v542 = vadd.f32 0.0, %v541
      %v543 = vpop.f32.mrb[0].mxu0
      %v544 = vadd.f32 0.0, %v543
      %v545 = vpop.f32.mrb[0].mxu0
      %v546 = vpop.f32.mrb[0].mxu0
      %547 = vdwg.mxu0
      %548 = vmatprep.subr.bf16.mxu0 %v458
      %549 = vmatpush1.bf16.msra.mxu0 %v455
      %550 = vmatprep.subr.bf16.mxu0 0
      %551 = vmatpush1.bf16.msra.mxu0 0
      %552 = vmatprep.subr.bf16.mxu0 0
      %553 = vmatpush1.bf16.msra.mxu0 0
      %554 = vmatprep.subr.bf16.mxu0 0
      %555 = vmatpush1.bf16.msra.mxu0 0
      %556 = vmatprep.subr.bf16.mxu0 0
      %557 = vmatpush1.bf16.msra.mxu0 0
      %558 = vmatprep.subr.bf16.mxu0 0
      %559 = vmatpush1.bf16.msra.mxu0 0
      %560 = vmatprep.subr.bf16.mxu0 0
      %561 = vmatpush1.bf16.msra.mxu0 0
      %562 = vmatprep.subr.bf16.mxu0 0
      %563 = vmatpush1.bf16.msra.mxu0 0
      %564 = vmatprep.subr.bf16.mxu0 0
      %565 = vmatpush1.bf16.msra.mxu0 0
      %566 = vmatprep.subr.bf16.mxu0 0
      %567 = vmatpush1.bf16.msra.mxu0 0
      %568 = vmatprep.subr.bf16.mxu0 0
      %569 = vmatpush1.bf16.msra.mxu0 0
      %570 = vmatprep.subr.bf16.mxu0 0
      %571 = vmatpush1.bf16.msra.mxu0 0
      %572 = vmatprep.subr.bf16.mxu0 0
      %573 = vmatpush1.bf16.msra.mxu0 0
      %574 = vmatprep.subr.bf16.mxu0 0
      %575 = vmatpush1.bf16.msra.mxu0 0
      %576 = vmatprep.subr.bf16.mxu0 0
      %577 = vmatpush1.bf16.msra.mxu0 0
      %578 = vmatprep.subr.bf16.mxu0 0
      %579 = vmatpush1.bf16.msra.mxu0 0
      %580 = vmatprep.mubr.bf16.mxu0 0
      %581 = vmatmul.mubr.bf16.gmra.mrb[0].mxu0 %v439
      %v582 = vpop.f32.mrb[0].mxu0
      %v583 = vadd.f32 0.0, %v582
      %v584 = vpop.f32.mrb[0].mxu0
      %v585 = vadd.f32 0.0, %v584
      %v586 = vpop.f32.mrb[0].mxu0
      %v587 = vpop.f32.mrb[0].mxu0
      %588 = vdwg.mxu0
      %589 = vmatprep.subr.bf16.mxu0 %v464
      %590 = vmatpush1.bf16.msra.mxu0 %v461
      %591 = vmatprep.subr.bf16.mxu0 0
      %592 = vmatpush1.bf16.msra.mxu0 0
      %593 = vmatprep.subr.bf16.mxu0 0
      %594 = vmatpush1.bf16.msra.mxu0 0
      %595 = vmatprep.subr.bf16.mxu0 0
      %596 = vmatpush1.bf16.msra.mxu0 0
      %597 = vmatprep.subr.bf16.mxu0 0
      %598 = vmatpush1.bf16.msra.mxu0 0
      %599 = vmatprep.subr.bf16.mxu0 0
      %600 = vmatpush1.bf16.msra.mxu0 0
      %601 = vmatprep.subr.bf16.mxu0 0
      %602 = vmatpush1.bf16.msra.mxu0 0
      %603 = vmatprep.subr.bf16.mxu0 0
      %604 = vmatpush1.bf16.msra.mxu0 0
      %605 = vmatprep.subr.bf16.mxu0 0
      %606 = vmatpush1.bf16.msra.mxu0 0
      %607 = vmatprep.subr.bf16.mxu0 0
      %608 = vmatpush1.bf16.msra.mxu0 0
      %609 = vmatprep.subr.bf16.mxu0 0
      %610 = vmatpush1.bf16.msra.mxu0 0
      %611 = vmatprep.subr.bf16.mxu0 0
      %612 = vmatpush1.bf16.msra.mxu0 0
      %613 = vmatprep.subr.bf16.mxu0 0
      %614 = vmatpush1.bf16.msra.mxu0 0
      %615 = vmatprep.subr.bf16.mxu0 0
      %616 = vmatpush1.bf16.msra.mxu0 0
      %617 = vmatprep.subr.bf16.mxu0 0
      %618 = vmatpush1.bf16.msra.mxu0 0
      %619 = vmatprep.subr.bf16.mxu0 0
      %620 = vmatpush1.bf16.msra.mxu0 0
      %621 = vmatprep.mubr.bf16.mxu0 0
      %622 = vmatmul.mubr.bf16.gmra.mrb[0].mxu0 %v439
      %v623 = vpop.f32.mrb[0].mxu0
      %v624 = vadd.f32 0.0, %v623
      %v625 = vpop.f32.mrb[0].mxu0
      %v626 = vadd.f32 0.0, %v625
      %v627 = vpop.f32.mrb[0].mxu0
      %v628 = vpop.f32.mrb[0].mxu0
      %629 = vdwg.mxu0
      %v631 = vsel %vm437, %v383, 0
      %v634 = vsel %vm441, %v401, 0
      %v637 = vsel %vm441, %v402, 0
      %v640 = vsel %vm441, %v403, 0
      %v643 = vsel %vm441, %v404, 0
      %v646 = vsel %vm441, %v405, 0
      %v649 = vsel %vm441, %v406, 0
      %v652 = vsel %vm441, %v407, 0
      %v655 = vsel %vm441, %v408, 0
      %657 = vmatprep.subr.bf16.mxu0 %v637
      %658 = vmatpush1.bf16.msra.mxu0 %v634
      %659 = vmatprep.subr.bf16.mxu0 0
      %660 = vmatpush1.bf16.msra.mxu0 0
      %661 = vmatprep.subr.bf16.mxu0 0
      %662 = vmatpush1.bf16.msra.mxu0 0
      %663 = vmatprep.subr.bf16.mxu0 0
      %664 = vmatpush1.bf16.msra.mxu0 0
      %665 = vmatprep.subr.bf16.mxu0 0
      %666 = vmatpush1.bf16.msra.mxu0 0
      %667 = vmatprep.subr.bf16.mxu0 0
      %668 = vmatpush1.bf16.msra.mxu0 0
      %669 = vmatprep.subr.bf16.mxu0 0
      %670 = vmatpush1.bf16.msra.mxu0 0
      %671 = vmatprep.subr.bf16.mxu0 0
      %672 = vmatpush1.bf16.msra.mxu0 0
      %673 = vmatprep.subr.bf16.mxu0 0
      %674 = vmatpush1.bf16.msra.mxu0 0
      %675 = vmatprep.subr.bf16.mxu0 0
      %676 = vmatpush1.bf16.msra.mxu0 0
      %677 = vmatprep.subr.bf16.mxu0 0
      %678 = vmatpush1.bf16.msra.mxu0 0
      %679 = vmatprep.subr.bf16.mxu0 0
      %680 = vmatpush1.bf16.msra.mxu0 0
      %681 = vmatprep.subr.bf16.mxu0 0
      %682 = vmatpush1.bf16.msra.mxu0 0
      %683 = vmatprep.subr.bf16.mxu0 0
      %684 = vmatpush1.bf16.msra.mxu0 0
      %685 = vmatprep.subr.bf16.mxu0 0
      %686 = vmatpush1.bf16.msra.mxu0 0
      %687 = vmatprep.subr.bf16.mxu0 0
      %688 = vmatpush1.bf16.msra.mxu0 0
      %689 = vmatprep.mubr.bf16.mxu0 0
      %690 = vmatmul.mubr.bf16.gmra.mrb[0].mxu0 %v631
      %v691 = vpop.f32.mrb[0].mxu0
      %v692 = vadd.f32 %v501, %v691
      %v693 = vpop.f32.mrb[0].mxu0
      %v694 = vadd.f32 %v503, %v693
      %v695 = vpop.f32.mrb[0].mxu0
      %v696 = vpop.f32.mrb[0].mxu0
      %697 = vdwg.mxu0
      %698 = vmatprep.subr.bf16.mxu0 %v643
      %699 = vmatpush1.bf16.msra.mxu0 %v640
      %700 = vmatprep.subr.bf16.mxu0 0
      %701 = vmatpush1.bf16.msra.mxu0 0
      %702 = vmatprep.subr.bf16.mxu0 0
      %703 = vmatpush1.bf16.msra.mxu0 0
      %704 = vmatprep.subr.bf16.mxu0 0
      %705 = vmatpush1.bf16.msra.mxu0 0
      %706 = vmatprep.subr.bf16.mxu0 0
      %707 = vmatpush1.bf16.msra.mxu0 0
      %708 = vmatprep.subr.bf16.mxu0 0
      %709 = vmatpush1.bf16.msra.mxu0 0
      %710 = vmatprep.subr.bf16.mxu0 0
      %711 = vmatpush1.bf16.msra.mxu0 0
      %712 = vmatprep.subr.bf16.mxu0 0
      %713 = vmatpush1.bf16.msra.mxu0 0
      %714 = vmatprep.subr.bf16.mxu0 0
      %715 = vmatpush1.bf16.msra.mxu0 0
      %716 = vmatprep.subr.bf16.mxu0 0
      %717 = vmatpush1.bf16.msra.mxu0 0
      %718 = vmatprep.subr.bf16.mxu0 0
      %719 = vmatpush1.bf16.msra.mxu0 0
      %720 = vmatprep.subr.bf16.mxu0 0
      %721 = vmatpush1.bf16.msra.mxu0 0
      %722 = vmatprep.subr.bf16.mxu0 0
      %723 = vmatpush1.bf16.msra.mxu0 0
      %724 = vmatprep.subr.bf16.mxu0 0
      %725 = vmatpush1.bf16.msra.mxu0 0
      %726 = vmatprep.subr.bf16.mxu0 0
      %727 = vmatpush1.bf16.msra.mxu0 0
      %728 = vmatprep.subr.bf16.mxu0 0
      %729 = vmatpush1.bf16.msra.mxu0 0
      %730 = vmatprep.mubr.bf16.mxu0 0
      %731 = vmatmul.mubr.bf16.gmra.mrb[0].mxu0 %v631
      %v732 = vpop.f32.mrb[0].mxu0
      %v733 = vadd.f32 %v542, %v732
      %v734 = vpop.f32.mrb[0].mxu0
      %v735 = vadd.f32 %v544, %v734
      %v736 = vpop.f32.mrb[0].mxu0
      %v737 = vpop.f32.mrb[0].mxu0
      %738 = vdwg.mxu0
      %739 = vmatprep.subr.bf16.mxu0 %v649
      %740 = vmatpush1.bf16.msra.mxu0 %v646
      %741 = vmatprep.subr.bf16.mxu0 0
      %742 = vmatpush1.bf16.msra.mxu0 0
      %743 = vmatprep.subr.bf16.mxu0 0
      %744 = vmatpush1.bf16.msra.mxu0 0
      %745 = vmatprep.subr.bf16.mxu0 0
      %746 = vmatpush1.bf16.msra.mxu0 0
      %747 = vmatprep.subr.bf16.mxu0 0
      %748 = vmatpush1.bf16.msra.mxu0 0
      %749 = vmatprep.subr.bf16.mxu0 0
      %750 = vmatpush1.bf16.msra.mxu0 0
      %751 = vmatprep.subr.bf16.mxu0 0
      %752 = vmatpush1.bf16.msra.mxu0 0
      %753 = vmatprep.subr.bf16.mxu0 0
      %754 = vmatpush1.bf16.msra.mxu0 0
      %755 = vmatprep.subr.bf16.mxu0 0
      %756 = vmatpush1.bf16.msra.mxu0 0
      %757 = vmatprep.subr.bf16.mxu0 0
      %758 = vmatpush1.bf16.msra.mxu0 0
      %759 = vmatprep.subr.bf16.mxu0 0
      %760 = vmatpush1.bf16.msra.mxu0 0
      %761 = vmatprep.subr.bf16.mxu0 0
      %762 = vmatpush1.bf16.msra.mxu0 0
      %763 = vmatprep.subr.bf16.mxu0 0
      %764 = vmatpush1.bf16.msra.mxu0 0
      %765 = vmatprep.subr.bf16.mxu0 0
      %766 = vmatpush1.bf16.msra.mxu0 0
      %767 = vmatprep.subr.bf16.mxu0 0
      %768 = vmatpush1.bf16.msra.mxu0 0
      %769 = vmatprep.subr.bf16.mxu0 0
      %770 = vmatpush1.bf16.msra.mxu0 0
      %771 = vmatprep.mubr.bf16.mxu0 0
      %772 = vmatmul.mubr.bf16.gmra.mrb[0].mxu0 %v631
      %v773 = vpop.f32.mrb[0].mxu0
      %v774 = vadd.f32 %v583, %v773
      %v775 = vpop.f32.mrb[0].mxu0
      %v776 = vadd.f32 %v585, %v775
      %v777 = vpop.f32.mrb[0].mxu0
      %v778 = vpop.f32.mrb[0].mxu0
      %779 = vdwg.mxu0
      %780 = vmatprep.subr.bf16.mxu0 %v655
      %781 = vmatpush1.bf16.msra.mxu0 %v652
      %782 = vmatprep.subr.bf16.mxu0 0
      %783 = vmatpush1.bf16.msra.mxu0 0
      %784 = vmatprep.subr.bf16.mxu0 0
      %785 = vmatpush1.bf16.msra.mxu0 0
      %786 = vmatprep.subr.bf16.mxu0 0
      %787 = vmatpush1.bf16.msra.mxu0 0
      %788 = vmatprep.subr.bf16.mxu0 0
      %789 = vmatpush1.bf16.msra.mxu0 0
      %790 = vmatprep.subr.bf16.mxu0 0
      %791 = vmatpush1.bf16.msra.mxu0 0
      %792 = vmatprep.subr.bf16.mxu0 0
      %793 = vmatpush1.bf16.msra.mxu0 0
      %794 = vmatprep.subr.bf16.mxu0 0
      %795 = vmatpush1.bf16.msra.mxu0 0
      %796 = vmatprep.subr.bf16.mxu0 0
      %797 = vmatpush1.bf16.msra.mxu0 0
      %798 = vmatprep.subr.bf16.mxu0 0
      %799 = vmatpush1.bf16.msra.mxu0 0
      %800 = vmatprep.subr.bf16.mxu0 0
      %801 = vmatpush1.bf16.msra.mxu0 0
      %802 = vmatprep.subr.bf16.mxu0 0
      %803 = vmatpush1.bf16.msra.mxu0 0
      %804 = vmatprep.subr.bf16.mxu0 0
      %805 = vmatpush1.bf16.msra.mxu0 0
      %806 = vmatprep.subr.bf16.mxu0 0
      %807 = vmatpush1.bf16.msra.mxu0 0
      %808 = vmatprep.subr.bf16.mxu0 0
      %809 = vmatpush1.bf16.msra.mxu0 0
      %810 = vmatprep.subr.bf16.mxu0 0
      %811 = vmatpush1.bf16.msra.mxu0 0
      %812 = vmatprep.mubr.bf16.mxu0 0
      %813 = vmatmul.mubr.bf16.gmra.mrb[0].mxu0 %v631
      %v814 = vpop.f32.mrb[0].mxu0
      %v815 = vadd.f32 %v624, %v814
      %v816 = vpop.f32.mrb[0].mxu0
      %v817 = vadd.f32 %v626, %v816
      %v818 = vpop.f32.mrb[0].mxu0
      %v819 = vpop.f32.mrb[0].mxu0
      %820 = vdwg.mxu0
      %s821 = scalar_lea.vmem %s1, 24
      %v822 = vld [vmem:[%s821] sm:$0xf]
      %823 = vrot.lane.b32.xlu0 %v401, 64
      %v824 = vpop.permute.xlu0 %823
      %825 = vrot.lane.b32.xlu0 %v402, 64
      %v826 = vpop.permute.xlu0 %825
      %827 = vrot.lane.b32.xlu0 %v403, 64
      %v828 = vpop.permute.xlu0 %827
      %829 = vrot.lane.b32.xlu0 %v404, 64
      %v830 = vpop.permute.xlu0 %829
      %831 = vrot.lane.b32.xlu0 %v405, 64
      %v832 = vpop.permute.xlu0 %831
      %833 = vrot.lane.b32.xlu0 %v406, 64
      %v834 = vpop.permute.xlu0 %833
      %835 = vrot.lane.b32.xlu0 %v407, 64
      %v836 = vpop.permute.xlu0 %835
      %837 = vrot.lane.b32.xlu0 %v408, 64
      %v838 = vpop.permute.xlu0 %837
      %839 = vrot.lane.b32.xlu0 %v409, 64
      %v840 = vpop.permute.xlu0 %839
      %vm841 = vcmask 523264
      %v842 = vsel %vm841, %v824, %v826
      %v843 = vsel %vm841, %v826, %v828
      %v844 = vsel %vm841, %v828, %v830
      %v845 = vsel %vm841, %v830, %v832
      %v846 = vsel %vm841, %v832, %v834
      %v847 = vsel %vm841, %v834, %v836
      %v848 = vsel %vm841, %v836, %v838
      %v849 = vsel %vm841, %v838, %v840
      %v851 = vsel %vm437, %v822, 0
      %v854 = vsel %vm441, %v842, 0
      %v857 = vsel %vm441, %v843, 0
      %v860 = vsel %vm441, %v844, 0
      %v863 = vsel %vm441, %v845, 0
      %v866 = vsel %vm441, %v846, 0
      %v869 = vsel %vm441, %v847, 0
      %v872 = vsel %vm441, %v848, 0
      %v875 = vsel %vm441, %v849, 0
      %877 = vmatprep.subr.bf16.mxu0 %v857
      %878 = vmatpush1.bf16.msra.mxu0 %v854
      %879 = vmatprep.subr.bf16.mxu0 0
      %880 = vmatpush1.bf16.msra.mxu0 0
      %881 = vmatprep.subr.bf16.mxu0 0
      %882 = vmatpush1.bf16.msra.mxu0 0
      %883 = vmatprep.subr.bf16.mxu0 0
      %884 = vmatpush1.bf16.msra.mxu0 0
      %885 = vmatprep.subr.bf16.mxu0 0
      %886 = vmatpush1.bf16.msra.mxu0 0
      %887 = vmatprep.subr.bf16.mxu0 0
      %888 = vmatpush1.bf16.msra.mxu0 0
      %889 = vmatprep.subr.bf16.mxu0 0
      %890 = vmatpush1.bf16.msra.mxu0 0
      %891 = vmatprep.subr.bf16.mxu0 0
      %892 = vmatpush1.bf16.msra.mxu0 0
      %893 = vmatprep.subr.bf16.mxu0 0
      %894 = vmatpush1.bf16.msra.mxu0 0
      %895 = vmatprep.subr.bf16.mxu0 0
      %896 = vmatpush1.bf16.msra.mxu0 0
      %897 = vmatprep.subr.bf16.mxu0 0
      %898 = vmatpush1.bf16.msra.mxu0 0
      %899 = vmatprep.subr.bf16.mxu0 0
      %900 = vmatpush1.bf16.msra.mxu0 0
      %901 = vmatprep.subr.bf16.mxu0 0
      %902 = vmatpush1.bf16.msra.mxu0 0
      %903 = vmatprep.subr.bf16.mxu0 0
      %904 = vmatpush1.bf16.msra.mxu0 0
      %905 = vmatprep.subr.bf16.mxu0 0
      %906 = vmatpush1.bf16.msra.mxu0 0
      %907 = vmatprep.subr.bf16.mxu0 0
      %908 = vmatpush1.bf16.msra.mxu0 0
      %909 = vmatprep.mubr.bf16.mxu0 0
      %910 = vmatmul.mubr.bf16.gmra.mrb[0].mxu0 %v851
      %v911 = vpop.f32.mrb[0].mxu0
      %v912 = vadd.f32 0.0, %v911
      %v913 = vpop.f32.mrb[0].mxu0
      %v914 = vadd.f32 0.0, %v913
      %v915 = vpop.f32.mrb[0].mxu0
      %v916 = vpop.f32.mrb[0].mxu0
      %917 = vdwg.mxu0
      %918 = vmatprep.subr.bf16.mxu0 %v863
      %919 = vmatpush1.bf16.msra.mxu0 %v860
      %920 = vmatprep.subr.bf16.mxu0 0
      %921 = vmatpush1.bf16.msra.mxu0 0
      %922 = vmatprep.subr.bf16.mxu0 0
      %923 = vmatpush1.bf16.msra.mxu0 0
      %924 = vmatprep.subr.bf16.mxu0 0
      %925 = vmatpush1.bf16.msra.mxu0 0
      %926 = vmatprep.subr.bf16.mxu0 0
      %927 = vmatpush1.bf16.msra.mxu0 0
      %928 = vmatprep.subr.bf16.mxu0 0
      %929 = vmatpush1.bf16.msra.mxu0 0
      %930 = vmatprep.subr.bf16.mxu0 0
      %931 = vmatpush1.bf16.msra.mxu0 0
      %932 = vmatprep.subr.bf16.mxu0 0
      %933 = vmatpush1.bf16.msra.mxu0 0
      %934 = vmatprep.subr.bf16.mxu0 0
      %935 = vmatpush1.bf16.msra.mxu0 0
      %936 = vmatprep.subr.bf16.mxu0 0
      %937 = vmatpush1.bf16.msra.mxu0 0
      %938 = vmatprep.subr.bf16.mxu0 0
      %939 = vmatpush1.bf16.msra.mxu0 0
      %940 = vmatprep.subr.bf16.mxu0 0
      %941 = vmatpush1.bf16.msra.mxu0 0
      %942 = vmatprep.subr.bf16.mxu0 0
      %943 = vmatpush1.bf16.msra.mxu0 0
      %944 = vmatprep.subr.bf16.mxu0 0
      %945 = vmatpush1.bf16.msra.mxu0 0
      %946 = vmatprep.subr.bf16.mxu0 0
      %947 = vmatpush1.bf16.msra.mxu0 0
      %948 = vmatprep.subr.bf16.mxu0 0
      %949 = vmatpush1.bf16.msra.mxu0 0
      %950 = vmatprep.mubr.bf16.mxu0 0
      %951 = vmatmul.mubr.bf16.gmra.mrb[0].mxu0 %v851
      %v952 = vpop.f32.mrb[0].mxu0
      %v953 = vadd.f32 0.0, %v952
      %v954 = vpop.f32.mrb[0].mxu0
      %v955 = vadd.f32 0.0, %v954
      %v956 = vpop.f32.mrb[0].mxu0
      %v957 = vpop.f32.mrb[0].mxu0
      %958 = vdwg.mxu0
      %959 = vmatprep.subr.bf16.mxu0 %v869
      %960 = vmatpush1.bf16.msra.mxu0 %v866
      %961 = vmatprep.subr.bf16.mxu0 0
      %962 = vmatpush1.bf16.msra.mxu0 0
      %963 = vmatprep.subr.bf16.mxu0 0
      %964 = vmatpush1.bf16.msra.mxu0 0
      %965 = vmatprep.subr.bf16.mxu0 0
      %966 = vmatpush1.bf16.msra.mxu0 0
      %967 = vmatprep.subr.bf16.mxu0 0
      %968 = vmatpush1.bf16.msra.mxu0 0
      %969 = vmatprep.subr.bf16.mxu0 0
      %970 = vmatpush1.bf16.msra.mxu0 0
      %971 = vmatprep.subr.bf16.mxu0 0
      %972 = vmatpush1.bf16.msra.mxu0 0
      %973 = vmatprep.subr.bf16.mxu0 0
      %974 = vmatpush1.bf16.msra.mxu0 0
      %975 = vmatprep.subr.bf16.mxu0 0
      %976 = vmatpush1.bf16.msra.mxu0 0
      %977 = vmatprep.subr.bf16.mxu0 0
      %978 = vmatpush1.bf16.msra.mxu0 0
      %979 = vmatprep.subr.bf16.mxu0 0
      %980 = vmatpush1.bf16.msra.mxu0 0
      %981 = vmatprep.subr.bf16.mxu0 0
      %982 = vmatpush1.bf16.msra.mxu0 0
      %983 = vmatprep.subr.bf16.mxu0 0
      %984 = vmatpush1.bf16.msra.mxu0 0
      %985 = vmatprep.subr.bf16.mxu0 0
      %986 = vmatpush1.bf16.msra.mxu0 0
      %987 = vmatprep.subr.bf16.mxu0 0
      %988 = vmatpush1.bf16.msra.mxu0 0
      %989 = vmatprep.subr.bf16.mxu0 0
      %990 = vmatpush1.bf16.msra.mxu0 0
      %991 = vmatprep.mubr.bf16.mxu0 0
      %992 = vmatmul.mubr.bf16.gmra.mrb[0].mxu0 %v851
      %v993 = vpop.f32.mrb[0].mxu0
      %v994 = vadd.f32 0.0, %v993
      %v995 = vpop.f32.mrb[0].mxu0
      %v996 = vadd.f32 0.0, %v995
      %v997 = vpop.f32.mrb[0].mxu0
      %v998 = vpop.f32.mrb[0].mxu0
      %999 = vdwg.mxu0
      %1000 = vmatprep.subr.bf16.mxu0 %v875
      %1001 = vmatpush1.bf16.msra.mxu0 %v872
      %1002 = vmatprep.subr.bf16.mxu0 0
      %1003 = vmatpush1.bf16.msra.mxu0 0
      %1004 = vmatprep.subr.bf16.mxu0 0
      %1005 = vmatpush1.bf16.msra.mxu0 0
      %1006 = vmatprep.subr.bf16.mxu0 0
      %1007 = vmatpush1.bf16.msra.mxu0 0
      %1008 = vmatprep.subr.bf16.mxu0 0
      %1009 = vmatpush1.bf16.msra.mxu0 0
      %1010 = vmatprep.subr.bf16.mxu0 0
      %1011 = vmatpush1.bf16.msra.mxu0 0
      %1012 = vmatprep.subr.bf16.mxu0 0
      %1013 = vmatpush1.bf16.msra.mxu0 0
      %1014 = vmatprep.subr.bf16.mxu0 0
      %1015 = vmatpush1.bf16.msra.mxu0 0
      %1016 = vmatprep.subr.bf16.mxu0 0
      %1017 = vmatpush1.bf16.msra.mxu0 0
      %1018 = vmatprep.subr.bf16.mxu0 0
      %1019 = vmatpush1.bf16.msra.mxu0 0
      %1020 = vmatprep.subr.bf16.mxu0 0
      %1021 = vmatpush1.bf16.msra.mxu0 0
      %1022 = vmatprep.subr.bf16.mxu0 0
      %1023 = vmatpush1.bf16.msra.mxu0 0
      %1024 = vmatprep.subr.bf16.mxu0 0
      %1025 = vmatpush1.bf16.msra.mxu0 0
      %1026 = vmatprep.subr.bf16.mxu0 0
      %1027 = vmatpush1.bf16.msra.mxu0 0
      %1028 = vmatprep.subr.bf16.mxu0 0
      %1029 = vmatpush1.bf16.msra.mxu0 0
      %1030 = vmatprep.subr.bf16.mxu0 0
      %1031 = vmatpush1.bf16.msra.mxu0 0
      %1032 = vmatprep.mubr.bf16.mxu0 0
      %1033 = vmatmul.mubr.bf16.gmra.mrb[0].mxu0 %v851
      %v1034 = vpop.f32.mrb[0].mxu0
      %v1035 = vadd.f32 0.0, %v1034
      %v1036 = vpop.f32.mrb[0].mxu0
      %v1037 = vadd.f32 0.0, %v1036
      %v1038 = vpop.f32.mrb[0].mxu0
      %v1039 = vpop.f32.mrb[0].mxu0
      %1040 = vdwg.mxu0
      %v1041 = vadd.f32 %v692, %v912
      %v1042 = vadd.f32 %v694, %v914
      %v1043 = vadd.f32 %v733, %v953
      %v1044 = vadd.f32 %v735, %v955
      %v1045 = vadd.f32 %v774, %v994
      %v1046 = vadd.f32 %v776, %v996
      %v1047 = vadd.f32 %v815, %v1035
      %v1048 = vadd.f32 %v817, %v1037
      %v1049 = vmul.f32 %v1041, %v347
      %v1050 = vmul.f32 %v1042, %v348
      %v1051 = vmul.f32 %v1043, %v349
      %v1052 = vmul.f32 %v1044, %v350
      %v1053 = vmul.f32 %v1045, %v351
      %v1054 = vmul.f32 %v1046, %v352
      %v1055 = vmul.f32 %v1047, %v353
      %v1056 = vmul.f32 %v1048, %v354
      %v1057 = vadd.f32 %v1049, 0.0
      %v1058 = vadd.f32 %v1050, 0.0
      %v1059 = vadd.f32 %v1051, 0.0
      %v1060 = vadd.f32 %v1052, 0.0
      %v1061 = vadd.f32 %v1053, 0.0
      %v1062 = vadd.f32 %v1054, 0.0
      %v1063 = vadd.f32 %v1055, 0.0
      %v1064 = vadd.f32 %v1056, 0.0
      %s1065 = scalar_lea.vmem %s1, 4
      %v1066 = vld [vmem:[%s1065] sm:$0xf]
      %s1067 = scalar_lea.vmem %s1, 16
      %v1068 = vld [vmem:[%s1067] sm:$0xf]
      %1069 = vrot.lane.b32.xlu0 %v401, 95
      %v1070 = vpop.permute.xlu0 %1069
      %1071 = vrot.lane.b32.xlu0 %v402, 95
      %v1072 = vpop.permute.xlu0 %1071
      %1073 = vrot.lane.b32.xlu0 %v403, 95
      %v1074 = vpop.permute.xlu0 %1073
      %1075 = vrot.lane.b32.xlu0 %v404, 95
      %v1076 = vpop.permute.xlu0 %1075
      %1077 = vrot.lane.b32.xlu0 %v405, 95
      %v1078 = vpop.permute.xlu0 %1077
      %1079 = vrot.lane.b32.xlu0 %v406, 95
      %v1080 = vpop.permute.xlu0 %1079
      %1081 = vrot.lane.b32.xlu0 %v407, 95
      %v1082 = vpop.permute.xlu0 %1081
      %1083 = vrot.lane.b32.xlu0 %v408, 95
      %v1084 = vpop.permute.xlu0 %1083
      %1085 = vrot.lane.b32.xlu0 %v409, 95
      %v1086 = vpop.permute.xlu0 %1085
      %vm1087 = vcmask 777216
      %v1088 = vsel %vm1087, %v1070, %v1072
      %v1089 = vsel %vm1087, %v1072, %v1074
      %v1090 = vsel %vm1087, %v1074, %v1076
      %v1091 = vsel %vm1087, %v1076, %v1078
      %v1092 = vsel %vm1087, %v1078, %v1080
      %v1093 = vsel %vm1087, %v1080, %v1082
      %v1094 = vsel %vm1087, %v1082, %v1084
      %v1095 = vsel %vm1087, %v1084, %v1086
      %v1097 = vsel %vm437, %v1068, 0
      %v1100 = vsel %vm441, %v1088, 0
      %v1103 = vsel %vm441, %v1089, 0
      %v1106 = vsel %vm441, %v1090, 0
      %v1109 = vsel %vm441, %v1091, 0
      %v1112 = vsel %vm441, %v1092, 0
      %v1115 = vsel %vm441, %v1093, 0
      %v1118 = vsel %vm441, %v1094, 0
      %v1121 = vsel %vm441, %v1095, 0
      %1123 = vmatprep.subr.bf16.mxu0 %v1103
      %1124 = vmatpush1.bf16.msra.mxu0 %v1100
      %1125 = vmatprep.subr.bf16.mxu0 0
      %1126 = vmatpush1.bf16.msra.mxu0 0
      %1127 = vmatprep.subr.bf16.mxu0 0
      %1128 = vmatpush1.bf16.msra.mxu0 0
      %1129 = vmatprep.subr.bf16.mxu0 0
      %1130 = vmatpush1.bf16.msra.mxu0 0
      %1131 = vmatprep.subr.bf16.mxu0 0
      %1132 = vmatpush1.bf16.msra.mxu0 0
      %1133 = vmatprep.subr.bf16.mxu0 0
      %1134 = vmatpush1.bf16.msra.mxu0 0
      %1135 = vmatprep.subr.bf16.mxu0 0
      %1136 = vmatpush1.bf16.msra.mxu0 0
      %1137 = vmatprep.subr.bf16.mxu0 0
      %1138 = vmatpush1.bf16.msra.mxu0 0
      %1139 = vmatprep.subr.bf16.mxu0 0
      %1140 = vmatpush1.bf16.msra.mxu0 0
      %1141 = vmatprep.subr.bf16.mxu0 0
      %1142 = vmatpush1.bf16.msra.mxu0 0
      %1143 = vmatprep.subr.bf16.mxu0 0
      %1144 = vmatpush1.bf16.msra.mxu0 0
      %1145 = vmatprep.subr.bf16.mxu0 0
      %1146 = vmatpush1.bf16.msra.mxu0 0
      %1147 = vmatprep.subr.bf16.mxu0 0
      %1148 = vmatpush1.bf16.msra.mxu0 0
      %1149 = vmatprep.subr.bf16.mxu0 0
      %1150 = vmatpush1.bf16.msra.mxu0 0
      %1151 = vmatprep.subr.bf16.mxu0 0
      %1152 = vmatpush1.bf16.msra.mxu0 0
      %1153 = vmatprep.subr.bf16.mxu0 0
      %1154 = vmatpush1.bf16.msra.mxu0 0
      %1155 = vmatprep.mubr.bf16.mxu0 0
      %1156 = vmatmul.mubr.bf16.gmra.mrb[0].mxu0 %v1097
      %v1157 = vpop.f32.mrb[0].mxu0
      %v1158 = vadd.f32 0.0, %v1157
      %v1159 = vpop.f32.mrb[0].mxu0
      %v1160 = vadd.f32 0.0, %v1159
      %v1161 = vpop.f32.mrb[0].mxu0
      %v1162 = vpop.f32.mrb[0].mxu0
      %1163 = vdwg.mxu0
      %1164 = vmatprep.subr.bf16.mxu0 %v1109
      %1165 = vmatpush1.bf16.msra.mxu0 %v1106
      %1166 = vmatprep.subr.bf16.mxu0 0
      %1167 = vmatpush1.bf16.msra.mxu0 0
      %1168 = vmatprep.subr.bf16.mxu0 0
      %1169 = vmatpush1.bf16.msra.mxu0 0
      %1170 = vmatprep.subr.bf16.mxu0 0
      %1171 = vmatpush1.bf16.msra.mxu0 0
      %1172 = vmatprep.subr.bf16.mxu0 0
      %1173 = vmatpush1.bf16.msra.mxu0 0
      %1174 = vmatprep.subr.bf16.mxu0 0
      %1175 = vmatpush1.bf16.msra.mxu0 0
      %1176 = vmatprep.subr.bf16.mxu0 0
      %1177 = vmatpush1.bf16.msra.mxu0 0
      %1178 = vmatprep.subr.bf16.mxu0 0
      %1179 = vmatpush1.bf16.msra.mxu0 0
      %1180 = vmatprep.subr.bf16.mxu0 0
      %1181 = vmatpush1.bf16.msra.mxu0 0
      %1182 = vmatprep.subr.bf16.mxu0 0
      %1183 = vmatpush1.bf16.msra.mxu0 0
      %1184 = vmatprep.subr.bf16.mxu0 0
      %1185 = vmatpush1.bf16.msra.mxu0 0
      %1186 = vmatprep.subr.bf16.mxu0 0
      %1187 = vmatpush1.bf16.msra.mxu0 0
      %1188 = vmatprep.subr.bf16.mxu0 0
      %1189 = vmatpush1.bf16.msra.mxu0 0
      %1190 = vmatprep.subr.bf16.mxu0 0
      %1191 = vmatpush1.bf16.msra.mxu0 0
      %1192 = vmatprep.subr.bf16.mxu0 0
      %1193 = vmatpush1.bf16.msra.mxu0 0
      %1194 = vmatprep.subr.bf16.mxu0 0
      %1195 = vmatpush1.bf16.msra.mxu0 0
      %1196 = vmatprep.mubr.bf16.mxu0 0
      %1197 = vmatmul.mubr.bf16.gmra.mrb[0].mxu0 %v1097
      %v1198 = vpop.f32.mrb[0].mxu0
      %v1199 = vadd.f32 0.0, %v1198
      %v1200 = vpop.f32.mrb[0].mxu0
      %v1201 = vadd.f32 0.0, %v1200
      %v1202 = vpop.f32.mrb[0].mxu0
      %v1203 = vpop.f32.mrb[0].mxu0
      %1204 = vdwg.mxu0
      %1205 = vmatprep.subr.bf16.mxu0 %v1115
      %1206 = vmatpush1.bf16.msra.mxu0 %v1112
      %1207 = vmatprep.subr.bf16.mxu0 0
      %1208 = vmatpush1.bf16.msra.mxu0 0
      %1209 = vmatprep.subr.bf16.mxu0 0
      %1210 = vmatpush1.bf16.msra.mxu0 0
      %1211 = vmatprep.subr.bf16.mxu0 0
      %1212 = vmatpush1.bf16.msra.mxu0 0
      %1213 = vmatprep.subr.bf16.mxu0 0
      %1214 = vmatpush1.bf16.msra.mxu0 0
      %1215 = vmatprep.subr.bf16.mxu0 0
      %1216 = vmatpush1.bf16.msra.mxu0 0
      %1217 = vmatprep.subr.bf16.mxu0 0
      %1218 = vmatpush1.bf16.msra.mxu0 0
      %1219 = vmatprep.subr.bf16.mxu0 0
      %1220 = vmatpush1.bf16.msra.mxu0 0
      %1221 = vmatprep.subr.bf16.mxu0 0
      %1222 = vmatpush1.bf16.msra.mxu0 0
      %1223 = vmatprep.subr.bf16.mxu0 0
      %1224 = vmatpush1.bf16.msra.mxu0 0
      %1225 = vmatprep.subr.bf16.mxu0 0
      %1226 = vmatpush1.bf16.msra.mxu0 0
      %1227 = vmatprep.subr.bf16.mxu0 0
      %1228 = vmatpush1.bf16.msra.mxu0 0
      %1229 = vmatprep.subr.bf16.mxu0 0
      %1230 = vmatpush1.bf16.msra.mxu0 0
      %1231 = vmatprep.subr.bf16.mxu0 0
      %1232 = vmatpush1.bf16.msra.mxu0 0
      %1233 = vmatprep.subr.bf16.mxu0 0
      %1234 = vmatpush1.bf16.msra.mxu0 0
      %1235 = vmatprep.subr.bf16.mxu0 0
      %1236 = vmatpush1.bf16.msra.mxu0 0
      %1237 = vmatprep.mubr.bf16.mxu0 0
      %1238 = vmatmul.mubr.bf16.gmra.mrb[0].mxu0 %v1097
      %v1239 = vpop.f32.mrb[0].mxu0
      %v1240 = vadd.f32 0.0, %v1239
      %v1241 = vpop.f32.mrb[0].mxu0
      %v1242 = vadd.f32 0.0, %v1241
      %v1243 = vpop.f32.mrb[0].mxu0
      %v1244 = vpop.f32.mrb[0].mxu0
      %1245 = vdwg.mxu0
      %1246 = vmatprep.subr.bf16.mxu0 %v1121
      %1247 = vmatpush1.bf16.msra.mxu0 %v1118
      %1248 = vmatprep.subr.bf16.mxu0 0
      %1249 = vmatpush1.bf16.msra.mxu0 0
      %1250 = vmatprep.subr.bf16.mxu0 0
      %1251 = vmatpush1.bf16.msra.mxu0 0
      %1252 = vmatprep.subr.bf16.mxu0 0
      %1253 = vmatpush1.bf16.msra.mxu0 0
      %1254 = vmatprep.subr.bf16.mxu0 0
      %1255 = vmatpush1.bf16.msra.mxu0 0
      %1256 = vmatprep.subr.bf16.mxu0 0
      %1257 = vmatpush1.bf16.msra.mxu0 0
      %1258 = vmatprep.subr.bf16.mxu0 0
      %1259 = vmatpush1.bf16.msra.mxu0 0
      %1260 = vmatprep.subr.bf16.mxu0 0
      %1261 = vmatpush1.bf16.msra.mxu0 0
      %1262 = vmatprep.subr.bf16.mxu0 0
      %1263 = vmatpush1.bf16.msra.mxu0 0
      %1264 = vmatprep.subr.bf16.mxu0 0
      %1265 = vmatpush1.bf16.msra.mxu0 0
      %1266 = vmatprep.subr.bf16.mxu0 0
      %1267 = vmatpush1.bf16.msra.mxu0 0
      %1268 = vmatprep.subr.bf16.mxu0 0
      %1269 = vmatpush1.bf16.msra.mxu0 0
      %1270 = vmatprep.subr.bf16.mxu0 0
      %1271 = vmatpush1.bf16.msra.mxu0 0
      %1272 = vmatprep.subr.bf16.mxu0 0
      %1273 = vmatpush1.bf16.msra.mxu0 0
      %1274 = vmatprep.subr.bf16.mxu0 0
      %1275 = vmatpush1.bf16.msra.mxu0 0
      %1276 = vmatprep.subr.bf16.mxu0 0
      %1277 = vmatpush1.bf16.msra.mxu0 0
      %1278 = vmatprep.mubr.bf16.mxu0 0
      %1279 = vmatmul.mubr.bf16.gmra.mrb[0].mxu0 %v1097
      %v1280 = vpop.f32.mrb[0].mxu0
      %v1281 = vadd.f32 0.0, %v1280
      %v1282 = vpop.f32.mrb[0].mxu0
      %v1283 = vadd.f32 0.0, %v1282
      %v1284 = vpop.f32.mrb[0].mxu0
      %v1285 = vpop.f32.mrb[0].mxu0
      %1286 = vdwg.mxu0
      %1287 = vrot.lane.b32.xlu0 %v401, 127
      %v1288 = vpop.permute.xlu0 %1287
      %1289 = vrot.lane.b32.xlu0 %v402, 127
      %v1290 = vpop.permute.xlu0 %1289
      %1291 = vrot.lane.b32.xlu0 %v403, 127
      %v1292 = vpop.permute.xlu0 %1291
      %1293 = vrot.lane.b32.xlu0 %v404, 127
      %v1294 = vpop.permute.xlu0 %1293
      %1295 = vrot.lane.b32.xlu0 %v405, 127
      %v1296 = vpop.permute.xlu0 %1295
      %1297 = vrot.lane.b32.xlu0 %v406, 127
      %v1298 = vpop.permute.xlu0 %1297
      %1299 = vrot.lane.b32.xlu0 %v407, 127
      %v1300 = vpop.permute.xlu0 %1299
      %1301 = vrot.lane.b32.xlu0 %v408, 127
      %v1302 = vpop.permute.xlu0 %1301
      %1303 = vrot.lane.b32.xlu0 %v409, 127
      %v1304 = vpop.permute.xlu0 %1303
      %vm1305 = vcmask 1039360
      %v1306 = vsel %vm1305, %v1288, %v1290
      %v1307 = vsel %vm1305, %v1290, %v1292
      %v1308 = vsel %vm1305, %v1292, %v1294
      %v1309 = vsel %vm1305, %v1294, %v1296
      %v1310 = vsel %vm1305, %v1296, %v1298
      %v1311 = vsel %vm1305, %v1298, %v1300
      %v1312 = vsel %vm1305, %v1300, %v1302
      %v1313 = vsel %vm1305, %v1302, %v1304
      %v1315 = vsel %vm437, %v1066, 0
      %v1318 = vsel %vm441, %v1306, 0
      %v1321 = vsel %vm441, %v1307, 0
      %v1324 = vsel %vm441, %v1308, 0
      %v1327 = vsel %vm441, %v1309, 0
      %v1330 = vsel %vm441, %v1310, 0
      %v1333 = vsel %vm441, %v1311, 0
      %v1336 = vsel %vm441, %v1312, 0
      %v1339 = vsel %vm441, %v1313, 0
      %1341 = vmatprep.subr.bf16.mxu0 %v1321
      %1342 = vmatpush1.bf16.msra.mxu0 %v1318
      %1343 = vmatprep.subr.bf16.mxu0 0
      %1344 = vmatpush1.bf16.msra.mxu0 0
      %1345 = vmatprep.subr.bf16.mxu0 0
      %1346 = vmatpush1.bf16.msra.mxu0 0
      %1347 = vmatprep.subr.bf16.mxu0 0
      %1348 = vmatpush1.bf16.msra.mxu0 0
      %1349 = vmatprep.subr.bf16.mxu0 0
      %1350 = vmatpush1.bf16.msra.mxu0 0
      %1351 = vmatprep.subr.bf16.mxu0 0
      %1352 = vmatpush1.bf16.msra.mxu0 0
      %1353 = vmatprep.subr.bf16.mxu0 0
      %1354 = vmatpush1.bf16.msra.mxu0 0
      %1355 = vmatprep.subr.bf16.mxu0 0
      %1356 = vmatpush1.bf16.msra.mxu0 0
      %1357 = vmatprep.subr.bf16.mxu0 0
      %1358 = vmatpush1.bf16.msra.mxu0 0
      %1359 = vmatprep.subr.bf16.mxu0 0
      %1360 = vmatpush1.bf16.msra.mxu0 0
      %1361 = vmatprep.subr.bf16.mxu0 0
      %1362 = vmatpush1.bf16.msra.mxu0 0
      %1363 = vmatprep.subr.bf16.mxu0 0
      %1364 = vmatpush1.bf16.msra.mxu0 0
      %1365 = vmatprep.subr.bf16.mxu0 0
      %1366 = vmatpush1.bf16.msra.mxu0 0
      %1367 = vmatprep.subr.bf16.mxu0 0
      %1368 = vmatpush1.bf16.msra.mxu0 0
      %1369 = vmatprep.subr.bf16.mxu0 0
      %1370 = vmatpush1.bf16.msra.mxu0 0
      %1371 = vmatprep.subr.bf16.mxu0 0
      %1372 = vmatpush1.bf16.msra.mxu0 0
      %1373 = vmatprep.mubr.bf16.mxu0 0
      %1374 = vmatmul.mubr.bf16.gmra.mrb[0].mxu0 %v1315
      %v1375 = vpop.f32.mrb[0].mxu0
      %v1376 = vadd.f32 %v1158, %v1375
      %v1377 = vpop.f32.mrb[0].mxu0
      %v1378 = vadd.f32 %v1160, %v1377
      %v1379 = vpop.f32.mrb[0].mxu0
      %v1380 = vpop.f32.mrb[0].mxu0
      %1381 = vdwg.mxu0
      %1382 = vmatprep.subr.bf16.mxu0 %v1327
      %1383 = vmatpush1.bf16.msra.mxu0 %v1324
      %1384 = vmatprep.subr.bf16.mxu0 0
      %1385 = vmatpush1.bf16.msra.mxu0 0
      %1386 = vmatprep.subr.bf16.mxu0 0
      %1387 = vmatpush1.bf16.msra.mxu0 0
      %1388 = vmatprep.subr.bf16.mxu0 0
      %1389 = vmatpush1.bf16.msra.mxu0 0
      %1390 = vmatprep.subr.bf16.mxu0 0
      %1391 = vmatpush1.bf16.msra.mxu0 0
      %1392 = vmatprep.subr.bf16.mxu0 0
      %1393 = vmatpush1.bf16.msra.mxu0 0
      %1394 = vmatprep.subr.bf16.mxu0 0
      %1395 = vmatpush1.bf16.msra.mxu0 0
      %1396 = vmatprep.subr.bf16.mxu0 0
      %1397 = vmatpush1.bf16.msra.mxu0 0
      %1398 = vmatprep.subr.bf16.mxu0 0
      %1399 = vmatpush1.bf16.msra.mxu0 0
      %1400 = vmatprep.subr.bf16.mxu0 0
      %1401 = vmatpush1.bf16.msra.mxu0 0
      %1402 = vmatprep.subr.bf16.mxu0 0
      %1403 = vmatpush1.bf16.msra.mxu0 0
      %1404 = vmatprep.subr.bf16.mxu0 0
      %1405 = vmatpush1.bf16.msra.mxu0 0
      %1406 = vmatprep.subr.bf16.mxu0 0
      %1407 = vmatpush1.bf16.msra.mxu0 0
      %1408 = vmatprep.subr.bf16.mxu0 0
      %1409 = vmatpush1.bf16.msra.mxu0 0
      %1410 = vmatprep.subr.bf16.mxu0 0
      %1411 = vmatpush1.bf16.msra.mxu0 0
      %1412 = vmatprep.subr.bf16.mxu0 0
      %1413 = vmatpush1.bf16.msra.mxu0 0
      %1414 = vmatprep.mubr.bf16.mxu0 0
      %1415 = vmatmul.mubr.bf16.gmra.mrb[0].mxu0 %v1315
      %v1416 = vpop.f32.mrb[0].mxu0
      %v1417 = vadd.f32 %v1199, %v1416
      %v1418 = vpop.f32.mrb[0].mxu0
      %v1419 = vadd.f32 %v1201, %v1418
      %v1420 = vpop.f32.mrb[0].mxu0
      %v1421 = vpop.f32.mrb[0].mxu0
      %1422 = vdwg.mxu0
      %1423 = vmatprep.subr.bf16.mxu0 %v1333
      %1424 = vmatpush1.bf16.msra.mxu0 %v1330
      %1425 = vmatprep.subr.bf16.mxu0 0
      %1426 = vmatpush1.bf16.msra.mxu0 0
      %1427 = vmatprep.subr.bf16.mxu0 0
      %1428 = vmatpush1.bf16.msra.mxu0 0
      %1429 = vmatprep.subr.bf16.mxu0 0
      %1430 = vmatpush1.bf16.msra.mxu0 0
      %1431 = vmatprep.subr.bf16.mxu0 0
      %1432 = vmatpush1.bf16.msra.mxu0 0
      %1433 = vmatprep.subr.bf16.mxu0 0
      %1434 = vmatpush1.bf16.msra.mxu0 0
      %1435 = vmatprep.subr.bf16.mxu0 0
      %1436 = vmatpush1.bf16.msra.mxu0 0
      %1437 = vmatprep.subr.bf16.mxu0 0
      %1438 = vmatpush1.bf16.msra.mxu0 0
      %1439 = vmatprep.subr.bf16.mxu0 0
      %1440 = vmatpush1.bf16.msra.mxu0 0
      %1441 = vmatprep.subr.bf16.mxu0 0
      %1442 = vmatpush1.bf16.msra.mxu0 0
      %1443 = vmatprep.subr.bf16.mxu0 0
      %1444 = vmatpush1.bf16.msra.mxu0 0
      %1445 = vmatprep.subr.bf16.mxu0 0
      %1446 = vmatpush1.bf16.msra.mxu0 0
      %1447 = vmatprep.subr.bf16.mxu0 0
      %1448 = vmatpush1.bf16.msra.mxu0 0
      %1449 = vmatprep.subr.bf16.mxu0 0
      %1450 = vmatpush1.bf16.msra.mxu0 0
      %1451 = vmatprep.subr.bf16.mxu0 0
      %1452 = vmatpush1.bf16.msra.mxu0 0
      %1453 = vmatprep.subr.bf16.mxu0 0
      %1454 = vmatpush1.bf16.msra.mxu0 0
      %1455 = vmatprep.mubr.bf16.mxu0 0
      %1456 = vmatmul.mubr.bf16.gmra.mrb[0].mxu0 %v1315
      %v1457 = vpop.f32.mrb[0].mxu0
      %v1458 = vadd.f32 %v1240, %v1457
      %v1459 = vpop.f32.mrb[0].mxu0
      %v1460 = vadd.f32 %v1242, %v1459
      %v1461 = vpop.f32.mrb[0].mxu0
      %v1462 = vpop.f32.mrb[0].mxu0
      %1463 = vdwg.mxu0
      %1464 = vmatprep.subr.bf16.mxu0 %v1339
      %1465 = vmatpush1.bf16.msra.mxu0 %v1336
      %1466 = vmatprep.subr.bf16.mxu0 0
      %1467 = vmatpush1.bf16.msra.mxu0 0
      %1468 = vmatprep.subr.bf16.mxu0 0
      %1469 = vmatpush1.bf16.msra.mxu0 0
      %1470 = vmatprep.subr.bf16.mxu0 0
      %1471 = vmatpush1.bf16.msra.mxu0 0
      %1472 = vmatprep.subr.bf16.mxu0 0
      %1473 = vmatpush1.bf16.msra.mxu0 0
      %1474 = vmatprep.subr.bf16.mxu0 0
      %1475 = vmatpush1.bf16.msra.mxu0 0
      %1476 = vmatprep.subr.bf16.mxu0 0
      %1477 = vmatpush1.bf16.msra.mxu0 0
      %1478 = vmatprep.subr.bf16.mxu0 0
      %1479 = vmatpush1.bf16.msra.mxu0 0
      %1480 = vmatprep.subr.bf16.mxu0 0
      %1481 = vmatpush1.bf16.msra.mxu0 0
      %1482 = vmatprep.subr.bf16.mxu0 0
      %1483 = vmatpush1.bf16.msra.mxu0 0
      %1484 = vmatprep.subr.bf16.mxu0 0
      %1485 = vmatpush1.bf16.msra.mxu0 0
      %1486 = vmatprep.subr.bf16.mxu0 0
      %1487 = vmatpush1.bf16.msra.mxu0 0
      %1488 = vmatprep.subr.bf16.mxu0 0
      %1489 = vmatpush1.bf16.msra.mxu0 0
      %1490 = vmatprep.subr.bf16.mxu0 0
      %1491 = vmatpush1.bf16.msra.mxu0 0
      %1492 = vmatprep.subr.bf16.mxu0 0
      %1493 = vmatpush1.bf16.msra.mxu0 0
      %1494 = vmatprep.subr.bf16.mxu0 0
      %1495 = vmatpush1.bf16.msra.mxu0 0
      %1496 = vmatprep.mubr.bf16.mxu0 0
      %1497 = vmatmul.mubr.bf16.gmra.mrb[0].mxu0 %v1315
      %v1498 = vpop.f32.mrb[0].mxu0
      %v1499 = vadd.f32 %v1281, %v1498
      %v1500 = vpop.f32.mrb[0].mxu0
      %v1501 = vadd.f32 %v1283, %v1500
      %v1502 = vpop.f32.mrb[0].mxu0
      %v1503 = vpop.f32.mrb[0].mxu0
      %1504 = vdwg.mxu0
      %s1505 = scalar_lea.vmem %s1, 28
      %v1506 = vld [vmem:[%s1505] sm:$0xf]
      %1507 = vrot.lane.b32.xlu0 %v401, 63
      %v1508 = vpop.permute.xlu0 %1507
      %1509 = vrot.lane.b32.xlu0 %v402, 63
      %v1510 = vpop.permute.xlu0 %1509
      %1511 = vrot.lane.b32.xlu0 %v403, 63
      %v1512 = vpop.permute.xlu0 %1511
      %1513 = vrot.lane.b32.xlu0 %v404, 63
      %v1514 = vpop.permute.xlu0 %1513
      %1515 = vrot.lane.b32.xlu0 %v405, 63
      %v1516 = vpop.permute.xlu0 %1515
      %1517 = vrot.lane.b32.xlu0 %v406, 63
      %v1518 = vpop.permute.xlu0 %1517
      %1519 = vrot.lane.b32.xlu0 %v407, 63
      %v1520 = vpop.permute.xlu0 %1519
      %1521 = vrot.lane.b32.xlu0 %v408, 63
      %v1522 = vpop.permute.xlu0 %1521
      %1523 = vrot.lane.b32.xlu0 %v409, 63
      %v1524 = vpop.permute.xlu0 %1523
      %vm1525 = vcmask 515072
      %v1526 = vsel %vm1525, %v1508, %v1510
      %v1527 = vsel %vm1525, %v1510, %v1512
      %v1528 = vsel %vm1525, %v1512, %v1514
      %v1529 = vsel %vm1525, %v1514, %v1516
      %v1530 = vsel %vm1525, %v1516, %v1518
      %v1531 = vsel %vm1525, %v1518, %v1520
      %v1532 = vsel %vm1525, %v1520, %v1522
      %v1533 = vsel %vm1525, %v1522, %v1524
      %v1535 = vsel %vm437, %v1506, 0
      %v1538 = vsel %vm441, %v1526, 0
      %v1541 = vsel %vm441, %v1527, 0
      %v1544 = vsel %vm441, %v1528, 0
      %v1547 = vsel %vm441, %v1529, 0
      %v1550 = vsel %vm441, %v1530, 0
      %v1553 = vsel %vm441, %v1531, 0
      %v1556 = vsel %vm441, %v1532, 0
      %v1559 = vsel %vm441, %v1533, 0
      %1561 = vmatprep.subr.bf16.mxu0 %v1541
      %1562 = vmatpush1.bf16.msra.mxu0 %v1538
      %1563 = vmatprep.subr.bf16.mxu0 0
      %1564 = vmatpush1.bf16.msra.mxu0 0
      %1565 = vmatprep.subr.bf16.mxu0 0
      %1566 = vmatpush1.bf16.msra.mxu0 0
      %1567 = vmatprep.subr.bf16.mxu0 0
      %1568 = vmatpush1.bf16.msra.mxu0 0
      %1569 = vmatprep.subr.bf16.mxu0 0
      %1570 = vmatpush1.bf16.msra.mxu0 0
      %1571 = vmatprep.subr.bf16.mxu0 0
      %1572 = vmatpush1.bf16.msra.mxu0 0
      %1573 = vmatprep.subr.bf16.mxu0 0
      %1574 = vmatpush1.bf16.msra.mxu0 0
      %1575 = vmatprep.subr.bf16.mxu0 0
      %1576 = vmatpush1.bf16.msra.mxu0 0
      %1577 = vmatprep.subr.bf16.mxu0 0
      %1578 = vmatpush1.bf16.msra.mxu0 0
      %1579 = vmatprep.subr.bf16.mxu0 0
      %1580 = vmatpush1.bf16.msra.mxu0 0
      %1581 = vmatprep.subr.bf16.mxu0 0
      %1582 = vmatpush1.bf16.msra.mxu0 0
      %1583 = vmatprep.subr.bf16.mxu0 0
      %1584 = vmatpush1.bf16.msra.mxu0 0
      %1585 = vmatprep.subr.bf16.mxu0 0
      %1586 = vmatpush1.bf16.msra.mxu0 0
      %1587 = vmatprep.subr.bf16.mxu0 0
      %1588 = vmatpush1.bf16.msra.mxu0 0
      %1589 = vmatprep.subr.bf16.mxu0 0
      %1590 = vmatpush1.bf16.msra.mxu0 0
      %1591 = vmatprep.subr.bf16.mxu0 0
      %1592 = vmatpush1.bf16.msra.mxu0 0
      %1593 = vmatprep.mubr.bf16.mxu0 0
      %1594 = vmatmul.mubr.bf16.gmra.mrb[0].mxu0 %v1535
      %v1595 = vpop.f32.mrb[0].mxu0
      %v1596 = vadd.f32 0.0, %v1595
      %v1597 = vpop.f32.mrb[0].mxu0
      %v1598 = vadd.f32 0.0, %v1597
      %v1599 = vpop.f32.mrb[0].mxu0
      %v1600 = vpop.f32.mrb[0].mxu0
      %1601 = vdwg.mxu0
      %1602 = vmatprep.subr.bf16.mxu0 %v1547
      %1603 = vmatpush1.bf16.msra.mxu0 %v1544
      %1604 = vmatprep.subr.bf16.mxu0 0
      %1605 = vmatpush1.bf16.msra.mxu0 0
      %1606 = vmatprep.subr.bf16.mxu0 0
      %1607 = vmatpush1.bf16.msra.mxu0 0
      %1608 = vmatprep.subr.bf16.mxu0 0
      %1609 = vmatpush1.bf16.msra.mxu0 0
      %1610 = vmatprep.subr.bf16.mxu0 0
      %1611 = vmatpush1.bf16.msra.mxu0 0
      %1612 = vmatprep.subr.bf16.mxu0 0
      %1613 = vmatpush1.bf16.msra.mxu0 0
      %1614 = vmatprep.subr.bf16.mxu0 0
      %1615 = vmatpush1.bf16.msra.mxu0 0
      %1616 = vmatprep.subr.bf16.mxu0 0
      %1617 = vmatpush1.bf16.msra.mxu0 0
      %1618 = vmatprep.subr.bf16.mxu0 0
      %1619 = vmatpush1.bf16.msra.mxu0 0
      %1620 = vmatprep.subr.bf16.mxu0 0
      %1621 = vmatpush1.bf16.msra.mxu0 0
      %1622 = vmatprep.subr.bf16.mxu0 0
      %1623 = vmatpush1.bf16.msra.mxu0 0
      %1624 = vmatprep.subr.bf16.mxu0 0
      %1625 = vmatpush1.bf16.msra.mxu0 0
      %1626 = vmatprep.subr.bf16.mxu0 0
      %1627 = vmatpush1.bf16.msra.mxu0 0
      %1628 = vmatprep.subr.bf16.mxu0 0
      %1629 = vmatpush1.bf16.msra.mxu0 0
      %1630 = vmatprep.subr.bf16.mxu0 0
      %1631 = vmatpush1.bf16.msra.mxu0 0
      %1632 = vmatprep.subr.bf16.mxu0 0
      %1633 = vmatpush1.bf16.msra.mxu0 0
      %1634 = vmatprep.mubr.bf16.mxu0 0
      %1635 = vmatmul.mubr.bf16.gmra.mrb[0].mxu0 %v1535
      %v1636 = vpop.f32.mrb[0].mxu0
      %v1637 = vadd.f32 0.0, %v1636
      %v1638 = vpop.f32.mrb[0].mxu0
      %v1639 = vadd.f32 0.0, %v1638
      %v1640 = vpop.f32.mrb[0].mxu0
      %v1641 = vpop.f32.mrb[0].mxu0
      %1642 = vdwg.mxu0
      %1643 = vmatprep.subr.bf16.mxu0 %v1553
      %1644 = vmatpush1.bf16.msra.mxu0 %v1550
      %1645 = vmatprep.subr.bf16.mxu0 0
      %1646 = vmatpush1.bf16.msra.mxu0 0
      %1647 = vmatprep.subr.bf16.mxu0 0
      %1648 = vmatpush1.bf16.msra.mxu0 0
      %1649 = vmatprep.subr.bf16.mxu0 0
      %1650 = vmatpush1.bf16.msra.mxu0 0
      %1651 = vmatprep.subr.bf16.mxu0 0
      %1652 = vmatpush1.bf16.msra.mxu0 0
      %1653 = vmatprep.subr.bf16.mxu0 0
      %1654 = vmatpush1.bf16.msra.mxu0 0
      %1655 = vmatprep.subr.bf16.mxu0 0
      %1656 = vmatpush1.bf16.msra.mxu0 0
      %1657 = vmatprep.subr.bf16.mxu0 0
      %1658 = vmatpush1.bf16.msra.mxu0 0
      %1659 = vmatprep.subr.bf16.mxu0 0
      %1660 = vmatpush1.bf16.msra.mxu0 0
      %1661 = vmatprep.subr.bf16.mxu0 0
      %1662 = vmatpush1.bf16.msra.mxu0 0
      %1663 = vmatprep.subr.bf16.mxu0 0
      %1664 = vmatpush1.bf16.msra.mxu0 0
      %1665 = vmatprep.subr.bf16.mxu0 0
      %1666 = vmatpush1.bf16.msra.mxu0 0
      %1667 = vmatprep.subr.bf16.mxu0 0
      %1668 = vmatpush1.bf16.msra.mxu0 0
      %1669 = vmatprep.subr.bf16.mxu0 0
      %1670 = vmatpush1.bf16.msra.mxu0 0
      %1671 = vmatprep.subr.bf16.mxu0 0
      %1672 = vmatpush1.bf16.msra.mxu0 0
      %1673 = vmatprep.subr.bf16.mxu0 0
      %1674 = vmatpush1.bf16.msra.mxu0 0
      %1675 = vmatprep.mubr.bf16.mxu0 0
      %1676 = vmatmul.mubr.bf16.gmra.mrb[0].mxu0 %v1535
      %v1677 = vpop.f32.mrb[0].mxu0
      %v1678 = vadd.f32 0.0, %v1677
      %v1679 = vpop.f32.mrb[0].mxu0
      %v1680 = vadd.f32 0.0, %v1679
      %v1681 = vpop.f32.mrb[0].mxu0
      %v1682 = vpop.f32.mrb[0].mxu0
      %1683 = vdwg.mxu0
      %1684 = vmatprep.subr.bf16.mxu0 %v1559
      %1685 = vmatpush1.bf16.msra.mxu0 %v1556
      %1686 = vmatprep.subr.bf16.mxu0 0
      %1687 = vmatpush1.bf16.msra.mxu0 0
      %1688 = vmatprep.subr.bf16.mxu0 0
      %1689 = vmatpush1.bf16.msra.mxu0 0
      %1690 = vmatprep.subr.bf16.mxu0 0
      %1691 = vmatpush1.bf16.msra.mxu0 0
      %1692 = vmatprep.subr.bf16.mxu0 0
      %1693 = vmatpush1.bf16.msra.mxu0 0
      %1694 = vmatprep.subr.bf16.mxu0 0
      %1695 = vmatpush1.bf16.msra.mxu0 0
      %1696 = vmatprep.subr.bf16.mxu0 0
      %1697 = vmatpush1.bf16.msra.mxu0 0
      %1698 = vmatprep.subr.bf16.mxu0 0
      %1699 = vmatpush1.bf16.msra.mxu0 0
      %1700 = vmatprep.subr.bf16.mxu0 0
      %1701 = vmatpush1.bf16.msra.mxu0 0
      %1702 = vmatprep.subr.bf16.mxu0 0
      %1703 = vmatpush1.bf16.msra.mxu0 0
      %1704 = vmatprep.subr.bf16.mxu0 0
      %1705 = vmatpush1.bf16.msra.mxu0 0
      %1706 = vmatprep.subr.bf16.mxu0 0
      %1707 = vmatpush1.bf16.msra.mxu0 0
      %1708 = vmatprep.subr.bf16.mxu0 0
      %1709 = vmatpush1.bf16.msra.mxu0 0
      %1710 = vmatprep.subr.bf16.mxu0 0
      %1711 = vmatpush1.bf16.msra.mxu0 0
      %1712 = vmatprep.subr.bf16.mxu0 0
      %1713 = vmatpush1.bf16.msra.mxu0 0
      %1714 = vmatprep.subr.bf16.mxu0 0
      %1715 = vmatpush1.bf16.msra.mxu0 0
      %1716 = vmatprep.mubr.bf16.mxu0 0
      %1717 = vmatmul.mubr.bf16.gmra.mrb[0].mxu0 %v1535
      %v1718 = vpop.f32.mrb[0].mxu0
      %v1719 = vadd.f32 0.0, %v1718
      %v1720 = vpop.f32.mrb[0].mxu0
      %v1721 = vadd.f32 0.0, %v1720
      %v1722 = vpop.f32.mrb[0].mxu0
      %v1723 = vpop.f32.mrb[0].mxu0
      %1724 = vdwg.mxu0
      %v1725 = vadd.f32 %v1376, %v1596
      %v1726 = vadd.f32 %v1378, %v1598
      %v1727 = vadd.f32 %v1417, %v1637
      %v1728 = vadd.f32 %v1419, %v1639
      %v1729 = vadd.f32 %v1458, %v1678
      %v1730 = vadd.f32 %v1460, %v1680
      %v1731 = vadd.f32 %v1499, %v1719
      %v1732 = vadd.f32 %v1501, %v1721
      %v1733 = vadd.f32 %v1057, %v1725
      %v1734 = vadd.f32 %v1058, %v1726
      %v1735 = vadd.f32 %v1059, %v1727
      %v1736 = vadd.f32 %v1060, %v1728
      %v1737 = vadd.f32 %v1061, %v1729
      %v1738 = vadd.f32 %v1062, %v1730
      %v1739 = vadd.f32 %v1063, %v1731
      %v1740 = vadd.f32 %v1064, %v1732
      %s1741 = scalar_lea.vmem %s1, 8
      %v1742 = vld [vmem:[%s1741] sm:$0xf]
      %s1743 = scalar_lea.vmem %s1, 20
      %v1744 = vld [vmem:[%s1743] sm:$0xf]
      %1745 = vrot.lane.b32.xlu0 %v401, 94
      %v1746 = vpop.permute.xlu0 %1745
      %1747 = vrot.lane.b32.xlu0 %v402, 94
      %v1748 = vpop.permute.xlu0 %1747
      %1749 = vrot.lane.b32.xlu0 %v403, 94
      %v1750 = vpop.permute.xlu0 %1749
      %1751 = vrot.lane.b32.xlu0 %v404, 94
      %v1752 = vpop.permute.xlu0 %1751
      %1753 = vrot.lane.b32.xlu0 %v405, 94
      %v1754 = vpop.permute.xlu0 %1753
      %1755 = vrot.lane.b32.xlu0 %v406, 94
      %v1756 = vpop.permute.xlu0 %1755
      %1757 = vrot.lane.b32.xlu0 %v407, 94
      %v1758 = vpop.permute.xlu0 %1757
      %1759 = vrot.lane.b32.xlu0 %v408, 94
      %v1760 = vpop.permute.xlu0 %1759
      %1761 = vrot.lane.b32.xlu0 %v409, 94
      %v1762 = vpop.permute.xlu0 %1761
      %vm1763 = vcmask 769024
      %v1764 = vsel %vm1763, %v1746, %v1748
      %v1765 = vsel %vm1763, %v1748, %v1750
      %v1766 = vsel %vm1763, %v1750, %v1752
      %v1767 = vsel %vm1763, %v1752, %v1754
      %v1768 = vsel %vm1763, %v1754, %v1756
      %v1769 = vsel %vm1763, %v1756, %v1758
      %v1770 = vsel %vm1763, %v1758, %v1760
      %v1771 = vsel %vm1763, %v1760, %v1762
      %v1773 = vsel %vm437, %v1744, 0
      %v1776 = vsel %vm441, %v1764, 0
      %v1779 = vsel %vm441, %v1765, 0
      %v1782 = vsel %vm441, %v1766, 0
      %v1785 = vsel %vm441, %v1767, 0
      %v1788 = vsel %vm441, %v1768, 0
      %v1791 = vsel %vm441, %v1769, 0
      %v1794 = vsel %vm441, %v1770, 0
      %v1797 = vsel %vm441, %v1771, 0
      %1799 = vmatprep.subr.bf16.mxu0 %v1779
      %1800 = vmatpush1.bf16.msra.mxu0 %v1776
      %1801 = vmatprep.subr.bf16.mxu0 0
      %1802 = vmatpush1.bf16.msra.mxu0 0
      %1803 = vmatprep.subr.bf16.mxu0 0
      %1804 = vmatpush1.bf16.msra.mxu0 0
      %1805 = vmatprep.subr.bf16.mxu0 0
      %1806 = vmatpush1.bf16.msra.mxu0 0
      %1807 = vmatprep.subr.bf16.mxu0 0
      %1808 = vmatpush1.bf16.msra.mxu0 0
      %1809 = vmatprep.subr.bf16.mxu0 0
      %1810 = vmatpush1.bf16.msra.mxu0 0
      %1811 = vmatprep.subr.bf16.mxu0 0
      %1812 = vmatpush1.bf16.msra.mxu0 0
      %1813 = vmatprep.subr.bf16.mxu0 0
      %1814 = vmatpush1.bf16.msra.mxu0 0
      %1815 = vmatprep.subr.bf16.mxu0 0
      %1816 = vmatpush1.bf16.msra.mxu0 0
      %1817 = vmatprep.subr.bf16.mxu0 0
      %1818 = vmatpush1.bf16.msra.mxu0 0
      %1819 = vmatprep.subr.bf16.mxu0 0
      %1820 = vmatpush1.bf16.msra.mxu0 0
      %1821 = vmatprep.subr.bf16.mxu0 0
      %1822 = vmatpush1.bf16.msra.mxu0 0
      %1823 = vmatprep.subr.bf16.mxu0 0
      %1824 = vmatpush1.bf16.msra.mxu0 0
      %1825 = vmatprep.subr.bf16.mxu0 0
      %1826 = vmatpush1.bf16.msra.mxu0 0
      %1827 = vmatprep.subr.bf16.mxu0 0
      %1828 = vmatpush1.bf16.msra.mxu0 0
      %1829 = vmatprep.subr.bf16.mxu0 0
      %1830 = vmatpush1.bf16.msra.mxu0 0
      %1831 = vmatprep.mubr.bf16.mxu0 0
      %1832 = vmatmul.mubr.bf16.gmra.mrb[0].mxu0 %v1773
      %v1833 = vpop.f32.mrb[0].mxu0
      %v1834 = vadd.f32 0.0, %v1833
      %v1835 = vpop.f32.mrb[0].mxu0
      %v1836 = vadd.f32 0.0, %v1835
      %v1837 = vpop.f32.mrb[0].mxu0
      %v1838 = vpop.f32.mrb[0].mxu0
      %1839 = vdwg.mxu0
      %1840 = vmatprep.subr.bf16.mxu0 %v1785
      %1841 = vmatpush1.bf16.msra.mxu0 %v1782
      %1842 = vmatprep.subr.bf16.mxu0 0
      %1843 = vmatpush1.bf16.msra.mxu0 0
      %1844 = vmatprep.subr.bf16.mxu0 0
      %1845 = vmatpush1.bf16.msra.mxu0 0
      %1846 = vmatprep.subr.bf16.mxu0 0
      %1847 = vmatpush1.bf16.msra.mxu0 0
      %1848 = vmatprep.subr.bf16.mxu0 0
      %1849 = vmatpush1.bf16.msra.mxu0 0
      %1850 = vmatprep.subr.bf16.mxu0 0
      %1851 = vmatpush1.bf16.msra.mxu0 0
      %1852 = vmatprep.subr.bf16.mxu0 0
      %1853 = vmatpush1.bf16.msra.mxu0 0
      %1854 = vmatprep.subr.bf16.mxu0 0
      %1855 = vmatpush1.bf16.msra.mxu0 0
      %1856 = vmatprep.subr.bf16.mxu0 0
      %1857 = vmatpush1.bf16.msra.mxu0 0
      %1858 = vmatprep.subr.bf16.mxu0 0
      %1859 = vmatpush1.bf16.msra.mxu0 0
      %1860 = vmatprep.subr.bf16.mxu0 0
      %1861 = vmatpush1.bf16.msra.mxu0 0
      %1862 = vmatprep.subr.bf16.mxu0 0
      %1863 = vmatpush1.bf16.msra.mxu0 0
      %1864 = vmatprep.subr.bf16.mxu0 0
      %1865 = vmatpush1.bf16.msra.mxu0 0
      %1866 = vmatprep.subr.bf16.mxu0 0
      %1867 = vmatpush1.bf16.msra.mxu0 0
      %1868 = vmatprep.subr.bf16.mxu0 0
      %1869 = vmatpush1.bf16.msra.mxu0 0
      %1870 = vmatprep.subr.bf16.mxu0 0
      %1871 = vmatpush1.bf16.msra.mxu0 0
      %1872 = vmatprep.mubr.bf16.mxu0 0
      %1873 = vmatmul.mubr.bf16.gmra.mrb[0].mxu0 %v1773
      %v1874 = vpop.f32.mrb[0].mxu0
      %v1875 = vadd.f32 0.0, %v1874
      %v1876 = vpop.f32.mrb[0].mxu0
      %v1877 = vadd.f32 0.0, %v1876
      %v1878 = vpop.f32.mrb[0].mxu0
      %v1879 = vpop.f32.mrb[0].mxu0
      %1880 = vdwg.mxu0
      %1881 = vmatprep.subr.bf16.mxu0 %v1791
      %1882 = vmatpush1.bf16.msra.mxu0 %v1788
      %1883 = vmatprep.subr.bf16.mxu0 0
      %1884 = vmatpush1.bf16.msra.mxu0 0
      %1885 = vmatprep.subr.bf16.mxu0 0
      %1886 = vmatpush1.bf16.msra.mxu0 0
      %1887 = vmatprep.subr.bf16.mxu0 0
      %1888 = vmatpush1.bf16.msra.mxu0 0
      %1889 = vmatprep.subr.bf16.mxu0 0
      %1890 = vmatpush1.bf16.msra.mxu0 0
      %1891 = vmatprep.subr.bf16.mxu0 0
      %1892 = vmatpush1.bf16.msra.mxu0 0
      %1893 = vmatprep.subr.bf16.mxu0 0
      %1894 = vmatpush1.bf16.msra.mxu0 0
      %1895 = vmatprep.subr.bf16.mxu0 0
      %1896 = vmatpush1.bf16.msra.mxu0 0
      %1897 = vmatprep.subr.bf16.mxu0 0
      %1898 = vmatpush1.bf16.msra.mxu0 0
      %1899 = vmatprep.subr.bf16.mxu0 0
      %1900 = vmatpush1.bf16.msra.mxu0 0
      %1901 = vmatprep.subr.bf16.mxu0 0
      %1902 = vmatpush1.bf16.msra.mxu0 0
      %1903 = vmatprep.subr.bf16.mxu0 0
      %1904 = vmatpush1.bf16.msra.mxu0 0
      %1905 = vmatprep.subr.bf16.mxu0 0
      %1906 = vmatpush1.bf16.msra.mxu0 0
      %1907 = vmatprep.subr.bf16.mxu0 0
      %1908 = vmatpush1.bf16.msra.mxu0 0
      %1909 = vmatprep.subr.bf16.mxu0 0
      %1910 = vmatpush1.bf16.msra.mxu0 0
      %1911 = vmatprep.subr.bf16.mxu0 0
      %1912 = vmatpush1.bf16.msra.mxu0 0
      %1913 = vmatprep.mubr.bf16.mxu0 0
      %1914 = vmatmul.mubr.bf16.gmra.mrb[0].mxu0 %v1773
      %v1915 = vpop.f32.mrb[0].mxu0
      %v1916 = vadd.f32 0.0, %v1915
      %v1917 = vpop.f32.mrb[0].mxu0
      %v1918 = vadd.f32 0.0, %v1917
      %v1919 = vpop.f32.mrb[0].mxu0
      %v1920 = vpop.f32.mrb[0].mxu0
      %1921 = vdwg.mxu0
      %1922 = vmatprep.subr.bf16.mxu0 %v1797
      %1923 = vmatpush1.bf16.msra.mxu0 %v1794
      %1924 = vmatprep.subr.bf16.mxu0 0
      %1925 = vmatpush1.bf16.msra.mxu0 0
      %1926 = vmatprep.subr.bf16.mxu0 0
      %1927 = vmatpush1.bf16.msra.mxu0 0
      %1928 = vmatprep.subr.bf16.mxu0 0
      %1929 = vmatpush1.bf16.msra.mxu0 0
      %1930 = vmatprep.subr.bf16.mxu0 0
      %1931 = vmatpush1.bf16.msra.mxu0 0
      %1932 = vmatprep.subr.bf16.mxu0 0
      %1933 = vmatpush1.bf16.msra.mxu0 0
      %1934 = vmatprep.subr.bf16.mxu0 0
      %1935 = vmatpush1.bf16.msra.mxu0 0
      %1936 = vmatprep.subr.bf16.mxu0 0
      %1937 = vmatpush1.bf16.msra.mxu0 0
      %1938 = vmatprep.subr.bf16.mxu0 0
      %1939 = vmatpush1.bf16.msra.mxu0 0
      %1940 = vmatprep.subr.bf16.mxu0 0
      %1941 = vmatpush1.bf16.msra.mxu0 0
      %1942 = vmatprep.subr.bf16.mxu0 0
      %1943 = vmatpush1.bf16.msra.mxu0 0
      %1944 = vmatprep.subr.bf16.mxu0 0
      %1945 = vmatpush1.bf16.msra.mxu0 0
      %1946 = vmatprep.subr.bf16.mxu0 0
      %1947 = vmatpush1.bf16.msra.mxu0 0
      %1948 = vmatprep.subr.bf16.mxu0 0
      %1949 = vmatpush1.bf16.msra.mxu0 0
      %1950 = vmatprep.subr.bf16.mxu0 0
      %1951 = vmatpush1.bf16.msra.mxu0 0
      %1952 = vmatprep.subr.bf16.mxu0 0
      %1953 = vmatpush1.bf16.msra.mxu0 0
      %1954 = vmatprep.mubr.bf16.mxu0 0
      %1955 = vmatmul.mubr.bf16.gmra.mrb[0].mxu0 %v1773
      %v1956 = vpop.f32.mrb[0].mxu0
      %v1957 = vadd.f32 0.0, %v1956
      %v1958 = vpop.f32.mrb[0].mxu0
      %v1959 = vadd.f32 0.0, %v1958
      %v1960 = vpop.f32.mrb[0].mxu0
      %v1961 = vpop.f32.mrb[0].mxu0
      %1962 = vdwg.mxu0
      %1963 = vrot.lane.b32.xlu0 %v401, 126
      %v1964 = vpop.permute.xlu0 %1963
      %1965 = vrot.lane.b32.xlu0 %v402, 126
      %v1966 = vpop.permute.xlu0 %1965
      %1967 = vrot.lane.b32.xlu0 %v403, 126
      %v1968 = vpop.permute.xlu0 %1967
      %1969 = vrot.lane.b32.xlu0 %v404, 126
      %v1970 = vpop.permute.xlu0 %1969
      %1971 = vrot.lane.b32.xlu0 %v405, 126
      %v1972 = vpop.permute.xlu0 %1971
      %1973 = vrot.lane.b32.xlu0 %v406, 126
      %v1974 = vpop.permute.xlu0 %1973
      %1975 = vrot.lane.b32.xlu0 %v407, 126
      %v1976 = vpop.permute.xlu0 %1975
      %1977 = vrot.lane.b32.xlu0 %v408, 126
      %v1978 = vpop.permute.xlu0 %1977
      %1979 = vrot.lane.b32.xlu0 %v409, 126
      %v1980 = vpop.permute.xlu0 %1979
      %vm1981 = vcmask 1031168
      %v1982 = vsel %vm1981, %v1964, %v1966
      %v1983 = vsel %vm1981, %v1966, %v1968
      %v1984 = vsel %vm1981, %v1968, %v1970
      %v1985 = vsel %vm1981, %v1970, %v1972
      %v1986 = vsel %vm1981, %v1972, %v1974
      %v1987 = vsel %vm1981, %v1974, %v1976
      %v1988 = vsel %vm1981, %v1976, %v1978
      %v1989 = vsel %vm1981, %v1978, %v1980
      %v1991 = vsel %vm437, %v1742, 0
      %v1994 = vsel %vm441, %v1982, 0
      %v1997 = vsel %vm441, %v1983, 0
      %v2000 = vsel %vm441, %v1984, 0
      %v2003 = vsel %vm441, %v1985, 0
      %v2006 = vsel %vm441, %v1986, 0
      %v2009 = vsel %vm441, %v1987, 0
      %v2012 = vsel %vm441, %v1988, 0
      %v2015 = vsel %vm441, %v1989, 0
      %2017 = vmatprep.subr.bf16.mxu0 %v1997
      %2018 = vmatpush1.bf16.msra.mxu0 %v1994
      %2019 = vmatprep.subr.bf16.mxu0 0
      %2020 = vmatpush1.bf16.msra.mxu0 0
      %2021 = vmatprep.subr.bf16.mxu0 0
      %2022 = vmatpush1.bf16.msra.mxu0 0
      %2023 = vmatprep.subr.bf16.mxu0 0
      %2024 = vmatpush1.bf16.msra.mxu0 0
      %2025 = vmatprep.subr.bf16.mxu0 0
      %2026 = vmatpush1.bf16.msra.mxu0 0
      %2027 = vmatprep.subr.bf16.mxu0 0
      %2028 = vmatpush1.bf16.msra.mxu0 0
      %2029 = vmatprep.subr.bf16.mxu0 0
      %2030 = vmatpush1.bf16.msra.mxu0 0
      %2031 = vmatprep.subr.bf16.mxu0 0
      %2032 = vmatpush1.bf16.msra.mxu0 0
      %2033 = vmatprep.subr.bf16.mxu0 0
      %2034 = vmatpush1.bf16.msra.mxu0 0
      %2035 = vmatprep.subr.bf16.mxu0 0
      %2036 = vmatpush1.bf16.msra.mxu0 0
      %2037 = vmatprep.subr.bf16.mxu0 0
      %2038 = vmatpush1.bf16.msra.mxu0 0
      %2039 = vmatprep.subr.bf16.mxu0 0
      %2040 = vmatpush1.bf16.msra.mxu0 0
      %2041 = vmatprep.subr.bf16.mxu0 0
      %2042 = vmatpush1.bf16.msra.mxu0 0
      %2043 = vmatprep.subr.bf16.mxu0 0
      %2044 = vmatpush1.bf16.msra.mxu0 0
      %2045 = vmatprep.subr.bf16.mxu0 0
      %2046 = vmatpush1.bf16.msra.mxu0 0
      %2047 = vmatprep.subr.bf16.mxu0 0
      %2048 = vmatpush1.bf16.msra.mxu0 0
      %2049 = vmatprep.mubr.bf16.mxu0 0
      %2050 = vmatmul.mubr.bf16.gmra.mrb[0].mxu0 %v1991
      %v2051 = vpop.f32.mrb[0].mxu0
      %v2052 = vadd.f32 %v1834, %v2051
      %v2053 = vpop.f32.mrb[0].mxu0
      %v2054 = vadd.f32 %v1836, %v2053
      %v2055 = vpop.f32.mrb[0].mxu0
      %v2056 = vpop.f32.mrb[0].mxu0
      %2057 = vdwg.mxu0
      %2058 = vmatprep.subr.bf16.mxu0 %v2003
      %2059 = vmatpush1.bf16.msra.mxu0 %v2000
      %2060 = vmatprep.subr.bf16.mxu0 0
      %2061 = vmatpush1.bf16.msra.mxu0 0
      %2062 = vmatprep.subr.bf16.mxu0 0
      %2063 = vmatpush1.bf16.msra.mxu0 0
      %2064 = vmatprep.subr.bf16.mxu0 0
      %2065 = vmatpush1.bf16.msra.mxu0 0
      %2066 = vmatprep.subr.bf16.mxu0 0
      %2067 = vmatpush1.bf16.msra.mxu0 0
      %2068 = vmatprep.subr.bf16.mxu0 0
      %2069 = vmatpush1.bf16.msra.mxu0 0
      %2070 = vmatprep.subr.bf16.mxu0 0
      %2071 = vmatpush1.bf16.msra.mxu0 0
      %2072 = vmatprep.subr.bf16.mxu0 0
      %2073 = vmatpush1.bf16.msra.mxu0 0
      %2074 = vmatprep.subr.bf16.mxu0 0
      %2075 = vmatpush1.bf16.msra.mxu0 0
      %2076 = vmatprep.subr.bf16.mxu0 0
      %2077 = vmatpush1.bf16.msra.mxu0 0
      %2078 = vmatprep.subr.bf16.mxu0 0
      %2079 = vmatpush1.bf16.msra.mxu0 0
      %2080 = vmatprep.subr.bf16.mxu0 0
      %2081 = vmatpush1.bf16.msra.mxu0 0
      %2082 = vmatprep.subr.bf16.mxu0 0
      %2083 = vmatpush1.bf16.msra.mxu0 0
      %2084 = vmatprep.subr.bf16.mxu0 0
      %2085 = vmatpush1.bf16.msra.mxu0 0
      %2086 = vmatprep.subr.bf16.mxu0 0
      %2087 = vmatpush1.bf16.msra.mxu0 0
      %2088 = vmatprep.subr.bf16.mxu0 0
      %2089 = vmatpush1.bf16.msra.mxu0 0
      %2090 = vmatprep.mubr.bf16.mxu0 0
      %2091 = vmatmul.mubr.bf16.gmra.mrb[0].mxu0 %v1991
      %v2092 = vpop.f32.mrb[0].mxu0
      %v2093 = vadd.f32 %v1875, %v2092
      %v2094 = vpop.f32.mrb[0].mxu0
      %v2095 = vadd.f32 %v1877, %v2094
      %v2096 = vpop.f32.mrb[0].mxu0
      %v2097 = vpop.f32.mrb[0].mxu0
      %2098 = vdwg.mxu0
      %2099 = vmatprep.subr.bf16.mxu0 %v2009
      %2100 = vmatpush1.bf16.msra.mxu0 %v2006
      %2101 = vmatprep.subr.bf16.mxu0 0
      %2102 = vmatpush1.bf16.msra.mxu0 0
      %2103 = vmatprep.subr.bf16.mxu0 0
      %2104 = vmatpush1.bf16.msra.mxu0 0
      %2105 = vmatprep.subr.bf16.mxu0 0
      %2106 = vmatpush1.bf16.msra.mxu0 0
      %2107 = vmatprep.subr.bf16.mxu0 0
      %2108 = vmatpush1.bf16.msra.mxu0 0
      %2109 = vmatprep.subr.bf16.mxu0 0
      %2110 = vmatpush1.bf16.msra.mxu0 0
      %2111 = vmatprep.subr.bf16.mxu0 0
      %2112 = vmatpush1.bf16.msra.mxu0 0
      %2113 = vmatprep.subr.bf16.mxu0 0
      %2114 = vmatpush1.bf16.msra.mxu0 0
      %2115 = vmatprep.subr.bf16.mxu0 0
      %2116 = vmatpush1.bf16.msra.mxu0 0
      %2117 = vmatprep.subr.bf16.mxu0 0
      %2118 = vmatpush1.bf16.msra.mxu0 0
      %2119 = vmatprep.subr.bf16.mxu0 0
      %2120 = vmatpush1.bf16.msra.mxu0 0
      %2121 = vmatprep.subr.bf16.mxu0 0
      %2122 = vmatpush1.bf16.msra.mxu0 0
      %2123 = vmatprep.subr.bf16.mxu0 0
      %2124 = vmatpush1.bf16.msra.mxu0 0
      %2125 = vmatprep.subr.bf16.mxu0 0
      %2126 = vmatpush1.bf16.msra.mxu0 0
      %2127 = vmatprep.subr.bf16.mxu0 0
      %2128 = vmatpush1.bf16.msra.mxu0 0
      %2129 = vmatprep.subr.bf16.mxu0 0
      %2130 = vmatpush1.bf16.msra.mxu0 0
      %2131 = vmatprep.mubr.bf16.mxu0 0
      %2132 = vmatmul.mubr.bf16.gmra.mrb[0].mxu0 %v1991
      %v2133 = vpop.f32.mrb[0].mxu0
      %v2134 = vadd.f32 %v1916, %v2133
      %v2135 = vpop.f32.mrb[0].mxu0
      %v2136 = vadd.f32 %v1918, %v2135
      %v2137 = vpop.f32.mrb[0].mxu0
      %v2138 = vpop.f32.mrb[0].mxu0
      %2139 = vdwg.mxu0
      %2140 = vmatprep.subr.bf16.mxu0 %v2015
      %2141 = vmatpush1.bf16.msra.mxu0 %v2012
      %2142 = vmatprep.subr.bf16.mxu0 0
      %2143 = vmatpush1.bf16.msra.mxu0 0
      %2144 = vmatprep.subr.bf16.mxu0 0
      %2145 = vmatpush1.bf16.msra.mxu0 0
      %2146 = vmatprep.subr.bf16.mxu0 0
      %2147 = vmatpush1.bf16.msra.mxu0 0
      %2148 = vmatprep.subr.bf16.mxu0 0
      %2149 = vmatpush1.bf16.msra.mxu0 0
      %2150 = vmatprep.subr.bf16.mxu0 0
      %2151 = vmatpush1.bf16.msra.mxu0 0
      %2152 = vmatprep.subr.bf16.mxu0 0
      %2153 = vmatpush1.bf16.msra.mxu0 0
      %2154 = vmatprep.subr.bf16.mxu0 0
      %2155 = vmatpush1.bf16.msra.mxu0 0
      %2156 = vmatprep.subr.bf16.mxu0 0
      %2157 = vmatpush1.bf16.msra.mxu0 0
      %2158 = vmatprep.subr.bf16.mxu0 0
      %2159 = vmatpush1.bf16.msra.mxu0 0
      %2160 = vmatprep.subr.bf16.mxu0 0
      %2161 = vmatpush1.bf16.msra.mxu0 0
      %2162 = vmatprep.subr.bf16.mxu0 0
      %2163 = vmatpush1.bf16.msra.mxu0 0
      %2164 = vmatprep.subr.bf16.mxu0 0
      %2165 = vmatpush1.bf16.msra.mxu0 0
      %2166 = vmatprep.subr.bf16.mxu0 0
      %2167 = vmatpush1.bf16.msra.mxu0 0
      %2168 = vmatprep.subr.bf16.mxu0 0
      %2169 = vmatpush1.bf16.msra.mxu0 0
      %2170 = vmatprep.subr.bf16.mxu0 0
      %2171 = vmatpush1.bf16.msra.mxu0 0
      %2172 = vmatprep.mubr.bf16.mxu0 0
      %2173 = vmatmul.mubr.bf16.gmra.mrb[0].mxu0 %v1991
      %v2174 = vpop.f32.mrb[0].mxu0
      %v2175 = vadd.f32 %v1957, %v2174
      %v2176 = vpop.f32.mrb[0].mxu0
      %v2177 = vadd.f32 %v1959, %v2176
      %v2178 = vpop.f32.mrb[0].mxu0
      %v2179 = vpop.f32.mrb[0].mxu0
      %2180 = vdwg.mxu0
      %s2181 = scalar_lea.vmem %s1, 32
      %v2182 = vld [vmem:[%s2181] sm:$0xf]
      %2183 = vrot.lane.b32.xlu0 %v401, 62
      %v2184 = vpop.permute.xlu0 %2183
      %2185 = vrot.lane.b32.xlu0 %v402, 62
      %v2186 = vpop.permute.xlu0 %2185
      %2187 = vrot.lane.b32.xlu0 %v403, 62
      %v2188 = vpop.permute.xlu0 %2187
      %2189 = vrot.lane.b32.xlu0 %v404, 62
      %v2190 = vpop.permute.xlu0 %2189
      %2191 = vrot.lane.b32.xlu0 %v405, 62
      %v2192 = vpop.permute.xlu0 %2191
      %2193 = vrot.lane.b32.xlu0 %v406, 62
      %v2194 = vpop.permute.xlu0 %2193
      %2195 = vrot.lane.b32.xlu0 %v407, 62
      %v2196 = vpop.permute.xlu0 %2195
      %2197 = vrot.lane.b32.xlu0 %v408, 62
      %v2198 = vpop.permute.xlu0 %2197
      %2199 = vrot.lane.b32.xlu0 %v409, 62
      %v2200 = vpop.permute.xlu0 %2199
      %vm2201 = vcmask 506880
      %v2202 = vsel %vm2201, %v2184, %v2186
      %v2203 = vsel %vm2201, %v2186, %v2188
      %v2204 = vsel %vm2201, %v2188, %v2190
      %v2205 = vsel %vm2201, %v2190, %v2192
      %v2206 = vsel %vm2201, %v2192, %v2194
      %v2207 = vsel %vm2201, %v2194, %v2196
      %v2208 = vsel %vm2201, %v2196, %v2198
      %v2209 = vsel %vm2201, %v2198, %v2200
      %v2211 = vsel %vm437, %v2182, 0
      %v2214 = vsel %vm441, %v2202, 0
      %v2217 = vsel %vm441, %v2203, 0
      %v2220 = vsel %vm441, %v2204, 0
      %v2223 = vsel %vm441, %v2205, 0
      %v2226 = vsel %vm441, %v2206, 0
      %v2229 = vsel %vm441, %v2207, 0
      %v2232 = vsel %vm441, %v2208, 0
      %v2235 = vsel %vm441, %v2209, 0
      %2237 = vmatprep.subr.bf16.mxu0 %v2217
      %2238 = vmatpush1.bf16.msra.mxu0 %v2214
      %2239 = vmatprep.subr.bf16.mxu0 0
      %2240 = vmatpush1.bf16.msra.mxu0 0
      %2241 = vmatprep.subr.bf16.mxu0 0
      %2242 = vmatpush1.bf16.msra.mxu0 0
      %2243 = vmatprep.subr.bf16.mxu0 0
      %2244 = vmatpush1.bf16.msra.mxu0 0
      %2245 = vmatprep.subr.bf16.mxu0 0
      %2246 = vmatpush1.bf16.msra.mxu0 0
      %2247 = vmatprep.subr.bf16.mxu0 0
      %2248 = vmatpush1.bf16.msra.mxu0 0
      %2249 = vmatprep.subr.bf16.mxu0 0
      %2250 = vmatpush1.bf16.msra.mxu0 0
      %2251 = vmatprep.subr.bf16.mxu0 0
      %2252 = vmatpush1.bf16.msra.mxu0 0
      %2253 = vmatprep.subr.bf16.mxu0 0
      %2254 = vmatpush1.bf16.msra.mxu0 0
      %2255 = vmatprep.subr.bf16.mxu0 0
      %2256 = vmatpush1.bf16.msra.mxu0 0
      %2257 = vmatprep.subr.bf16.mxu0 0
      %2258 = vmatpush1.bf16.msra.mxu0 0
      %2259 = vmatprep.subr.bf16.mxu0 0
      %2260 = vmatpush1.bf16.msra.mxu0 0
      %2261 = vmatprep.subr.bf16.mxu0 0
      %2262 = vmatpush1.bf16.msra.mxu0 0
      %2263 = vmatprep.subr.bf16.mxu0 0
      %2264 = vmatpush1.bf16.msra.mxu0 0
      %2265 = vmatprep.subr.bf16.mxu0 0
      %2266 = vmatpush1.bf16.msra.mxu0 0
      %2267 = vmatprep.subr.bf16.mxu0 0
      %2268 = vmatpush1.bf16.msra.mxu0 0
      %2269 = vmatprep.mubr.bf16.mxu0 0
      %2270 = vmatmul.mubr.bf16.gmra.mrb[0].mxu0 %v2211
      %v2271 = vpop.f32.mrb[0].mxu0
      %v2272 = vadd.f32 0.0, %v2271
      %v2273 = vpop.f32.mrb[0].mxu0
      %v2274 = vadd.f32 0.0, %v2273
      %v2275 = vpop.f32.mrb[0].mxu0
      %v2276 = vpop.f32.mrb[0].mxu0
      %2277 = vdwg.mxu0
      %2278 = vmatprep.subr.bf16.mxu0 %v2223
      %2279 = vmatpush1.bf16.msra.mxu0 %v2220
      %2280 = vmatprep.subr.bf16.mxu0 0
      %2281 = vmatpush1.bf16.msra.mxu0 0
      %2282 = vmatprep.subr.bf16.mxu0 0
      %2283 = vmatpush1.bf16.msra.mxu0 0
      %2284 = vmatprep.subr.bf16.mxu0 0
      %2285 = vmatpush1.bf16.msra.mxu0 0
      %2286 = vmatprep.subr.bf16.mxu0 0
      %2287 = vmatpush1.bf16.msra.mxu0 0
      %2288 = vmatprep.subr.bf16.mxu0 0
      %2289 = vmatpush1.bf16.msra.mxu0 0
      %2290 = vmatprep.subr.bf16.mxu0 0
      %2291 = vmatpush1.bf16.msra.mxu0 0
      %2292 = vmatprep.subr.bf16.mxu0 0
      %2293 = vmatpush1.bf16.msra.mxu0 0
      %2294 = vmatprep.subr.bf16.mxu0 0
      %2295 = vmatpush1.bf16.msra.mxu0 0
      %2296 = vmatprep.subr.bf16.mxu0 0
      %2297 = vmatpush1.bf16.msra.mxu0 0
      %2298 = vmatprep.subr.bf16.mxu0 0
      %2299 = vmatpush1.bf16.msra.mxu0 0
      %2300 = vmatprep.subr.bf16.mxu0 0
      %2301 = vmatpush1.bf16.msra.mxu0 0
      %2302 = vmatprep.subr.bf16.mxu0 0
      %2303 = vmatpush1.bf16.msra.mxu0 0
      %2304 = vmatprep.subr.bf16.mxu0 0
      %2305 = vmatpush1.bf16.msra.mxu0 0
      %2306 = vmatprep.subr.bf16.mxu0 0
      %2307 = vmatpush1.bf16.msra.mxu0 0
      %2308 = vmatprep.subr.bf16.mxu0 0
      %2309 = vmatpush1.bf16.msra.mxu0 0
      %2310 = vmatprep.mubr.bf16.mxu0 0
      %2311 = vmatmul.mubr.bf16.gmra.mrb[0].mxu0 %v2211
      %v2312 = vpop.f32.mrb[0].mxu0
      %v2313 = vadd.f32 0.0, %v2312
      %v2314 = vpop.f32.mrb[0].mxu0
      %v2315 = vadd.f32 0.0, %v2314
      %v2316 = vpop.f32.mrb[0].mxu0
      %v2317 = vpop.f32.mrb[0].mxu0
      %2318 = vdwg.mxu0
      %2319 = vmatprep.subr.bf16.mxu0 %v2229
      %2320 = vmatpush1.bf16.msra.mxu0 %v2226
      %2321 = vmatprep.subr.bf16.mxu0 0
      %2322 = vmatpush1.bf16.msra.mxu0 0
      %2323 = vmatprep.subr.bf16.mxu0 0
      %2324 = vmatpush1.bf16.msra.mxu0 0
      %2325 = vmatprep.subr.bf16.mxu0 0
      %2326 = vmatpush1.bf16.msra.mxu0 0
      %2327 = vmatprep.subr.bf16.mxu0 0
      %2328 = vmatpush1.bf16.msra.mxu0 0
      %2329 = vmatprep.subr.bf16.mxu0 0
      %2330 = vmatpush1.bf16.msra.mxu0 0
      %2331 = vmatprep.subr.bf16.mxu0 0
      %2332 = vmatpush1.bf16.msra.mxu0 0
      %2333 = vmatprep.subr.bf16.mxu0 0
      %2334 = vmatpush1.bf16.msra.mxu0 0
      %2335 = vmatprep.subr.bf16.mxu0 0
      %2336 = vmatpush1.bf16.msra.mxu0 0
      %2337 = vmatprep.subr.bf16.mxu0 0
      %2338 = vmatpush1.bf16.msra.mxu0 0
      %2339 = vmatprep.subr.bf16.mxu0 0
      %2340 = vmatpush1.bf16.msra.mxu0 0
      %2341 = vmatprep.subr.bf16.mxu0 0
      %2342 = vmatpush1.bf16.msra.mxu0 0
      %2343 = vmatprep.subr.bf16.mxu0 0
      %2344 = vmatpush1.bf16.msra.mxu0 0
      %2345 = vmatprep.subr.bf16.mxu0 0
      %2346 = vmatpush1.bf16.msra.mxu0 0
      %2347 = vmatprep.subr.bf16.mxu0 0
      %2348 = vmatpush1.bf16.msra.mxu0 0
      %2349 = vmatprep.subr.bf16.mxu0 0
      %2350 = vmatpush1.bf16.msra.mxu0 0
      %2351 = vmatprep.mubr.bf16.mxu0 0
      %2352 = vmatmul.mubr.bf16.gmra.mrb[0].mxu0 %v2211
      %v2353 = vpop.f32.mrb[0].mxu0
      %v2354 = vadd.f32 0.0, %v2353
      %v2355 = vpop.f32.mrb[0].mxu0
      %v2356 = vadd.f32 0.0, %v2355
      %v2357 = vpop.f32.mrb[0].mxu0
      %v2358 = vpop.f32.mrb[0].mxu0
      %2359 = vdwg.mxu0
      %2360 = vmatprep.subr.bf16.mxu0 %v2235
      %2361 = vmatpush1.bf16.msra.mxu0 %v2232
      %2362 = vmatprep.subr.bf16.mxu0 0
      %2363 = vmatpush1.bf16.msra.mxu0 0
      %2364 = vmatprep.subr.bf16.mxu0 0
      %2365 = vmatpush1.bf16.msra.mxu0 0
      %2366 = vmatprep.subr.bf16.mxu0 0
      %2367 = vmatpush1.bf16.msra.mxu0 0
      %2368 = vmatprep.subr.bf16.mxu0 0
      %2369 = vmatpush1.bf16.msra.mxu0 0
      %2370 = vmatprep.subr.bf16.mxu0 0
      %2371 = vmatpush1.bf16.msra.mxu0 0
      %2372 = vmatprep.subr.bf16.mxu0 0
      %2373 = vmatpush1.bf16.msra.mxu0 0
      %2374 = vmatprep.subr.bf16.mxu0 0
      %2375 = vmatpush1.bf16.msra.mxu0 0
      %2376 = vmatprep.subr.bf16.mxu0 0
      %2377 = vmatpush1.bf16.msra.mxu0 0
      %2378 = vmatprep.subr.bf16.mxu0 0
      %2379 = vmatpush1.bf16.msra.mxu0 0
      %2380 = vmatprep.subr.bf16.mxu0 0
      %2381 = vmatpush1.bf16.msra.mxu0 0
      %2382 = vmatprep.subr.bf16.mxu0 0
      %2383 = vmatpush1.bf16.msra.mxu0 0
      %2384 = vmatprep.subr.bf16.mxu0 0
      %2385 = vmatpush1.bf16.msra.mxu0 0
      %2386 = vmatprep.subr.bf16.mxu0 0
      %2387 = vmatpush1.bf16.msra.mxu0 0
      %2388 = vmatprep.subr.bf16.mxu0 0
      %2389 = vmatpush1.bf16.msra.mxu0 0
      %2390 = vmatprep.subr.bf16.mxu0 0
      %2391 = vmatpush1.bf16.msra.mxu0 0
      %2392 = vmatprep.mubr.bf16.mxu0 0
      %2393 = vmatmul.mubr.bf16.gmra.mrb[0].mxu0 %v2211
      %v2394 = vpop.f32.mrb[0].mxu0
      %v2395 = vadd.f32 0.0, %v2394
      %v2396 = vpop.f32.mrb[0].mxu0
      %v2397 = vadd.f32 0.0, %v2396
      %v2398 = vpop.f32.mrb[0].mxu0
      %v2399 = vpop.f32.mrb[0].mxu0
      %2400 = vdwg.mxu0
      %v2401 = vadd.f32 %v2052, %v2272
      %v2402 = vadd.f32 %v2054, %v2274
      %v2403 = vadd.f32 %v2093, %v2313
      %v2404 = vadd.f32 %v2095, %v2315
      %v2405 = vadd.f32 %v2134, %v2354
      %v2406 = vadd.f32 %v2136, %v2356
      %v2407 = vadd.f32 %v2175, %v2395
      %v2408 = vadd.f32 %v2177, %v2397
      %v2409 = vmul.f32 %v2401, %v371
      %v2410 = vmul.f32 %v2402, %v372
      %v2411 = vmul.f32 %v2403, %v373
      %v2412 = vmul.f32 %v2404, %v374
      %v2413 = vmul.f32 %v2405, %v375
      %v2414 = vmul.f32 %v2406, %v376
      %v2415 = vmul.f32 %v2407, %v377
      %v2416 = vmul.f32 %v2408, %v378
      %v2417 = vadd.f32 %v1733, %v2409
      %v2418 = vadd.f32 %v1734, %v2410
      %v2419 = vadd.f32 %v1735, %v2411
      %v2420 = vadd.f32 %v1736, %v2412
      %v2421 = vadd.f32 %v1737, %v2413
      %v2422 = vadd.f32 %v1738, %v2414
      %v2423 = vadd.f32 %v1739, %v2415
      %v2424 = vadd.f32 %v1740, %v2416
      %v2425 = vld [vmem:[%s2] sm:$0xff]
      %2427 = vset.pattern.permute.xlu0 0
      %2428 = vperm.xlu0 %2427, %v2425
      %v2429 = vpop.permute.xlu0 %2428
      %v2431 = vadd.f32 %v2417, %v2429
      %v2432 = vadd.f32 %v2418, %v2429
      %v2433 = vadd.f32 %v2419, %v2429
      %v2434 = vadd.f32 %v2420, %v2429
      %v2435 = vadd.f32 %v2421, %v2429
      %v2436 = vadd.f32 %v2422, %v2429
      %v2437 = vadd.f32 %v2423, %v2429
      %v2438 = vadd.f32 %v2424, %v2429
      %v2439 = vmax.f32 %v2431, 0.0
      %v2440 = vmax.f32 %v2432, 0.0
      %v2441 = vmax.f32 %v2433, 0.0
      %v2442 = vmax.f32 %v2434, 0.0
      %v2443 = vmax.f32 %v2435, 0.0
      %v2444 = vmax.f32 %v2436, 0.0
      %v2445 = vmax.f32 %v2437, 0.0
      %v2446 = vmax.f32 %v2438, 0.0
      %vm2447 = vcmask 265216
      %2448 = vst.msk [vmem:[#allocation2] sm:$0xf] %vm2447, 0
      %vm2449 = vcmask 535816
      %2450 = vst.msk [vmem:[#allocation2 + $0x20] sm:$0xf] %vm2449, 0
      %v2451 = vpack.c.bf16 %v2439, %v2439
      %v2452 = vpack.c.bf16 %v2440, %v2440
      %v2453 = vpack.c.bf16 %v2441, %v2441
      %v2454 = vpack.c.bf16 %v2442, %v2442
      %v2455 = vpack.c.bf16 %v2443, %v2443
      %v2456 = vpack.c.bf16 %v2444, %v2444
      %v2457 = vpack.c.bf16 %v2445, %v2445
      %v2458 = vpack.c.bf16 %v2446, %v2446
      %v2467 = vunpack.c.l.b16 %v2451
      %v2468 = vunpack.c.l.b16 %v2452
      %v2469 = vunpack.c.l.b16 %v2453
      %v2470 = vunpack.c.l.b16 %v2454
      %v2471 = vunpack.c.l.b16 %v2455
      %v2472 = vunpack.c.l.b16 %v2456
      %v2473 = vunpack.c.l.b16 %v2457
      %v2474 = vunpack.c.l.b16 %v2458
      %v2475 = vpack.c.b16 %v2468, %v2467
      %v2476 = vpack.c.b16 %v2470, %v2469
      %v2477 = vpack.c.b16 %v2472, %v2471
      %v2478 = vpack.c.b16 %v2474, %v2473
      %2479 = vrot.lane.b32.xlu0 %v2475, 33
      %v2480 = vpop.permute.xlu0 %2479
      %2481 = vrot.lane.b32.xlu0 %v2476, 33
      %v2482 = vpop.permute.xlu0 %2481
      %2483 = vrot.lane.b32.xlu0 %v2477, 33
      %v2484 = vpop.permute.xlu0 %2483
      %2485 = vrot.lane.b32.xlu0 %v2478, 33
      %v2486 = vpop.permute.xlu0 %2485
      %v2487 = vrot.slane %v2480, 4
      %v2488 = vrot.slane %v2482, 4
      %v2489 = vrot.slane %v2484, 4
      %v2490 = vrot.slane %v2486, 4
      %vm2491 = vcmask 269312
      %v2492 = vsel %vm2491, %v2487, %v2480
      %vm2493 = vcmask 1043456
      %v2494 = vsel %vm2493, %v2487, %v2488
      %v2495 = vsel %vm2491, %v2494, %v2482
      %v2496 = vsel %vm2493, %v2488, %v2489
      %v2497 = vsel %vm2491, %v2496, %v2484
      %v2498 = vsel %vm2493, %v2489, %v2490
      %v2499 = vsel %vm2491, %v2498, %v2486
      %vm2505 = vcmask 1043720
      %vm2506 = vcmask 1047556
      %vm2507 = vmor %vm2506, %vm2505
      %2508 = vst.msk [vmem:[#allocation2] sm:$0xff] %vm2507, %v2492
      %2509 = vst [vmem:[#allocation2 + $0x8] sm:$0xff] %v2495
      %2510 = vst [vmem:[#allocation2 + $0x10] sm:$0xff] %v2497
      %2511 = vst [vmem:[#allocation2 + $0x18] sm:$0xff] %v2499
      %2512 = vst.msk [vmem:[#allocation2 + $0x20] sm:$0xf] %vm2447, %v2490
      %v2513 = vld [vmem:[#allocation2] sm:$0xff]
      %v2514 = vld [vmem:[#allocation2 + $0x8] sm:$0xff]
      %v2515 = vld [vmem:[#allocation2 + $0x10] sm:$0xff]
      %v2516 = vld [vmem:[#allocation2 + $0x18] sm:$0xff]
      %v2517 = vld [vmem:[%s3] sm:$0xf]
      %v2518 = vld [vmem:[#allocation2 + $0x20] sm:$0xf]
      %s2519 = scalar_lea.vmem %s3, 12
      %v2520 = vld [vmem:[%s2519] sm:$0xf]
      %v2526 = vunpack.c.l.b16 %v2513
      %v2527 = vunpack.c.h.b16 %v2513
      %v2528 = vunpack.c.l.b16 %v2514
      %v2529 = vunpack.c.h.b16 %v2514
      %v2530 = vunpack.c.l.b16 %v2515
      %v2531 = vunpack.c.h.b16 %v2515
      %v2532 = vunpack.c.l.b16 %v2516
      %v2533 = vunpack.c.h.b16 %v2516
      %v2534 = vunpack.c.l.b16 %v2518
      %v2535 = vpack.c.b16 %v2526, %v2526
      %v2536 = vpack.c.b16 %v2527, %v2527
      %v2537 = vpack.c.b16 %v2528, %v2528
      %v2538 = vpack.c.b16 %v2529, %v2529
      %v2539 = vpack.c.b16 %v2530, %v2530
      %v2540 = vpack.c.b16 %v2531, %v2531
      %v2541 = vpack.c.b16 %v2532, %v2532
      %v2542 = vpack.c.b16 %v2533, %v2533
      %v2543 = vpack.c.b16 %v2534, %v2534
      %2544 = vrot.lane.b32.xlu0 %v2535, 96
      %v2545 = vpop.permute.xlu0 %2544
      %2546 = vrot.lane.b32.xlu0 %v2536, 96
      %v2547 = vpop.permute.xlu0 %2546
      %2548 = vrot.lane.b32.xlu0 %v2537, 96
      %v2549 = vpop.permute.xlu0 %2548
      %2550 = vrot.lane.b32.xlu0 %v2538, 96
      %v2551 = vpop.permute.xlu0 %2550
      %2552 = vrot.lane.b32.xlu0 %v2539, 96
      %v2553 = vpop.permute.xlu0 %2552
      %2554 = vrot.lane.b32.xlu0 %v2540, 96
      %v2555 = vpop.permute.xlu0 %2554
      %2556 = vrot.lane.b32.xlu0 %v2541, 96
      %v2557 = vpop.permute.xlu0 %2556
      %2558 = vrot.lane.b32.xlu0 %v2542, 96
      %v2559 = vpop.permute.xlu0 %2558
      %2560 = vrot.lane.b32.xlu0 %v2543, 96
      %v2561 = vpop.permute.xlu0 %2560
      %v2562 = vsel %vm428, %v2545, %v2547
      %v2563 = vsel %vm428, %v2547, %v2549
      %v2564 = vsel %vm428, %v2549, %v2551
      %v2565 = vsel %vm428, %v2551, %v2553
      %v2566 = vsel %vm428, %v2553, %v2555
      %v2567 = vsel %vm428, %v2555, %v2557
      %v2568 = vsel %vm428, %v2557, %v2559
      %v2569 = vsel %vm428, %v2559, %v2561
      %v2571 = vsel %vm437, %v2520, 0
      %v2574 = vsel %vm441, %v2562, 0
      %v2577 = vsel %vm441, %v2563, 0
      %v2580 = vsel %vm441, %v2564, 0
      %v2583 = vsel %vm441, %v2565, 0
      %v2586 = vsel %vm441, %v2566, 0
      %v2589 = vsel %vm441, %v2567, 0
      %v2592 = vsel %vm441, %v2568, 0
      %v2595 = vsel %vm441, %v2569, 0
      %2597 = vmatprep.subr.bf16.mxu0 %v2577
      %2598 = vmatpush1.bf16.msra.mxu0 %v2574
      %2599 = vmatprep.subr.bf16.mxu0 0
      %2600 = vmatpush1.bf16.msra.mxu0 0
      %2601 = vmatprep.subr.bf16.mxu0 0
      %2602 = vmatpush1.bf16.msra.mxu0 0
      %2603 = vmatprep.subr.bf16.mxu0 0
      %2604 = vmatpush1.bf16.msra.mxu0 0
      %2605 = vmatprep.subr.bf16.mxu0 0
      %2606 = vmatpush1.bf16.msra.mxu0 0
      %2607 = vmatprep.subr.bf16.mxu0 0
      %2608 = vmatpush1.bf16.msra.mxu0 0
      %2609 = vmatprep.subr.bf16.mxu0 0
      %2610 = vmatpush1.bf16.msra.mxu0 0
      %2611 = vmatprep.subr.bf16.mxu0 0
      %2612 = vmatpush1.bf16.msra.mxu0 0
      %2613 = vmatprep.subr.bf16.mxu0 0
      %2614 = vmatpush1.bf16.msra.mxu0 0
      %2615 = vmatprep.subr.bf16.mxu0 0
      %2616 = vmatpush1.bf16.msra.mxu0 0
      %2617 = vmatprep.subr.bf16.mxu0 0
      %2618 = vmatpush1.bf16.msra.mxu0 0
      %2619 = vmatprep.subr.bf16.mxu0 0
      %2620 = vmatpush1.bf16.msra.mxu0 0
      %2621 = vmatprep.subr.bf16.mxu0 0
      %2622 = vmatpush1.bf16.msra.mxu0 0
      %2623 = vmatprep.subr.bf16.mxu0 0
      %2624 = vmatpush1.bf16.msra.mxu0 0
      %2625 = vmatprep.subr.bf16.mxu0 0
      %2626 = vmatpush1.bf16.msra.mxu0 0
      %2627 = vmatprep.subr.bf16.mxu0 0
      %2628 = vmatpush1.bf16.msra.mxu0 0
      %2629 = vmatprep.mubr.bf16.mxu0 0
      %2630 = vmatmul.mubr.bf16.gmra.mrb[0].mxu0 %v2571
      %v2631 = vpop.f32.mrb[0].mxu0
      %v2632 = vadd.f32 0.0, %v2631
      %v2633 = vpop.f32.mrb[0].mxu0
      %v2634 = vadd.f32 0.0, %v2633
      %v2635 = vpop.f32.mrb[0].mxu0
      %v2636 = vpop.f32.mrb[0].mxu0
      %2637 = vdwg.mxu0
      %2638 = vmatprep.subr.bf16.mxu0 %v2583
      %2639 = vmatpush1.bf16.msra.mxu0 %v2580
      %2640 = vmatprep.subr.bf16.mxu0 0
      %2641 = vmatpush1.bf16.msra.mxu0 0
      %2642 = vmatprep.subr.bf16.mxu0 0
      %2643 = vmatpush1.bf16.msra.mxu0 0
      %2644 = vmatprep.subr.bf16.mxu0 0
      %2645 = vmatpush1.bf16.msra.mxu0 0
      %2646 = vmatprep.subr.bf16.mxu0 0
      %2647 = vmatpush1.bf16.msra.mxu0 0
      %2648 = vmatprep.subr.bf16.mxu0 0
      %2649 = vmatpush1.bf16.msra.mxu0 0
      %2650 = vmatprep.subr.bf16.mxu0 0
      %2651 = vmatpush1.bf16.msra.mxu0 0
      %2652 = vmatprep.subr.bf16.mxu0 0
      %2653 = vmatpush1.bf16.msra.mxu0 0
      %2654 = vmatprep.subr.bf16.mxu0 0
      %2655 = vmatpush1.bf16.msra.mxu0 0
      %2656 = vmatprep.subr.bf16.mxu0 0
      %2657 = vmatpush1.bf16.msra.mxu0 0
      %2658 = vmatprep.subr.bf16.mxu0 0
      %2659 = vmatpush1.bf16.msra.mxu0 0
      %2660 = vmatprep.subr.bf16.mxu0 0
      %2661 = vmatpush1.bf16.msra.mxu0 0
      %2662 = vmatprep.subr.bf16.mxu0 0
      %2663 = vmatpush1.bf16.msra.mxu0 0
      %2664 = vmatprep.subr.bf16.mxu0 0
      %2665 = vmatpush1.bf16.msra.mxu0 0
      %2666 = vmatprep.subr.bf16.mxu0 0
      %2667 = vmatpush1.bf16.msra.mxu0 0
      %2668 = vmatprep.subr.bf16.mxu0 0
      %2669 = vmatpush1.bf16.msra.mxu0 0
      %2670 = vmatprep.mubr.bf16.mxu0 0
      %2671 = vmatmul.mubr.bf16.gmra.mrb[0].mxu0 %v2571
      %v2672 = vpop.f32.mrb[0].mxu0
      %v2673 = vadd.f32 0.0, %v2672
      %v2674 = vpop.f32.mrb[0].mxu0
      %v2675 = vadd.f32 0.0, %v2674
      %v2676 = vpop.f32.mrb[0].mxu0
      %v2677 = vpop.f32.mrb[0].mxu0
      %2678 = vdwg.mxu0
      %2679 = vmatprep.subr.bf16.mxu0 %v2589
      %2680 = vmatpush1.bf16.msra.mxu0 %v2586
      %2681 = vmatprep.subr.bf16.mxu0 0
      %2682 = vmatpush1.bf16.msra.mxu0 0
      %2683 = vmatprep.subr.bf16.mxu0 0
      %2684 = vmatpush1.bf16.msra.mxu0 0
      %2685 = vmatprep.subr.bf16.mxu0 0
      %2686 = vmatpush1.bf16.msra.mxu0 0
      %2687 = vmatprep.subr.bf16.mxu0 0
      %2688 = vmatpush1.bf16.msra.mxu0 0
      %2689 = vmatprep.subr.bf16.mxu0 0
      %2690 = vmatpush1.bf16.msra.mxu0 0
      %2691 = vmatprep.subr.bf16.mxu0 0
      %2692 = vmatpush1.bf16.msra.mxu0 0
      %2693 = vmatprep.subr.bf16.mxu0 0
      %2694 = vmatpush1.bf16.msra.mxu0 0
      %2695 = vmatprep.subr.bf16.mxu0 0
      %2696 = vmatpush1.bf16.msra.mxu0 0
      %2697 = vmatprep.subr.bf16.mxu0 0
      %2698 = vmatpush1.bf16.msra.mxu0 0
      %2699 = vmatprep.subr.bf16.mxu0 0
      %2700 = vmatpush1.bf16.msra.mxu0 0
      %2701 = vmatprep.subr.bf16.mxu0 0
      %2702 = vmatpush1.bf16.msra.mxu0 0
      %2703 = vmatprep.subr.bf16.mxu0 0
      %2704 = vmatpush1.bf16.msra.mxu0 0
      %2705 = vmatprep.subr.bf16.mxu0 0
      %2706 = vmatpush1.bf16.msra.mxu0 0
      %2707 = vmatprep.subr.bf16.mxu0 0
      %2708 = vmatpush1.bf16.msra.mxu0 0
      %2709 = vmatprep.subr.bf16.mxu0 0
      %2710 = vmatpush1.bf16.msra.mxu0 0
      %2711 = vmatprep.mubr.bf16.mxu0 0
      %2712 = vmatmul.mubr.bf16.gmra.mrb[0].mxu0 %v2571
      %v2713 = vpop.f32.mrb[0].mxu0
      %v2714 = vadd.f32 0.0, %v2713
      %v2715 = vpop.f32.mrb[0].mxu0
      %v2716 = vadd.f32 0.0, %v2715
      %v2717 = vpop.f32.mrb[0].mxu0
      %v2718 = vpop.f32.mrb[0].mxu0
      %2719 = vdwg.mxu0
      %2720 = vmatprep.subr.bf16.mxu0 %v2595
      %2721 = vmatpush1.bf16.msra.mxu0 %v2592
      %2722 = vmatprep.subr.bf16.mxu0 0
      %2723 = vmatpush1.bf16.msra.mxu0 0
      %2724 = vmatprep.subr.bf16.mxu0 0
      %2725 = vmatpush1.bf16.msra.mxu0 0
      %2726 = vmatprep.subr.bf16.mxu0 0
      %2727 = vmatpush1.bf16.msra.mxu0 0
      %2728 = vmatprep.subr.bf16.mxu0 0
      %2729 = vmatpush1.bf16.msra.mxu0 0
      %2730 = vmatprep.subr.bf16.mxu0 0
      %2731 = vmatpush1.bf16.msra.mxu0 0
      %2732 = vmatprep.subr.bf16.mxu0 0
      %2733 = vmatpush1.bf16.msra.mxu0 0
      %2734 = vmatprep.subr.bf16.mxu0 0
      %2735 = vmatpush1.bf16.msra.mxu0 0
      %2736 = vmatprep.subr.bf16.mxu0 0
      %2737 = vmatpush1.bf16.msra.mxu0 0
      %2738 = vmatprep.subr.bf16.mxu0 0
      %2739 = vmatpush1.bf16.msra.mxu0 0
      %2740 = vmatprep.subr.bf16.mxu0 0
      %2741 = vmatpush1.bf16.msra.mxu0 0
      %2742 = vmatprep.subr.bf16.mxu0 0
      %2743 = vmatpush1.bf16.msra.mxu0 0
      %2744 = vmatprep.subr.bf16.mxu0 0
      %2745 = vmatpush1.bf16.msra.mxu0 0
      %2746 = vmatprep.subr.bf16.mxu0 0
      %2747 = vmatpush1.bf16.msra.mxu0 0
      %2748 = vmatprep.subr.bf16.mxu0 0
      %2749 = vmatpush1.bf16.msra.mxu0 0
      %2750 = vmatprep.subr.bf16.mxu0 0
      %2751 = vmatpush1.bf16.msra.mxu0 0
      %2752 = vmatprep.mubr.bf16.mxu0 0
      %2753 = vmatmul.mubr.bf16.gmra.mrb[0].mxu0 %v2571
      %v2754 = vpop.f32.mrb[0].mxu0
      %v2755 = vadd.f32 0.0, %v2754
      %v2756 = vpop.f32.mrb[0].mxu0
      %v2757 = vadd.f32 0.0, %v2756
      %v2758 = vpop.f32.mrb[0].mxu0
      %v2759 = vpop.f32.mrb[0].mxu0
      %2760 = vdwg.mxu0
      %v2762 = vsel %vm437, %v2517, 0
      %v2765 = vsel %vm441, %v2535, 0
      %v2768 = vsel %vm441, %v2536, 0
      %v2771 = vsel %vm441, %v2537, 0
      %v2774 = vsel %vm441, %v2538, 0
      %v2777 = vsel %vm441, %v2539, 0
      %v2780 = vsel %vm441, %v2540, 0
      %v2783 = vsel %vm441, %v2541, 0
      %v2786 = vsel %vm441, %v2542, 0
      %2788 = vmatprep.subr.bf16.mxu0 %v2768
      %2789 = vmatpush1.bf16.msra.mxu0 %v2765
      %2790 = vmatprep.subr.bf16.mxu0 0
      %2791 = vmatpush1.bf16.msra.mxu0 0
      %2792 = vmatprep.subr.bf16.mxu0 0
      %2793 = vmatpush1.bf16.msra.mxu0 0
      %2794 = vmatprep.subr.bf16.mxu0 0
      %2795 = vmatpush1.bf16.msra.mxu0 0
      %2796 = vmatprep.subr.bf16.mxu0 0
      %2797 = vmatpush1.bf16.msra.mxu0 0
      %2798 = vmatprep.subr.bf16.mxu0 0
      %2799 = vmatpush1.bf16.msra.mxu0 0
      %2800 = vmatprep.subr.bf16.mxu0 0
      %2801 = vmatpush1.bf16.msra.mxu0 0
      %2802 = vmatprep.subr.bf16.mxu0 0
      %2803 = vmatpush1.bf16.msra.mxu0 0
      %2804 = vmatprep.subr.bf16.mxu0 0
      %2805 = vmatpush1.bf16.msra.mxu0 0
      %2806 = vmatprep.subr.bf16.mxu0 0
      %2807 = vmatpush1.bf16.msra.mxu0 0
      %2808 = vmatprep.subr.bf16.mxu0 0
      %2809 = vmatpush1.bf16.msra.mxu0 0
      %2810 = vmatprep.subr.bf16.mxu0 0
      %2811 = vmatpush1.bf16.msra.mxu0 0
      %2812 = vmatprep.subr.bf16.mxu0 0
      %2813 = vmatpush1.bf16.msra.mxu0 0
      %2814 = vmatprep.subr.bf16.mxu0 0
      %2815 = vmatpush1.bf16.msra.mxu0 0
      %2816 = vmatprep.subr.bf16.mxu0 0
      %2817 = vmatpush1.bf16.msra.mxu0 0
      %2818 = vmatprep.subr.bf16.mxu0 0
      %2819 = vmatpush1.bf16.msra.mxu0 0
      %2820 = vmatprep.mubr.bf16.mxu0 0
      %2821 = vmatmul.mubr.bf16.gmra.mrb[0].mxu0 %v2762
      %v2822 = vpop.f32.mrb[0].mxu0
      %v2823 = vadd.f32 %v2632, %v2822
      %v2824 = vpop.f32.mrb[0].mxu0
      %v2825 = vadd.f32 %v2634, %v2824
      %v2826 = vpop.f32.mrb[0].mxu0
      %v2827 = vpop.f32.mrb[0].mxu0
      %2828 = vdwg.mxu0
      %2829 = vmatprep.subr.bf16.mxu0 %v2774
      %2830 = vmatpush1.bf16.msra.mxu0 %v2771
      %2831 = vmatprep.subr.bf16.mxu0 0
      %2832 = vmatpush1.bf16.msra.mxu0 0
      %2833 = vmatprep.subr.bf16.mxu0 0
      %2834 = vmatpush1.bf16.msra.mxu0 0
      %2835 = vmatprep.subr.bf16.mxu0 0
      %2836 = vmatpush1.bf16.msra.mxu0 0
      %2837 = vmatprep.subr.bf16.mxu0 0
      %2838 = vmatpush1.bf16.msra.mxu0 0
      %2839 = vmatprep.subr.bf16.mxu0 0
      %2840 = vmatpush1.bf16.msra.mxu0 0
      %2841 = vmatprep.subr.bf16.mxu0 0
      %2842 = vmatpush1.bf16.msra.mxu0 0
      %2843 = vmatprep.subr.bf16.mxu0 0
      %2844 = vmatpush1.bf16.msra.mxu0 0
      %2845 = vmatprep.subr.bf16.mxu0 0
      %2846 = vmatpush1.bf16.msra.mxu0 0
      %2847 = vmatprep.subr.bf16.mxu0 0
      %2848 = vmatpush1.bf16.msra.mxu0 0
      %2849 = vmatprep.subr.bf16.mxu0 0
      %2850 = vmatpush1.bf16.msra.mxu0 0
      %2851 = vmatprep.subr.bf16.mxu0 0
      %2852 = vmatpush1.bf16.msra.mxu0 0
      %2853 = vmatprep.subr.bf16.mxu0 0
      %2854 = vmatpush1.bf16.msra.mxu0 0
      %2855 = vmatprep.subr.bf16.mxu0 0
      %2856 = vmatpush1.bf16.msra.mxu0 0
      %2857 = vmatprep.subr.bf16.mxu0 0
      %2858 = vmatpush1.bf16.msra.mxu0 0
      %2859 = vmatprep.subr.bf16.mxu0 0
      %2860 = vmatpush1.bf16.msra.mxu0 0
      %2861 = vmatprep.mubr.bf16.mxu0 0
      %2862 = vmatmul.mubr.bf16.gmra.mrb[0].mxu0 %v2762
      %v2863 = vpop.f32.mrb[0].mxu0
      %v2864 = vadd.f32 %v2673, %v2863
      %v2865 = vpop.f32.mrb[0].mxu0
      %v2866 = vadd.f32 %v2675, %v2865
      %v2867 = vpop.f32.mrb[0].mxu0
      %v2868 = vpop.f32.mrb[0].mxu0
      %2869 = vdwg.mxu0
      %2870 = vmatprep.subr.bf16.mxu0 %v2780
      %2871 = vmatpush1.bf16.msra.mxu0 %v2777
      %2872 = vmatprep.subr.bf16.mxu0 0
      %2873 = vmatpush1.bf16.msra.mxu0 0
      %2874 = vmatprep.subr.bf16.mxu0 0
      %2875 = vmatpush1.bf16.msra.mxu0 0
      %2876 = vmatprep.subr.bf16.mxu0 0
      %2877 = vmatpush1.bf16.msra.mxu0 0
      %2878 = vmatprep.subr.bf16.mxu0 0
      %2879 = vmatpush1.bf16.msra.mxu0 0
      %2880 = vmatprep.subr.bf16.mxu0 0
      %2881 = vmatpush1.bf16.msra.mxu0 0
      %2882 = vmatprep.subr.bf16.mxu0 0
      %2883 = vmatpush1.bf16.msra.mxu0 0
      %2884 = vmatprep.subr.bf16.mxu0 0
      %2885 = vmatpush1.bf16.msra.mxu0 0
      %2886 = vmatprep.subr.bf16.mxu0 0
      %2887 = vmatpush1.bf16.msra.mxu0 0
      %2888 = vmatprep.subr.bf16.mxu0 0
      %2889 = vmatpush1.bf16.msra.mxu0 0
      %2890 = vmatprep.subr.bf16.mxu0 0
      %2891 = vmatpush1.bf16.msra.mxu0 0
      %2892 = vmatprep.subr.bf16.mxu0 0
      %2893 = vmatpush1.bf16.msra.mxu0 0
      %2894 = vmatprep.subr.bf16.mxu0 0
      %2895 = vmatpush1.bf16.msra.mxu0 0
      %2896 = vmatprep.subr.bf16.mxu0 0
      %2897 = vmatpush1.bf16.msra.mxu0 0
      %2898 = vmatprep.subr.bf16.mxu0 0
      %2899 = vmatpush1.bf16.msra.mxu0 0
      %2900 = vmatprep.subr.bf16.mxu0 0
      %2901 = vmatpush1.bf16.msra.mxu0 0
      %2902 = vmatprep.mubr.bf16.mxu0 0
      %2903 = vmatmul.mubr.bf16.gmra.mrb[0].mxu0 %v2762
      %v2904 = vpop.f32.mrb[0].mxu0
      %v2905 = vadd.f32 %v2714, %v2904
      %v2906 = vpop.f32.mrb[0].mxu0
      %v2907 = vadd.f32 %v2716, %v2906
      %v2908 = vpop.f32.mrb[0].mxu0
      %v2909 = vpop.f32.mrb[0].mxu0
      %2910 = vdwg.mxu0
      %2911 = vmatprep.subr.bf16.mxu0 %v2786
      %2912 = vmatpush1.bf16.msra.mxu0 %v2783
      %2913 = vmatprep.subr.bf16.mxu0 0
      %2914 = vmatpush1.bf16.msra.mxu0 0
      %2915 = vmatprep.subr.bf16.mxu0 0
      %2916 = vmatpush1.bf16.msra.mxu0 0
      %2917 = vmatprep.subr.bf16.mxu0 0
      %2918 = vmatpush1.bf16.msra.mxu0 0
      %2919 = vmatprep.subr.bf16.mxu0 0
      %2920 = vmatpush1.bf16.msra.mxu0 0
      %2921 = vmatprep.subr.bf16.mxu0 0
      %2922 = vmatpush1.bf16.msra.mxu0 0
      %2923 = vmatprep.subr.bf16.mxu0 0
      %2924 = vmatpush1.bf16.msra.mxu0 0
      %2925 = vmatprep.subr.bf16.mxu0 0
      %2926 = vmatpush1.bf16.msra.mxu0 0
      %2927 = vmatprep.subr.bf16.mxu0 0
      %2928 = vmatpush1.bf16.msra.mxu0 0
      %2929 = vmatprep.subr.bf16.mxu0 0
      %2930 = vmatpush1.bf16.msra.mxu0 0
      %2931 = vmatprep.subr.bf16.mxu0 0
      %2932 = vmatpush1.bf16.msra.mxu0 0
      %2933 = vmatprep.subr.bf16.mxu0 0
      %2934 = vmatpush1.bf16.msra.mxu0 0
      %2935 = vmatprep.subr.bf16.mxu0 0
      %2936 = vmatpush1.bf16.msra.mxu0 0
      %2937 = vmatprep.subr.bf16.mxu0 0
      %2938 = vmatpush1.bf16.msra.mxu0 0
      %2939 = vmatprep.subr.bf16.mxu0 0
      %2940 = vmatpush1.bf16.msra.mxu0 0
      %2941 = vmatprep.subr.bf16.mxu0 0
      %2942 = vmatpush1.bf16.msra.mxu0 0
      %2943 = vmatprep.mubr.bf16.mxu0 0
      %2944 = vmatmul.mubr.bf16.gmra.mrb[0].mxu0 %v2762
      %v2945 = vpop.f32.mrb[0].mxu0
      %v2946 = vadd.f32 %v2755, %v2945
      %v2947 = vpop.f32.mrb[0].mxu0
      %v2948 = vadd.f32 %v2757, %v2947
      %v2949 = vpop.f32.mrb[0].mxu0
      %v2950 = vpop.f32.mrb[0].mxu0
      %2951 = vdwg.mxu0
      %s2952 = scalar_lea.vmem %s3, 24
      %v2953 = vld [vmem:[%s2952] sm:$0xf]
      %2954 = vrot.lane.b32.xlu0 %v2535, 64
      %v2955 = vpop.permute.xlu0 %2954
      %2956 = vrot.lane.b32.xlu0 %v2536, 64
      %v2957 = vpop.permute.xlu0 %2956
      %2958 = vrot.lane.b32.xlu0 %v2537, 64
      %v2959 = vpop.permute.xlu0 %2958
      %2960 = vrot.lane.b32.xlu0 %v2538, 64
      %v2961 = vpop.permute.xlu0 %2960
      %2962 = vrot.lane.b32.xlu0 %v2539, 64
      %v2963 = vpop.permute.xlu0 %2962
      %2964 = vrot.lane.b32.xlu0 %v2540, 64
      %v2965 = vpop.permute.xlu0 %2964
      %2966 = vrot.lane.b32.xlu0 %v2541, 64
      %v2967 = vpop.permute.xlu0 %2966
      %2968 = vrot.lane.b32.xlu0 %v2542, 64
      %v2969 = vpop.permute.xlu0 %2968
      %2970 = vrot.lane.b32.xlu0 %v2543, 64
      %v2971 = vpop.permute.xlu0 %2970
      %v2972 = vsel %vm841, %v2955, %v2957
      %v2973 = vsel %vm841, %v2957, %v2959
      %v2974 = vsel %vm841, %v2959, %v2961
      %v2975 = vsel %vm841, %v2961, %v2963
      %v2976 = vsel %vm841, %v2963, %v2965
      %v2977 = vsel %vm841, %v2965, %v2967
      %v2978 = vsel %vm841, %v2967, %v2969
      %v2979 = vsel %vm841, %v2969, %v2971
      %v2981 = vsel %vm437, %v2953, 0
      %v2984 = vsel %vm441, %v2972, 0
      %v2987 = vsel %vm441, %v2973, 0
      %v2990 = vsel %vm441, %v2974, 0
      %v2993 = vsel %vm441, %v2975, 0
      %v2996 = vsel %vm441, %v2976, 0
      %v2999 = vsel %vm441, %v2977, 0
      %v3002 = vsel %vm441, %v2978, 0
      %v3005 = vsel %vm441, %v2979, 0
      %3007 = vmatprep.subr.bf16.mxu0 %v2987
      %3008 = vmatpush1.bf16.msra.mxu0 %v2984
      %3009 = vmatprep.subr.bf16.mxu0 0
      %3010 = vmatpush1.bf16.msra.mxu0 0
      %3011 = vmatprep.subr.bf16.mxu0 0
      %3012 = vmatpush1.bf16.msra.mxu0 0
      %3013 = vmatprep.subr.bf16.mxu0 0
      %3014 = vmatpush1.bf16.msra.mxu0 0
      %3015 = vmatprep.subr.bf16.mxu0 0
      %3016 = vmatpush1.bf16.msra.mxu0 0
      %3017 = vmatprep.subr.bf16.mxu0 0
      %3018 = vmatpush1.bf16.msra.mxu0 0
      %3019 = vmatprep.subr.bf16.mxu0 0
      %3020 = vmatpush1.bf16.msra.mxu0 0
      %3021 = vmatprep.subr.bf16.mxu0 0
      %3022 = vmatpush1.bf16.msra.mxu0 0
      %3023 = vmatprep.subr.bf16.mxu0 0
      %3024 = vmatpush1.bf16.msra.mxu0 0
      %3025 = vmatprep.subr.bf16.mxu0 0
      %3026 = vmatpush1.bf16.msra.mxu0 0
      %3027 = vmatprep.subr.bf16.mxu0 0
      %3028 = vmatpush1.bf16.msra.mxu0 0
      %3029 = vmatprep.subr.bf16.mxu0 0
      %3030 = vmatpush1.bf16.msra.mxu0 0
      %3031 = vmatprep.subr.bf16.mxu0 0
      %3032 = vmatpush1.bf16.msra.mxu0 0
      %3033 = vmatprep.subr.bf16.mxu0 0
      %3034 = vmatpush1.bf16.msra.mxu0 0
      %3035 = vmatprep.subr.bf16.mxu0 0
      %3036 = vmatpush1.bf16.msra.mxu0 0
      %3037 = vmatprep.subr.bf16.mxu0 0
      %3038 = vmatpush1.bf16.msra.mxu0 0
      %3039 = vmatprep.mubr.bf16.mxu0 0
      %3040 = vmatmul.mubr.bf16.gmra.mrb[0].mxu0 %v2981
      %v3041 = vpop.f32.mrb[0].mxu0
      %v3042 = vadd.f32 0.0, %v3041
      %v3043 = vpop.f32.mrb[0].mxu0
      %v3044 = vadd.f32 0.0, %v3043
      %v3045 = vpop.f32.mrb[0].mxu0
      %v3046 = vpop.f32.mrb[0].mxu0
      %3047 = vdwg.mxu0
      %3048 = vmatprep.subr.bf16.mxu0 %v2993
      %3049 = vmatpush1.bf16.msra.mxu0 %v2990
      %3050 = vmatprep.subr.bf16.mxu0 0
      %3051 = vmatpush1.bf16.msra.mxu0 0
      %3052 = vmatprep.subr.bf16.mxu0 0
      %3053 = vmatpush1.bf16.msra.mxu0 0
      %3054 = vmatprep.subr.bf16.mxu0 0
      %3055 = vmatpush1.bf16.msra.mxu0 0
      %3056 = vmatprep.subr.bf16.mxu0 0
      %3057 = vmatpush1.bf16.msra.mxu0 0
      %3058 = vmatprep.subr.bf16.mxu0 0
      %3059 = vmatpush1.bf16.msra.mxu0 0
      %3060 = vmatprep.subr.bf16.mxu0 0
      %3061 = vmatpush1.bf16.msra.mxu0 0
      %3062 = vmatprep.subr.bf16.mxu0 0
      %3063 = vmatpush1.bf16.msra.mxu0 0
      %3064 = vmatprep.subr.bf16.mxu0 0
      %3065 = vmatpush1.bf16.msra.mxu0 0
      %3066 = vmatprep.subr.bf16.mxu0 0
      %3067 = vmatpush1.bf16.msra.mxu0 0
      %3068 = vmatprep.subr.bf16.mxu0 0
      %3069 = vmatpush1.bf16.msra.mxu0 0
      %3070 = vmatprep.subr.bf16.mxu0 0
      %3071 = vmatpush1.bf16.msra.mxu0 0
      %3072 = vmatprep.subr.bf16.mxu0 0
      %3073 = vmatpush1.bf16.msra.mxu0 0
      %3074 = vmatprep.subr.bf16.mxu0 0
      %3075 = vmatpush1.bf16.msra.mxu0 0
      %3076 = vmatprep.subr.bf16.mxu0 0
      %3077 = vmatpush1.bf16.msra.mxu0 0
      %3078 = vmatprep.subr.bf16.mxu0 0
      %3079 = vmatpush1.bf16.msra.mxu0 0
      %3080 = vmatprep.mubr.bf16.mxu0 0
      %3081 = vmatmul.mubr.bf16.gmra.mrb[0].mxu0 %v2981
      %v3082 = vpop.f32.mrb[0].mxu0
      %v3083 = vadd.f32 0.0, %v3082
      %v3084 = vpop.f32.mrb[0].mxu0
      %v3085 = vadd.f32 0.0, %v3084
      %v3086 = vpop.f32.mrb[0].mxu0
      %v3087 = vpop.f32.mrb[0].mxu0
      %3088 = vdwg.mxu0
      %3089 = vmatprep.subr.bf16.mxu0 %v2999
      %3090 = vmatpush1.bf16.msra.mxu0 %v2996
      %3091 = vmatprep.subr.bf16.mxu0 0
      %3092 = vmatpush1.bf16.msra.mxu0 0
      %3093 = vmatprep.subr.bf16.mxu0 0
      %3094 = vmatpush1.bf16.msra.mxu0 0
      %3095 = vmatprep.subr.bf16.mxu0 0
      %3096 = vmatpush1.bf16.msra.mxu0 0
      %3097 = vmatprep.subr.bf16.mxu0 0
      %3098 = vmatpush1.bf16.msra.mxu0 0
      %3099 = vmatprep.subr.bf16.mxu0 0
      %3100 = vmatpush1.bf16.msra.mxu0 0
      %3101 = vmatprep.subr.bf16.mxu0 0
      %3102 = vmatpush1.bf16.msra.mxu0 0
      %3103 = vmatprep.subr.bf16.mxu0 0
      %3104 = vmatpush1.bf16.msra.mxu0 0
      %3105 = vmatprep.subr.bf16.mxu0 0
      %3106 = vmatpush1.bf16.msra.mxu0 0
      %3107 = vmatprep.subr.bf16.mxu0 0
      %3108 = vmatpush1.bf16.msra.mxu0 0
      %3109 = vmatprep.subr.bf16.mxu0 0
      %3110 = vmatpush1.bf16.msra.mxu0 0
      %3111 = vmatprep.subr.bf16.mxu0 0
      %3112 = vmatpush1.bf16.msra.mxu0 0
      %3113 = vmatprep.subr.bf16.mxu0 0
      %3114 = vmatpush1.bf16.msra.mxu0 0
      %3115 = vmatprep.subr.bf16.mxu0 0
      %3116 = vmatpush1.bf16.msra.mxu0 0
      %3117 = vmatprep.subr.bf16.mxu0 0
      %3118 = vmatpush1.bf16.msra.mxu0 0
      %3119 = vmatprep.subr.bf16.mxu0 0
      %3120 = vmatpush1.bf16.msra.mxu0 0
      %3121 = vmatprep.mubr.bf16.mxu0 0
      %3122 = vmatmul.mubr.bf16.gmra.mrb[0].mxu0 %v2981
      %v3123 = vpop.f32.mrb[0].mxu0
      %v3124 = vadd.f32 0.0, %v3123
      %v3125 = vpop.f32.mrb[0].mxu0
      %v3126 = vadd.f32 0.0, %v3125
      %v3127 = vpop.f32.mrb[0].mxu0
      %v3128 = vpop.f32.mrb[0].mxu0
      %3129 = vdwg.mxu0
      %3130 = vmatprep.subr.bf16.mxu0 %v3005
      %3131 = vmatpush1.bf16.msra.mxu0 %v3002
      %3132 = vmatprep.subr.bf16.mxu0 0
      %3133 = vmatpush1.bf16.msra.mxu0 0
      %3134 = vmatprep.subr.bf16.mxu0 0
      %3135 = vmatpush1.bf16.msra.mxu0 0
      %3136 = vmatprep.subr.bf16.mxu0 0
      %3137 = vmatpush1.bf16.msra.mxu0 0
      %3138 = vmatprep.subr.bf16.mxu0 0
      %3139 = vmatpush1.bf16.msra.mxu0 0
      %3140 = vmatprep.subr.bf16.mxu0 0
      %3141 = vmatpush1.bf16.msra.mxu0 0
      %3142 = vmatprep.subr.bf16.mxu0 0
      %3143 = vmatpush1.bf16.msra.mxu0 0
      %3144 = vmatprep.subr.bf16.mxu0 0
      %3145 = vmatpush1.bf16.msra.mxu0 0
      %3146 = vmatprep.subr.bf16.mxu0 0
      %3147 = vmatpush1.bf16.msra.mxu0 0
      %3148 = vmatprep.subr.bf16.mxu0 0
      %3149 = vmatpush1.bf16.msra.mxu0 0
      %3150 = vmatprep.subr.bf16.mxu0 0
      %3151 = vmatpush1.bf16.msra.mxu0 0
      %3152 = vmatprep.subr.bf16.mxu0 0
      %3153 = vmatpush1.bf16.msra.mxu0 0
      %3154 = vmatprep.subr.bf16.mxu0 0
      %3155 = vmatpush1.bf16.msra.mxu0 0
      %3156 = vmatprep.subr.bf16.mxu0 0
      %3157 = vmatpush1.bf16.msra.mxu0 0
      %3158 = vmatprep.subr.bf16.mxu0 0
      %3159 = vmatpush1.bf16.msra.mxu0 0
      %3160 = vmatprep.subr.bf16.mxu0 0
      %3161 = vmatpush1.bf16.msra.mxu0 0
      %3162 = vmatprep.mubr.bf16.mxu0 0
      %3163 = vmatmul.mubr.bf16.gmra.mrb[0].mxu0 %v2981
      %v3164 = vpop.f32.mrb[0].mxu0
      %v3165 = vadd.f32 0.0, %v3164
      %v3166 = vpop.f32.mrb[0].mxu0
      %v3167 = vadd.f32 0.0, %v3166
      %v3168 = vpop.f32.mrb[0].mxu0
      %v3169 = vpop.f32.mrb[0].mxu0
      %3170 = vdwg.mxu0
      %v3171 = vadd.f32 %v2823, %v3042
      %v3172 = vadd.f32 %v2825, %v3044
      %v3173 = vadd.f32 %v2864, %v3083
      %v3174 = vadd.f32 %v2866, %v3085
      %v3175 = vadd.f32 %v2905, %v3124
      %v3176 = vadd.f32 %v2907, %v3126
      %v3177 = vadd.f32 %v2946, %v3165
      %v3178 = vadd.f32 %v2948, %v3167
      %v3179 = vmul.f32 %v3171, %v347
      %v3180 = vmul.f32 %v3172, %v348
      %v3181 = vmul.f32 %v3173, %v349
      %v3182 = vmul.f32 %v3174, %v350
      %v3183 = vmul.f32 %v3175, %v351
      %v3184 = vmul.f32 %v3176, %v352
      %v3185 = vmul.f32 %v3177, %v353
      %v3186 = vmul.f32 %v3178, %v354
      %v3187 = vadd.f32 %v3179, 0.0
      %v3188 = vadd.f32 %v3180, 0.0
      %v3189 = vadd.f32 %v3181, 0.0
      %v3190 = vadd.f32 %v3182, 0.0
      %v3191 = vadd.f32 %v3183, 0.0
      %v3192 = vadd.f32 %v3184, 0.0
      %v3193 = vadd.f32 %v3185, 0.0
      %v3194 = vadd.f32 %v3186, 0.0
      %s3195 = scalar_lea.vmem %s3, 4
      %v3196 = vld [vmem:[%s3195] sm:$0xf]
      %s3197 = scalar_lea.vmem %s3, 16
      %v3198 = vld [vmem:[%s3197] sm:$0xf]
      %3199 = vrot.lane.b32.xlu0 %v2535, 95
      %v3200 = vpop.permute.xlu0 %3199
      %3201 = vrot.lane.b32.xlu0 %v2536, 95
      %v3202 = vpop.permute.xlu0 %3201
      %3203 = vrot.lane.b32.xlu0 %v2537, 95
      %v3204 = vpop.permute.xlu0 %3203
      %3205 = vrot.lane.b32.xlu0 %v2538, 95
      %v3206 = vpop.permute.xlu0 %3205
      %3207 = vrot.lane.b32.xlu0 %v2539, 95
      %v3208 = vpop.permute.xlu0 %3207
      %3209 = vrot.lane.b32.xlu0 %v2540, 95
      %v3210 = vpop.permute.xlu0 %3209
      %3211 = vrot.lane.b32.xlu0 %v2541, 95
      %v3212 = vpop.permute.xlu0 %3211
      %3213 = vrot.lane.b32.xlu0 %v2542, 95
      %v3214 = vpop.permute.xlu0 %3213
      %3215 = vrot.lane.b32.xlu0 %v2543, 95
      %v3216 = vpop.permute.xlu0 %3215
      %v3217 = vsel %vm1087, %v3200, %v3202
      %v3218 = vsel %vm1087, %v3202, %v3204
      %v3219 = vsel %vm1087, %v3204, %v3206
      %v3220 = vsel %vm1087, %v3206, %v3208
      %v3221 = vsel %vm1087, %v3208, %v3210
      %v3222 = vsel %vm1087, %v3210, %v3212
      %v3223 = vsel %vm1087, %v3212, %v3214
      %v3224 = vsel %vm1087, %v3214, %v3216
      %v3226 = vsel %vm437, %v3198, 0
      %v3229 = vsel %vm441, %v3217, 0
      %v3232 = vsel %vm441, %v3218, 0
      %v3235 = vsel %vm441, %v3219, 0
      %v3238 = vsel %vm441, %v3220, 0
      %v3241 = vsel %vm441, %v3221, 0
      %v3244 = vsel %vm441, %v3222, 0
      %v3247 = vsel %vm441, %v3223, 0
      %v3250 = vsel %vm441, %v3224, 0
      %3252 = vmatprep.subr.bf16.mxu0 %v3232
      %3253 = vmatpush1.bf16.msra.mxu0 %v3229
      %3254 = vmatprep.subr.bf16.mxu0 0
      %3255 = vmatpush1.bf16.msra.mxu0 0
      %3256 = vmatprep.subr.bf16.mxu0 0
      %3257 = vmatpush1.bf16.msra.mxu0 0
      %3258 = vmatprep.subr.bf16.mxu0 0
      %3259 = vmatpush1.bf16.msra.mxu0 0
      %3260 = vmatprep.subr.bf16.mxu0 0
      %3261 = vmatpush1.bf16.msra.mxu0 0
      %3262 = vmatprep.subr.bf16.mxu0 0
      %3263 = vmatpush1.bf16.msra.mxu0 0
      %3264 = vmatprep.subr.bf16.mxu0 0
      %3265 = vmatpush1.bf16.msra.mxu0 0
      %3266 = vmatprep.subr.bf16.mxu0 0
      %3267 = vmatpush1.bf16.msra.mxu0 0
      %3268 = vmatprep.subr.bf16.mxu0 0
      %3269 = vmatpush1.bf16.msra.mxu0 0
      %3270 = vmatprep.subr.bf16.mxu0 0
      %3271 = vmatpush1.bf16.msra.mxu0 0
      %3272 = vmatprep.subr.bf16.mxu0 0
      %3273 = vmatpush1.bf16.msra.mxu0 0
      %3274 = vmatprep.subr.bf16.mxu0 0
      %3275 = vmatpush1.bf16.msra.mxu0 0
      %3276 = vmatprep.subr.bf16.mxu0 0
      %3277 = vmatpush1.bf16.msra.mxu0 0
      %3278 = vmatprep.subr.bf16.mxu0 0
      %3279 = vmatpush1.bf16.msra.mxu0 0
      %3280 = vmatprep.subr.bf16.mxu0 0
      %3281 = vmatpush1.bf16.msra.mxu0 0
      %3282 = vmatprep.subr.bf16.mxu0 0
      %3283 = vmatpush1.bf16.msra.mxu0 0
      %3284 = vmatprep.mubr.bf16.mxu0 0
      %3285 = vmatmul.mubr.bf16.gmra.mrb[0].mxu0 %v3226
      %v3286 = vpop.f32.mrb[0].mxu0
      %v3287 = vadd.f32 0.0, %v3286
      %v3288 = vpop.f32.mrb[0].mxu0
      %v3289 = vadd.f32 0.0, %v3288
      %v3290 = vpop.f32.mrb[0].mxu0
      %v3291 = vpop.f32.mrb[0].mxu0
      %3292 = vdwg.mxu0
      %3293 = vmatprep.subr.bf16.mxu0 %v3238
      %3294 = vmatpush1.bf16.msra.mxu0 %v3235
      %3295 = vmatprep.subr.bf16.mxu0 0
      %3296 = vmatpush1.bf16.msra.mxu0 0
      %3297 = vmatprep.subr.bf16.mxu0 0
      %3298 = vmatpush1.bf16.msra.mxu0 0
      %3299 = vmatprep.subr.bf16.mxu0 0
      %3300 = vmatpush1.bf16.msra.mxu0 0
      %3301 = vmatprep.subr.bf16.mxu0 0
      %3302 = vmatpush1.bf16.msra.mxu0 0
      %3303 = vmatprep.subr.bf16.mxu0 0
      %3304 = vmatpush1.bf16.msra.mxu0 0
      %3305 = vmatprep.subr.bf16.mxu0 0
      %3306 = vmatpush1.bf16.msra.mxu0 0
      %3307 = vmatprep.subr.bf16.mxu0 0
      %3308 = vmatpush1.bf16.msra.mxu0 0
      %3309 = vmatprep.subr.bf16.mxu0 0
      %3310 = vmatpush1.bf16.msra.mxu0 0
      %3311 = vmatprep.subr.bf16.mxu0 0
      %3312 = vmatpush1.bf16.msra.mxu0 0
      %3313 = vmatprep.subr.bf16.mxu0 0
      %3314 = vmatpush1.bf16.msra.mxu0 0
      %3315 = vmatprep.subr.bf16.mxu0 0
      %3316 = vmatpush1.bf16.msra.mxu0 0
      %3317 = vmatprep.subr.bf16.mxu0 0
      %3318 = vmatpush1.bf16.msra.mxu0 0
      %3319 = vmatprep.subr.bf16.mxu0 0
      %3320 = vmatpush1.bf16.msra.mxu0 0
      %3321 = vmatprep.subr.bf16.mxu0 0
      %3322 = vmatpush1.bf16.msra.mxu0 0
      %3323 = vmatprep.subr.bf16.mxu0 0
      %3324 = vmatpush1.bf16.msra.mxu0 0
      %3325 = vmatprep.mubr.bf16.mxu0 0
      %3326 = vmatmul.mubr.bf16.gmra.mrb[0].mxu0 %v3226
      %v3327 = vpop.f32.mrb[0].mxu0
      %v3328 = vadd.f32 0.0, %v3327
      %v3329 = vpop.f32.mrb[0].mxu0
      %v3330 = vadd.f32 0.0, %v3329
      %v3331 = vpop.f32.mrb[0].mxu0
      %v3332 = vpop.f32.mrb[0].mxu0
      %3333 = vdwg.mxu0
      %3334 = vmatprep.subr.bf16.mxu0 %v3244
      %3335 = vmatpush1.bf16.msra.mxu0 %v3241
      %3336 = vmatprep.subr.bf16.mxu0 0
      %3337 = vmatpush1.bf16.msra.mxu0 0
      %3338 = vmatprep.subr.bf16.mxu0 0
      %3339 = vmatpush1.bf16.msra.mxu0 0
      %3340 = vmatprep.subr.bf16.mxu0 0
      %3341 = vmatpush1.bf16.msra.mxu0 0
      %3342 = vmatprep.subr.bf16.mxu0 0
      %3343 = vmatpush1.bf16.msra.mxu0 0
      %3344 = vmatprep.subr.bf16.mxu0 0
      %3345 = vmatpush1.bf16.msra.mxu0 0
      %3346 = vmatprep.subr.bf16.mxu0 0
      %3347 = vmatpush1.bf16.msra.mxu0 0
      %3348 = vmatprep.subr.bf16.mxu0 0
      %3349 = vmatpush1.bf16.msra.mxu0 0
      %3350 = vmatprep.subr.bf16.mxu0 0
      %3351 = vmatpush1.bf16.msra.mxu0 0
      %3352 = vmatprep.subr.bf16.mxu0 0
      %3353 = vmatpush1.bf16.msra.mxu0 0
      %3354 = vmatprep.subr.bf16.mxu0 0
      %3355 = vmatpush1.bf16.msra.mxu0 0
      %3356 = vmatprep.subr.bf16.mxu0 0
      %3357 = vmatpush1.bf16.msra.mxu0 0
      %3358 = vmatprep.subr.bf16.mxu0 0
      %3359 = vmatpush1.bf16.msra.mxu0 0
      %3360 = vmatprep.subr.bf16.mxu0 0
      %3361 = vmatpush1.bf16.msra.mxu0 0
      %3362 = vmatprep.subr.bf16.mxu0 0
      %3363 = vmatpush1.bf16.msra.mxu0 0
      %3364 = vmatprep.subr.bf16.mxu0 0
      %3365 = vmatpush1.bf16.msra.mxu0 0
      %3366 = vmatprep.mubr.bf16.mxu0 0
      %3367 = vmatmul.mubr.bf16.gmra.mrb[0].mxu0 %v3226
      %v3368 = vpop.f32.mrb[0].mxu0
      %v3369 = vadd.f32 0.0, %v3368
      %v3370 = vpop.f32.mrb[0].mxu0
      %v3371 = vadd.f32 0.0, %v3370
      %v3372 = vpop.f32.mrb[0].mxu0
      %v3373 = vpop.f32.mrb[0].mxu0
      %3374 = vdwg.mxu0
      %3375 = vmatprep.subr.bf16.mxu0 %v3250
      %3376 = vmatpush1.bf16.msra.mxu0 %v3247
      %3377 = vmatprep.subr.bf16.mxu0 0
      %3378 = vmatpush1.bf16.msra.mxu0 0
      %3379 = vmatprep.subr.bf16.mxu0 0
      %3380 = vmatpush1.bf16.msra.mxu0 0
      %3381 = vmatprep.subr.bf16.mxu0 0
      %3382 = vmatpush1.bf16.msra.mxu0 0
      %3383 = vmatprep.subr.bf16.mxu0 0
      %3384 = vmatpush1.bf16.msra.mxu0 0
      %3385 = vmatprep.subr.bf16.mxu0 0
      %3386 = vmatpush1.bf16.msra.mxu0 0
      %3387 = vmatprep.subr.bf16.mxu0 0
      %3388 = vmatpush1.bf16.msra.mxu0 0
      %3389 = vmatprep.subr.bf16.mxu0 0
      %3390 = vmatpush1.bf16.msra.mxu0 0
      %3391 = vmatprep.subr.bf16.mxu0 0
      %3392 = vmatpush1.bf16.msra.mxu0 0
      %3393 = vmatprep.subr.bf16.mxu0 0
      %3394 = vmatpush1.bf16.msra.mxu0 0
      %3395 = vmatprep.subr.bf16.mxu0 0
      %3396 = vmatpush1.bf16.msra.mxu0 0
      %3397 = vmatprep.subr.bf16.mxu0 0
      %3398 = vmatpush1.bf16.msra.mxu0 0
      %3399 = vmatprep.subr.bf16.mxu0 0
      %3400 = vmatpush1.bf16.msra.mxu0 0
      %3401 = vmatprep.subr.bf16.mxu0 0
      %3402 = vmatpush1.bf16.msra.mxu0 0
      %3403 = vmatprep.subr.bf16.mxu0 0
      %3404 = vmatpush1.bf16.msra.mxu0 0
      %3405 = vmatprep.subr.bf16.mxu0 0
      %3406 = vmatpush1.bf16.msra.mxu0 0
      %3407 = vmatprep.mubr.bf16.mxu0 0
      %3408 = vmatmul.mubr.bf16.gmra.mrb[0].mxu0 %v3226
      %v3409 = vpop.f32.mrb[0].mxu0
      %v3410 = vadd.f32 0.0, %v3409
      %v3411 = vpop.f32.mrb[0].mxu0
      %v3412 = vadd.f32 0.0, %v3411
      %v3413 = vpop.f32.mrb[0].mxu0
      %v3414 = vpop.f32.mrb[0].mxu0
      %3415 = vdwg.mxu0
      %3416 = vrot.lane.b32.xlu0 %v2535, 127
      %v3417 = vpop.permute.xlu0 %3416
      %3418 = vrot.lane.b32.xlu0 %v2536, 127
      %v3419 = vpop.permute.xlu0 %3418
      %3420 = vrot.lane.b32.xlu0 %v2537, 127
      %v3421 = vpop.permute.xlu0 %3420
      %3422 = vrot.lane.b32.xlu0 %v2538, 127
      %v3423 = vpop.permute.xlu0 %3422
      %3424 = vrot.lane.b32.xlu0 %v2539, 127
      %v3425 = vpop.permute.xlu0 %3424
      %3426 = vrot.lane.b32.xlu0 %v2540, 127
      %v3427 = vpop.permute.xlu0 %3426
      %3428 = vrot.lane.b32.xlu0 %v2541, 127
      %v3429 = vpop.permute.xlu0 %3428
      %3430 = vrot.lane.b32.xlu0 %v2542, 127
      %v3431 = vpop.permute.xlu0 %3430
      %3432 = vrot.lane.b32.xlu0 %v2543, 127
      %v3433 = vpop.permute.xlu0 %3432
      %v3434 = vsel %vm1305, %v3417, %v3419
      %v3435 = vsel %vm1305, %v3419, %v3421
      %v3436 = vsel %vm1305, %v3421, %v3423
      %v3437 = vsel %vm1305, %v3423, %v3425
      %v3438 = vsel %vm1305, %v3425, %v3427
      %v3439 = vsel %vm1305, %v3427, %v3429
      %v3440 = vsel %vm1305, %v3429, %v3431
      %v3441 = vsel %vm1305, %v3431, %v3433
      %v3443 = vsel %vm437, %v3196, 0
      %v3446 = vsel %vm441, %v3434, 0
      %v3449 = vsel %vm441, %v3435, 0
      %v3452 = vsel %vm441, %v3436, 0
      %v3455 = vsel %vm441, %v3437, 0
      %v3458 = vsel %vm441, %v3438, 0
      %v3461 = vsel %vm441, %v3439, 0
      %v3464 = vsel %vm441, %v3440, 0
      %v3467 = vsel %vm441, %v3441, 0
      %3469 = vmatprep.subr.bf16.mxu0 %v3449
      %3470 = vmatpush1.bf16.msra.mxu0 %v3446
      %3471 = vmatprep.subr.bf16.mxu0 0
      %3472 = vmatpush1.bf16.msra.mxu0 0
      %3473 = vmatprep.subr.bf16.mxu0 0
      %3474 = vmatpush1.bf16.msra.mxu0 0
      %3475 = vmatprep.subr.bf16.mxu0 0
      %3476 = vmatpush1.bf16.msra.mxu0 0
      %3477 = vmatprep.subr.bf16.mxu0 0
      %3478 = vmatpush1.bf16.msra.mxu0 0
      %3479 = vmatprep.subr.bf16.mxu0 0
      %3480 = vmatpush1.bf16.msra.mxu0 0
      %3481 = vmatprep.subr.bf16.mxu0 0
      %3482 = vmatpush1.bf16.msra.mxu0 0
      %3483 = vmatprep.subr.bf16.mxu0 0
      %3484 = vmatpush1.bf16.msra.mxu0 0
      %3485 = vmatprep.subr.bf16.mxu0 0
      %3486 = vmatpush1.bf16.msra.mxu0 0
      %3487 = vmatprep.subr.bf16.mxu0 0
      %3488 = vmatpush1.bf16.msra.mxu0 0
      %3489 = vmatprep.subr.bf16.mxu0 0
      %3490 = vmatpush1.bf16.msra.mxu0 0
      %3491 = vmatprep.subr.bf16.mxu0 0
      %3492 = vmatpush1.bf16.msra.mxu0 0
      %3493 = vmatprep.subr.bf16.mxu0 0
      %3494 = vmatpush1.bf16.msra.mxu0 0
      %3495 = vmatprep.subr.bf16.mxu0 0
      %3496 = vmatpush1.bf16.msra.mxu0 0
      %3497 = vmatprep.subr.bf16.mxu0 0
      %3498 = vmatpush1.bf16.msra.mxu0 0
      %3499 = vmatprep.subr.bf16.mxu0 0
      %3500 = vmatpush1.bf16.msra.mxu0 0
      %3501 = vmatprep.mubr.bf16.mxu0 0
      %3502 = vmatmul.mubr.bf16.gmra.mrb[0].mxu0 %v3443
      %v3503 = vpop.f32.mrb[0].mxu0
      %v3504 = vadd.f32 %v3287, %v3503
      %v3505 = vpop.f32.mrb[0].mxu0
      %v3506 = vadd.f32 %v3289, %v3505
      %v3507 = vpop.f32.mrb[0].mxu0
      %v3508 = vpop.f32.mrb[0].mxu0
      %3509 = vdwg.mxu0
      %3510 = vmatprep.subr.bf16.mxu0 %v3455
      %3511 = vmatpush1.bf16.msra.mxu0 %v3452
      %3512 = vmatprep.subr.bf16.mxu0 0
      %3513 = vmatpush1.bf16.msra.mxu0 0
      %3514 = vmatprep.subr.bf16.mxu0 0
      %3515 = vmatpush1.bf16.msra.mxu0 0
      %3516 = vmatprep.subr.bf16.mxu0 0
      %3517 = vmatpush1.bf16.msra.mxu0 0
      %3518 = vmatprep.subr.bf16.mxu0 0
      %3519 = vmatpush1.bf16.msra.mxu0 0
      %3520 = vmatprep.subr.bf16.mxu0 0
      %3521 = vmatpush1.bf16.msra.mxu0 0
      %3522 = vmatprep.subr.bf16.mxu0 0
      %3523 = vmatpush1.bf16.msra.mxu0 0
      %3524 = vmatprep.subr.bf16.mxu0 0
      %3525 = vmatpush1.bf16.msra.mxu0 0
      %3526 = vmatprep.subr.bf16.mxu0 0
      %3527 = vmatpush1.bf16.msra.mxu0 0
      %3528 = vmatprep.subr.bf16.mxu0 0
      %3529 = vmatpush1.bf16.msra.mxu0 0
      %3530 = vmatprep.subr.bf16.mxu0 0
      %3531 = vmatpush1.bf16.msra.mxu0 0
      %3532 = vmatprep.subr.bf16.mxu0 0
      %3533 = vmatpush1.bf16.msra.mxu0 0
      %3534 = vmatprep.subr.bf16.mxu0 0
      %3535 = vmatpush1.bf16.msra.mxu0 0
      %3536 = vmatprep.subr.bf16.mxu0 0
      %3537 = vmatpush1.bf16.msra.mxu0 0
      %3538 = vmatprep.subr.bf16.mxu0 0
      %3539 = vmatpush1.bf16.msra.mxu0 0
      %3540 = vmatprep.subr.bf16.mxu0 0
      %3541 = vmatpush1.bf16.msra.mxu0 0
      %3542 = vmatprep.mubr.bf16.mxu0 0
      %3543 = vmatmul.mubr.bf16.gmra.mrb[0].mxu0 %v3443
      %v3544 = vpop.f32.mrb[0].mxu0
      %v3545 = vadd.f32 %v3328, %v3544
      %v3546 = vpop.f32.mrb[0].mxu0
      %v3547 = vadd.f32 %v3330, %v3546
      %v3548 = vpop.f32.mrb[0].mxu0
      %v3549 = vpop.f32.mrb[0].mxu0
      %3550 = vdwg.mxu0
      %3551 = vmatprep.subr.bf16.mxu0 %v3461
      %3552 = vmatpush1.bf16.msra.mxu0 %v3458
      %3553 = vmatprep.subr.bf16.mxu0 0
      %3554 = vmatpush1.bf16.msra.mxu0 0
      %3555 = vmatprep.subr.bf16.mxu0 0
      %3556 = vmatpush1.bf16.msra.mxu0 0
      %3557 = vmatprep.subr.bf16.mxu0 0
      %3558 = vmatpush1.bf16.msra.mxu0 0
      %3559 = vmatprep.subr.bf16.mxu0 0
      %3560 = vmatpush1.bf16.msra.mxu0 0
      %3561 = vmatprep.subr.bf16.mxu0 0
      %3562 = vmatpush1.bf16.msra.mxu0 0
      %3563 = vmatprep.subr.bf16.mxu0 0
      %3564 = vmatpush1.bf16.msra.mxu0 0
      %3565 = vmatprep.subr.bf16.mxu0 0
      %3566 = vmatpush1.bf16.msra.mxu0 0
      %3567 = vmatprep.subr.bf16.mxu0 0
      %3568 = vmatpush1.bf16.msra.mxu0 0
      %3569 = vmatprep.subr.bf16.mxu0 0
      %3570 = vmatpush1.bf16.msra.mxu0 0
      %3571 = vmatprep.subr.bf16.mxu0 0
      %3572 = vmatpush1.bf16.msra.mxu0 0
      %3573 = vmatprep.subr.bf16.mxu0 0
      %3574 = vmatpush1.bf16.msra.mxu0 0
      %3575 = vmatprep.subr.bf16.mxu0 0
      %3576 = vmatpush1.bf16.msra.mxu0 0
      %3577 = vmatprep.subr.bf16.mxu0 0
      %3578 = vmatpush1.bf16.msra.mxu0 0
      %3579 = vmatprep.subr.bf16.mxu0 0
      %3580 = vmatpush1.bf16.msra.mxu0 0
      %3581 = vmatprep.subr.bf16.mxu0 0
      %3582 = vmatpush1.bf16.msra.mxu0 0
      %3583 = vmatprep.mubr.bf16.mxu0 0
      %3584 = vmatmul.mubr.bf16.gmra.mrb[0].mxu0 %v3443
      %v3585 = vpop.f32.mrb[0].mxu0
      %v3586 = vadd.f32 %v3369, %v3585
      %v3587 = vpop.f32.mrb[0].mxu0
      %v3588 = vadd.f32 %v3371, %v3587
      %v3589 = vpop.f32.mrb[0].mxu0
      %v3590 = vpop.f32.mrb[0].mxu0
      %3591 = vdwg.mxu0
      %3592 = vmatprep.subr.bf16.mxu0 %v3467
      %3593 = vmatpush1.bf16.msra.mxu0 %v3464
      %3594 = vmatprep.subr.bf16.mxu0 0
      %3595 = vmatpush1.bf16.msra.mxu0 0
      %3596 = vmatprep.subr.bf16.mxu0 0
      %3597 = vmatpush1.bf16.msra.mxu0 0
      %3598 = vmatprep.subr.bf16.mxu0 0
      %3599 = vmatpush1.bf16.msra.mxu0 0
      %3600 = vmatprep.subr.bf16.mxu0 0
      %3601 = vmatpush1.bf16.msra.mxu0 0
      %3602 = vmatprep.subr.bf16.mxu0 0
      %3603 = vmatpush1.bf16.msra.mxu0 0
      %3604 = vmatprep.subr.bf16.mxu0 0
      %3605 = vmatpush1.bf16.msra.mxu0 0
      %3606 = vmatprep.subr.bf16.mxu0 0
      %3607 = vmatpush1.bf16.msra.mxu0 0
      %3608 = vmatprep.subr.bf16.mxu0 0
      %3609 = vmatpush1.bf16.msra.mxu0 0
      %3610 = vmatprep.subr.bf16.mxu0 0
      %3611 = vmatpush1.bf16.msra.mxu0 0
      %3612 = vmatprep.subr.bf16.mxu0 0
      %3613 = vmatpush1.bf16.msra.mxu0 0
      %3614 = vmatprep.subr.bf16.mxu0 0
      %3615 = vmatpush1.bf16.msra.mxu0 0
      %3616 = vmatprep.subr.bf16.mxu0 0
      %3617 = vmatpush1.bf16.msra.mxu0 0
      %3618 = vmatprep.subr.bf16.mxu0 0
      %3619 = vmatpush1.bf16.msra.mxu0 0
      %3620 = vmatprep.subr.bf16.mxu0 0
      %3621 = vmatpush1.bf16.msra.mxu0 0
      %3622 = vmatprep.subr.bf16.mxu0 0
      %3623 = vmatpush1.bf16.msra.mxu0 0
      %3624 = vmatprep.mubr.bf16.mxu0 0
      %3625 = vmatmul.mubr.bf16.gmra.mrb[0].mxu0 %v3443
      %v3626 = vpop.f32.mrb[0].mxu0
      %v3627 = vadd.f32 %v3410, %v3626
      %v3628 = vpop.f32.mrb[0].mxu0
      %v3629 = vadd.f32 %v3412, %v3628
      %v3630 = vpop.f32.mrb[0].mxu0
      %v3631 = vpop.f32.mrb[0].mxu0
      %3632 = vdwg.mxu0
      %s3633 = scalar_lea.vmem %s3, 28
      %v3634 = vld [vmem:[%s3633] sm:$0xf]
      %3635 = vrot.lane.b32.xlu0 %v2535, 63
      %v3636 = vpop.permute.xlu0 %3635
      %3637 = vrot.lane.b32.xlu0 %v2536, 63
      %v3638 = vpop.permute.xlu0 %3637
      %3639 = vrot.lane.b32.xlu0 %v2537, 63
      %v3640 = vpop.permute.xlu0 %3639
      %3641 = vrot.lane.b32.xlu0 %v2538, 63
      %v3642 = vpop.permute.xlu0 %3641
      %3643 = vrot.lane.b32.xlu0 %v2539, 63
      %v3644 = vpop.permute.xlu0 %3643
      %3645 = vrot.lane.b32.xlu0 %v2540, 63
      %v3646 = vpop.permute.xlu0 %3645
      %3647 = vrot.lane.b32.xlu0 %v2541, 63
      %v3648 = vpop.permute.xlu0 %3647
      %3649 = vrot.lane.b32.xlu0 %v2542, 63
      %v3650 = vpop.permute.xlu0 %3649
      %3651 = vrot.lane.b32.xlu0 %v2543, 63
      %v3652 = vpop.permute.xlu0 %3651
      %v3653 = vsel %vm1525, %v3636, %v3638
      %v3654 = vsel %vm1525, %v3638, %v3640
      %v3655 = vsel %vm1525, %v3640, %v3642
      %v3656 = vsel %vm1525, %v3642, %v3644
      %v3657 = vsel %vm1525, %v3644, %v3646
      %v3658 = vsel %vm1525, %v3646, %v3648
      %v3659 = vsel %vm1525, %v3648, %v3650
      %v3660 = vsel %vm1525, %v3650, %v3652
      %v3662 = vsel %vm437, %v3634, 0
      %v3665 = vsel %vm441, %v3653, 0
      %v3668 = vsel %vm441, %v3654, 0
      %v3671 = vsel %vm441, %v3655, 0
      %v3674 = vsel %vm441, %v3656, 0
      %v3677 = vsel %vm441, %v3657, 0
      %v3680 = vsel %vm441, %v3658, 0
      %v3683 = vsel %vm441, %v3659, 0
      %v3686 = vsel %vm441, %v3660, 0
      %3688 = vmatprep.subr.bf16.mxu0 %v3668
      %3689 = vmatpush1.bf16.msra.mxu0 %v3665
      %3690 = vmatprep.subr.bf16.mxu0 0
      %3691 = vmatpush1.bf16.msra.mxu0 0
      %3692 = vmatprep.subr.bf16.mxu0 0
      %3693 = vmatpush1.bf16.msra.mxu0 0
      %3694 = vmatprep.subr.bf16.mxu0 0
      %3695 = vmatpush1.bf16.msra.mxu0 0
      %3696 = vmatprep.subr.bf16.mxu0 0
      %3697 = vmatpush1.bf16.msra.mxu0 0
      %3698 = vmatprep.subr.bf16.mxu0 0
      %3699 = vmatpush1.bf16.msra.mxu0 0
      %3700 = vmatprep.subr.bf16.mxu0 0
      %3701 = vmatpush1.bf16.msra.mxu0 0
      %3702 = vmatprep.subr.bf16.mxu0 0
      %3703 = vmatpush1.bf16.msra.mxu0 0
      %3704 = vmatprep.subr.bf16.mxu0 0
      %3705 = vmatpush1.bf16.msra.mxu0 0
      %3706 = vmatprep.subr.bf16.mxu0 0
      %3707 = vmatpush1.bf16.msra.mxu0 0
      %3708 = vmatprep.subr.bf16.mxu0 0
      %3709 = vmatpush1.bf16.msra.mxu0 0
      %3710 = vmatprep.subr.bf16.mxu0 0
      %3711 = vmatpush1.bf16.msra.mxu0 0
      %3712 = vmatprep.subr.bf16.mxu0 0
      %3713 = vmatpush1.bf16.msra.mxu0 0
      %3714 = vmatprep.subr.bf16.mxu0 0
      %3715 = vmatpush1.bf16.msra.mxu0 0
      %3716 = vmatprep.subr.bf16.mxu0 0
      %3717 = vmatpush1.bf16.msra.mxu0 0
      %3718 = vmatprep.subr.bf16.mxu0 0
      %3719 = vmatpush1.bf16.msra.mxu0 0
      %3720 = vmatprep.mubr.bf16.mxu0 0
      %3721 = vmatmul.mubr.bf16.gmra.mrb[0].mxu0 %v3662
      %v3722 = vpop.f32.mrb[0].mxu0
      %v3723 = vadd.f32 0.0, %v3722
      %v3724 = vpop.f32.mrb[0].mxu0
      %v3725 = vadd.f32 0.0, %v3724
      %v3726 = vpop.f32.mrb[0].mxu0
      %v3727 = vpop.f32.mrb[0].mxu0
      %3728 = vdwg.mxu0
      %3729 = vmatprep.subr.bf16.mxu0 %v3674
      %3730 = vmatpush1.bf16.msra.mxu0 %v3671
      %3731 = vmatprep.subr.bf16.mxu0 0
      %3732 = vmatpush1.bf16.msra.mxu0 0
      %3733 = vmatprep.subr.bf16.mxu0 0
      %3734 = vmatpush1.bf16.msra.mxu0 0
      %3735 = vmatprep.subr.bf16.mxu0 0
      %3736 = vmatpush1.bf16.msra.mxu0 0
      %3737 = vmatprep.subr.bf16.mxu0 0
      %3738 = vmatpush1.bf16.msra.mxu0 0
      %3739 = vmatprep.subr.bf16.mxu0 0
      %3740 = vmatpush1.bf16.msra.mxu0 0
      %3741 = vmatprep.subr.bf16.mxu0 0
      %3742 = vmatpush1.bf16.msra.mxu0 0
      %3743 = vmatprep.subr.bf16.mxu0 0
      %3744 = vmatpush1.bf16.msra.mxu0 0
      %3745 = vmatprep.subr.bf16.mxu0 0
      %3746 = vmatpush1.bf16.msra.mxu0 0
      %3747 = vmatprep.subr.bf16.mxu0 0
      %3748 = vmatpush1.bf16.msra.mxu0 0
      %3749 = vmatprep.subr.bf16.mxu0 0
      %3750 = vmatpush1.bf16.msra.mxu0 0
      %3751 = vmatprep.subr.bf16.mxu0 0
      %3752 = vmatpush1.bf16.msra.mxu0 0
      %3753 = vmatprep.subr.bf16.mxu0 0
      %3754 = vmatpush1.bf16.msra.mxu0 0
      %3755 = vmatprep.subr.bf16.mxu0 0
      %3756 = vmatpush1.bf16.msra.mxu0 0
      %3757 = vmatprep.subr.bf16.mxu0 0
      %3758 = vmatpush1.bf16.msra.mxu0 0
      %3759 = vmatprep.subr.bf16.mxu0 0
      %3760 = vmatpush1.bf16.msra.mxu0 0
      %3761 = vmatprep.mubr.bf16.mxu0 0
      %3762 = vmatmul.mubr.bf16.gmra.mrb[0].mxu0 %v3662
      %v3763 = vpop.f32.mrb[0].mxu0
      %v3764 = vadd.f32 0.0, %v3763
      %v3765 = vpop.f32.mrb[0].mxu0
      %v3766 = vadd.f32 0.0, %v3765
      %v3767 = vpop.f32.mrb[0].mxu0
      %v3768 = vpop.f32.mrb[0].mxu0
      %3769 = vdwg.mxu0
      %3770 = vmatprep.subr.bf16.mxu0 %v3680
      %3771 = vmatpush1.bf16.msra.mxu0 %v3677
      %3772 = vmatprep.subr.bf16.mxu0 0
      %3773 = vmatpush1.bf16.msra.mxu0 0
      %3774 = vmatprep.subr.bf16.mxu0 0
      %3775 = vmatpush1.bf16.msra.mxu0 0
      %3776 = vmatprep.subr.bf16.mxu0 0
      %3777 = vmatpush1.bf16.msra.mxu0 0
      %3778 = vmatprep.subr.bf16.mxu0 0
      %3779 = vmatpush1.bf16.msra.mxu0 0
      %3780 = vmatprep.subr.bf16.mxu0 0
      %3781 = vmatpush1.bf16.msra.mxu0 0
      %3782 = vmatprep.subr.bf16.mxu0 0
      %3783 = vmatpush1.bf16.msra.mxu0 0
      %3784 = vmatprep.subr.bf16.mxu0 0
      %3785 = vmatpush1.bf16.msra.mxu0 0
      %3786 = vmatprep.subr.bf16.mxu0 0
      %3787 = vmatpush1.bf16.msra.mxu0 0
      %3788 = vmatprep.subr.bf16.mxu0 0
      %3789 = vmatpush1.bf16.msra.mxu0 0
      %3790 = vmatprep.subr.bf16.mxu0 0
      %3791 = vmatpush1.bf16.msra.mxu0 0
      %3792 = vmatprep.subr.bf16.mxu0 0
      %3793 = vmatpush1.bf16.msra.mxu0 0
      %3794 = vmatprep.subr.bf16.mxu0 0
      %3795 = vmatpush1.bf16.msra.mxu0 0
      %3796 = vmatprep.subr.bf16.mxu0 0
      %3797 = vmatpush1.bf16.msra.mxu0 0
      %3798 = vmatprep.subr.bf16.mxu0 0
      %3799 = vmatpush1.bf16.msra.mxu0 0
      %3800 = vmatprep.subr.bf16.mxu0 0
      %3801 = vmatpush1.bf16.msra.mxu0 0
      %3802 = vmatprep.mubr.bf16.mxu0 0
      %3803 = vmatmul.mubr.bf16.gmra.mrb[0].mxu0 %v3662
      %v3804 = vpop.f32.mrb[0].mxu0
      %v3805 = vadd.f32 0.0, %v3804
      %v3806 = vpop.f32.mrb[0].mxu0
      %v3807 = vadd.f32 0.0, %v3806
      %v3808 = vpop.f32.mrb[0].mxu0
      %v3809 = vpop.f32.mrb[0].mxu0
      %3810 = vdwg.mxu0
      %3811 = vmatprep.subr.bf16.mxu0 %v3686
      %3812 = vmatpush1.bf16.msra.mxu0 %v3683
      %3813 = vmatprep.subr.bf16.mxu0 0
      %3814 = vmatpush1.bf16.msra.mxu0 0
      %3815 = vmatprep.subr.bf16.mxu0 0
      %3816 = vmatpush1.bf16.msra.mxu0 0
      %3817 = vmatprep.subr.bf16.mxu0 0
      %3818 = vmatpush1.bf16.msra.mxu0 0
      %3819 = vmatprep.subr.bf16.mxu0 0
      %3820 = vmatpush1.bf16.msra.mxu0 0
      %3821 = vmatprep.subr.bf16.mxu0 0
      %3822 = vmatpush1.bf16.msra.mxu0 0
      %3823 = vmatprep.subr.bf16.mxu0 0
      %3824 = vmatpush1.bf16.msra.mxu0 0
      %3825 = vmatprep.subr.bf16.mxu0 0
      %3826 = vmatpush1.bf16.msra.mxu0 0
      %3827 = vmatprep.subr.bf16.mxu0 0
      %3828 = vmatpush1.bf16.msra.mxu0 0
      %3829 = vmatprep.subr.bf16.mxu0 0
      %3830 = vmatpush1.bf16.msra.mxu0 0
      %3831 = vmatprep.subr.bf16.mxu0 0
      %3832 = vmatpush1.bf16.msra.mxu0 0
      %3833 = vmatprep.subr.bf16.mxu0 0
      %3834 = vmatpush1.bf16.msra.mxu0 0
      %3835 = vmatprep.subr.bf16.mxu0 0
      %3836 = vmatpush1.bf16.msra.mxu0 0
      %3837 = vmatprep.subr.bf16.mxu0 0
      %3838 = vmatpush1.bf16.msra.mxu0 0
      %3839 = vmatprep.subr.bf16.mxu0 0
      %3840 = vmatpush1.bf16.msra.mxu0 0
      %3841 = vmatprep.subr.bf16.mxu0 0
      %3842 = vmatpush1.bf16.msra.mxu0 0
      %3843 = vmatprep.mubr.bf16.mxu0 0
      %3844 = vmatmul.mubr.bf16.gmra.mrb[0].mxu0 %v3662
      %v3845 = vpop.f32.mrb[0].mxu0
      %v3846 = vadd.f32 0.0, %v3845
      %v3847 = vpop.f32.mrb[0].mxu0
      %v3848 = vadd.f32 0.0, %v3847
      %v3849 = vpop.f32.mrb[0].mxu0
      %v3850 = vpop.f32.mrb[0].mxu0
      %3851 = vdwg.mxu0
      %v3852 = vadd.f32 %v3504, %v3723
      %v3853 = vadd.f32 %v3506, %v3725
      %v3854 = vadd.f32 %v3545, %v3764
      %v3855 = vadd.f32 %v3547, %v3766
      %v3856 = vadd.f32 %v3586, %v3805
      %v3857 = vadd.f32 %v3588, %v3807
      %v3858 = vadd.f32 %v3627, %v3846
      %v3859 = vadd.f32 %v3629, %v3848
      %v3860 = vadd.f32 %v3187, %v3852
      %v3861 = vadd.f32 %v3188, %v3853
      %v3862 = vadd.f32 %v3189, %v3854
      %v3863 = vadd.f32 %v3190, %v3855
      %v3864 = vadd.f32 %v3191, %v3856
      %v3865 = vadd.f32 %v3192, %v3857
      %v3866 = vadd.f32 %v3193, %v3858
      %v3867 = vadd.f32 %v3194, %v3859
      %s3868 = scalar_lea.vmem %s3, 8
      %v3869 = vld [vmem:[%s3868] sm:$0xf]
      %s3870 = scalar_lea.vmem %s3, 20
      %v3871 = vld [vmem:[%s3870] sm:$0xf]
      %3872 = vrot.lane.b32.xlu0 %v2535, 94
      %v3873 = vpop.permute.xlu0 %3872
      %3874 = vrot.lane.b32.xlu0 %v2536, 94
      %v3875 = vpop.permute.xlu0 %3874
      %3876 = vrot.lane.b32.xlu0 %v2537, 94
      %v3877 = vpop.permute.xlu0 %3876
      %3878 = vrot.lane.b32.xlu0 %v2538, 94
      %v3879 = vpop.permute.xlu0 %3878
      %3880 = vrot.lane.b32.xlu0 %v2539, 94
      %v3881 = vpop.permute.xlu0 %3880
      %3882 = vrot.lane.b32.xlu0 %v2540, 94
      %v3883 = vpop.permute.xlu0 %3882
      %3884 = vrot.lane.b32.xlu0 %v2541, 94
      %v3885 = vpop.permute.xlu0 %3884
      %3886 = vrot.lane.b32.xlu0 %v2542, 94
      %v3887 = vpop.permute.xlu0 %3886
      %3888 = vrot.lane.b32.xlu0 %v2543, 94
      %v3889 = vpop.permute.xlu0 %3888
      %v3890 = vsel %vm1763, %v3873, %v3875
      %v3891 = vsel %vm1763, %v3875, %v3877
      %v3892 = vsel %vm1763, %v3877, %v3879
      %v3893 = vsel %vm1763, %v3879, %v3881
      %v3894 = vsel %vm1763, %v3881, %v3883
      %v3895 = vsel %vm1763, %v3883, %v3885
      %v3896 = vsel %vm1763, %v3885, %v3887
      %v3897 = vsel %vm1763, %v3887, %v3889
      %v3899 = vsel %vm437, %v3871, 0
      %v3902 = vsel %vm441, %v3890, 0
      %v3905 = vsel %vm441, %v3891, 0
      %v3908 = vsel %vm441, %v3892, 0
      %v3911 = vsel %vm441, %v3893, 0
      %v3914 = vsel %vm441, %v3894, 0
      %v3917 = vsel %vm441, %v3895, 0
      %v3920 = vsel %vm441, %v3896, 0
      %v3923 = vsel %vm441, %v3897, 0
      %3925 = vmatprep.subr.bf16.mxu0 %v3905
      %3926 = vmatpush1.bf16.msra.mxu0 %v3902
      %3927 = vmatprep.subr.bf16.mxu0 0
      %3928 = vmatpush1.bf16.msra.mxu0 0
      %3929 = vmatprep.subr.bf16.mxu0 0
      %3930 = vmatpush1.bf16.msra.mxu0 0
      %3931 = vmatprep.subr.bf16.mxu0 0
      %3932 = vmatpush1.bf16.msra.mxu0 0
      %3933 = vmatprep.subr.bf16.mxu0 0
      %3934 = vmatpush1.bf16.msra.mxu0 0
      %3935 = vmatprep.subr.bf16.mxu0 0
      %3936 = vmatpush1.bf16.msra.mxu0 0
      %3937 = vmatprep.subr.bf16.mxu0 0
      %3938 = vmatpush1.bf16.msra.mxu0 0
      %3939 = vmatprep.subr.bf16.mxu0 0
      %3940 = vmatpush1.bf16.msra.mxu0 0
      %3941 = vmatprep.subr.bf16.mxu0 0
      %3942 = vmatpush1.bf16.msra.mxu0 0
      %3943 = vmatprep.subr.bf16.mxu0 0
      %3944 = vmatpush1.bf16.msra.mxu0 0
      %3945 = vmatprep.subr.bf16.mxu0 0
      %3946 = vmatpush1.bf16.msra.mxu0 0
      %3947 = vmatprep.subr.bf16.mxu0 0
      %3948 = vmatpush1.bf16.msra.mxu0 0
      %3949 = vmatprep.subr.bf16.mxu0 0
      %3950 = vmatpush1.bf16.msra.mxu0 0
      %3951 = vmatprep.subr.bf16.mxu0 0
      %3952 = vmatpush1.bf16.msra.mxu0 0
      %3953 = vmatprep.subr.bf16.mxu0 0
      %3954 = vmatpush1.bf16.msra.mxu0 0
      %3955 = vmatprep.subr.bf16.mxu0 0
      %3956 = vmatpush1.bf16.msra.mxu0 0
      %3957 = vmatprep.mubr.bf16.mxu0 0
      %3958 = vmatmul.mubr.bf16.gmra.mrb[0].mxu0 %v3899
      %v3959 = vpop.f32.mrb[0].mxu0
      %v3960 = vadd.f32 0.0, %v3959
      %v3961 = vpop.f32.mrb[0].mxu0
      %v3962 = vadd.f32 0.0, %v3961
      %v3963 = vpop.f32.mrb[0].mxu0
      %v3964 = vpop.f32.mrb[0].mxu0
      %3965 = vdwg.mxu0
      %3966 = vmatprep.subr.bf16.mxu0 %v3911
      %3967 = vmatpush1.bf16.msra.mxu0 %v3908
      %3968 = vmatprep.subr.bf16.mxu0 0
      %3969 = vmatpush1.bf16.msra.mxu0 0
      %3970 = vmatprep.subr.bf16.mxu0 0
      %3971 = vmatpush1.bf16.msra.mxu0 0
      %3972 = vmatprep.subr.bf16.mxu0 0
      %3973 = vmatpush1.bf16.msra.mxu0 0
      %3974 = vmatprep.subr.bf16.mxu0 0
      %3975 = vmatpush1.bf16.msra.mxu0 0
      %3976 = vmatprep.subr.bf16.mxu0 0
      %3977 = vmatpush1.bf16.msra.mxu0 0
      %3978 = vmatprep.subr.bf16.mxu0 0
      %3979 = vmatpush1.bf16.msra.mxu0 0
      %3980 = vmatprep.subr.bf16.mxu0 0
      %3981 = vmatpush1.bf16.msra.mxu0 0
      %3982 = vmatprep.subr.bf16.mxu0 0
      %3983 = vmatpush1.bf16.msra.mxu0 0
      %3984 = vmatprep.subr.bf16.mxu0 0
      %3985 = vmatpush1.bf16.msra.mxu0 0
      %3986 = vmatprep.subr.bf16.mxu0 0
      %3987 = vmatpush1.bf16.msra.mxu0 0
      %3988 = vmatprep.subr.bf16.mxu0 0
      %3989 = vmatpush1.bf16.msra.mxu0 0
      %3990 = vmatprep.subr.bf16.mxu0 0
      %3991 = vmatpush1.bf16.msra.mxu0 0
      %3992 = vmatprep.subr.bf16.mxu0 0
      %3993 = vmatpush1.bf16.msra.mxu0 0
      %3994 = vmatprep.subr.bf16.mxu0 0
      %3995 = vmatpush1.bf16.msra.mxu0 0
      %3996 = vmatprep.subr.bf16.mxu0 0
      %3997 = vmatpush1.bf16.msra.mxu0 0
      %3998 = vmatprep.mubr.bf16.mxu0 0
      %3999 = vmatmul.mubr.bf16.gmra.mrb[0].mxu0 %v3899
      %v4000 = vpop.f32.mrb[0].mxu0
      %v4001 = vadd.f32 0.0, %v4000
      %v4002 = vpop.f32.mrb[0].mxu0
      %v4003 = vadd.f32 0.0, %v4002
      %v4004 = vpop.f32.mrb[0].mxu0
      %v4005 = vpop.f32.mrb[0].mxu0
      %4006 = vdwg.mxu0
      %4007 = vmatprep.subr.bf16.mxu0 %v3917
      %4008 = vmatpush1.bf16.msra.mxu0 %v3914
      %4009 = vmatprep.subr.bf16.mxu0 0
      %4010 = vmatpush1.bf16.msra.mxu0 0
      %4011 = vmatprep.subr.bf16.mxu0 0
      %4012 = vmatpush1.bf16.msra.mxu0 0
      %4013 = vmatprep.subr.bf16.mxu0 0
      %4014 = vmatpush1.bf16.msra.mxu0 0
      %4015 = vmatprep.subr.bf16.mxu0 0
      %4016 = vmatpush1.bf16.msra.mxu0 0
      %4017 = vmatprep.subr.bf16.mxu0 0
      %4018 = vmatpush1.bf16.msra.mxu0 0
      %4019 = vmatprep.subr.bf16.mxu0 0
      %4020 = vmatpush1.bf16.msra.mxu0 0
      %4021 = vmatprep.subr.bf16.mxu0 0
      %4022 = vmatpush1.bf16.msra.mxu0 0
      %4023 = vmatprep.subr.bf16.mxu0 0
      %4024 = vmatpush1.bf16.msra.mxu0 0
      %4025 = vmatprep.subr.bf16.mxu0 0
      %4026 = vmatpush1.bf16.msra.mxu0 0
      %4027 = vmatprep.subr.bf16.mxu0 0
      %4028 = vmatpush1.bf16.msra.mxu0 0
      %4029 = vmatprep.subr.bf16.mxu0 0
      %4030 = vmatpush1.bf16.msra.mxu0 0
      %4031 = vmatprep.subr.bf16.mxu0 0
      %4032 = vmatpush1.bf16.msra.mxu0 0
      %4033 = vmatprep.subr.bf16.mxu0 0
      %4034 = vmatpush1.bf16.msra.mxu0 0
      %4035 = vmatprep.subr.bf16.mxu0 0
      %4036 = vmatpush1.bf16.msra.mxu0 0
      %4037 = vmatprep.subr.bf16.mxu0 0
      %4038 = vmatpush1.bf16.msra.mxu0 0
      %4039 = vmatprep.mubr.bf16.mxu0 0
      %4040 = vmatmul.mubr.bf16.gmra.mrb[0].mxu0 %v3899
      %v4041 = vpop.f32.mrb[0].mxu0
      %v4042 = vadd.f32 0.0, %v4041
      %v4043 = vpop.f32.mrb[0].mxu0
      %v4044 = vadd.f32 0.0, %v4043
      %v4045 = vpop.f32.mrb[0].mxu0
      %v4046 = vpop.f32.mrb[0].mxu0
      %4047 = vdwg.mxu0
      %4048 = vmatprep.subr.bf16.mxu0 %v3923
      %4049 = vmatpush1.bf16.msra.mxu0 %v3920
      %4050 = vmatprep.subr.bf16.mxu0 0
      %4051 = vmatpush1.bf16.msra.mxu0 0
      %4052 = vmatprep.subr.bf16.mxu0 0
      %4053 = vmatpush1.bf16.msra.mxu0 0
      %4054 = vmatprep.subr.bf16.mxu0 0
      %4055 = vmatpush1.bf16.msra.mxu0 0
      %4056 = vmatprep.subr.bf16.mxu0 0
      %4057 = vmatpush1.bf16.msra.mxu0 0
      %4058 = vmatprep.subr.bf16.mxu0 0
      %4059 = vmatpush1.bf16.msra.mxu0 0
      %4060 = vmatprep.subr.bf16.mxu0 0
      %4061 = vmatpush1.bf16.msra.mxu0 0
      %4062 = vmatprep.subr.bf16.mxu0 0
      %4063 = vmatpush1.bf16.msra.mxu0 0
      %4064 = vmatprep.subr.bf16.mxu0 0
      %4065 = vmatpush1.bf16.msra.mxu0 0
      %4066 = vmatprep.subr.bf16.mxu0 0
      %4067 = vmatpush1.bf16.msra.mxu0 0
      %4068 = vmatprep.subr.bf16.mxu0 0
      %4069 = vmatpush1.bf16.msra.mxu0 0
      %4070 = vmatprep.subr.bf16.mxu0 0
      %4071 = vmatpush1.bf16.msra.mxu0 0
      %4072 = vmatprep.subr.bf16.mxu0 0
      %4073 = vmatpush1.bf16.msra.mxu0 0
      %4074 = vmatprep.subr.bf16.mxu0 0
      %4075 = vmatpush1.bf16.msra.mxu0 0
      %4076 = vmatprep.subr.bf16.mxu0 0
      %4077 = vmatpush1.bf16.msra.mxu0 0
      %4078 = vmatprep.subr.bf16.mxu0 0
      %4079 = vmatpush1.bf16.msra.mxu0 0
      %4080 = vmatprep.mubr.bf16.mxu0 0
      %4081 = vmatmul.mubr.bf16.gmra.mrb[0].mxu0 %v3899
      %v4082 = vpop.f32.mrb[0].mxu0
      %v4083 = vadd.f32 0.0, %v4082
      %v4084 = vpop.f32.mrb[0].mxu0
      %v4085 = vadd.f32 0.0, %v4084
      %v4086 = vpop.f32.mrb[0].mxu0
      %v4087 = vpop.f32.mrb[0].mxu0
      %4088 = vdwg.mxu0
      %4089 = vrot.lane.b32.xlu0 %v2535, 126
      %v4090 = vpop.permute.xlu0 %4089
      %4091 = vrot.lane.b32.xlu0 %v2536, 126
      %v4092 = vpop.permute.xlu0 %4091
      %4093 = vrot.lane.b32.xlu0 %v2537, 126
      %v4094 = vpop.permute.xlu0 %4093
      %4095 = vrot.lane.b32.xlu0 %v2538, 126
      %v4096 = vpop.permute.xlu0 %4095
      %4097 = vrot.lane.b32.xlu0 %v2539, 126
      %v4098 = vpop.permute.xlu0 %4097
      %4099 = vrot.lane.b32.xlu0 %v2540, 126
      %v4100 = vpop.permute.xlu0 %4099
      %4101 = vrot.lane.b32.xlu0 %v2541, 126
      %v4102 = vpop.permute.xlu0 %4101
      %4103 = vrot.lane.b32.xlu0 %v2542, 126
      %v4104 = vpop.permute.xlu0 %4103
      %4105 = vrot.lane.b32.xlu0 %v2543, 126
      %v4106 = vpop.permute.xlu0 %4105
      %v4107 = vsel %vm1981, %v4090, %v4092
      %v4108 = vsel %vm1981, %v4092, %v4094
      %v4109 = vsel %vm1981, %v4094, %v4096
      %v4110 = vsel %vm1981, %v4096, %v4098
      %v4111 = vsel %vm1981, %v4098, %v4100
      %v4112 = vsel %vm1981, %v4100, %v4102
      %v4113 = vsel %vm1981, %v4102, %v4104
      %v4114 = vsel %vm1981, %v4104, %v4106
      %v4116 = vsel %vm437, %v3869, 0
      %v4119 = vsel %vm441, %v4107, 0
      %v4122 = vsel %vm441, %v4108, 0
      %v4125 = vsel %vm441, %v4109, 0
      %v4128 = vsel %vm441, %v4110, 0
      %v4131 = vsel %vm441, %v4111, 0
      %v4134 = vsel %vm441, %v4112, 0
      %v4137 = vsel %vm441, %v4113, 0
      %v4140 = vsel %vm441, %v4114, 0
      %4142 = vmatprep.subr.bf16.mxu0 %v4122
      %4143 = vmatpush1.bf16.msra.mxu0 %v4119
      %4144 = vmatprep.subr.bf16.mxu0 0
      %4145 = vmatpush1.bf16.msra.mxu0 0
      %4146 = vmatprep.subr.bf16.mxu0 0
      %4147 = vmatpush1.bf16.msra.mxu0 0
      %4148 = vmatprep.subr.bf16.mxu0 0
      %4149 = vmatpush1.bf16.msra.mxu0 0
      %4150 = vmatprep.subr.bf16.mxu0 0
      %4151 = vmatpush1.bf16.msra.mxu0 0
      %4152 = vmatprep.subr.bf16.mxu0 0
      %4153 = vmatpush1.bf16.msra.mxu0 0
      %4154 = vmatprep.subr.bf16.mxu0 0
      %4155 = vmatpush1.bf16.msra.mxu0 0
      %4156 = vmatprep.subr.bf16.mxu0 0
      %4157 = vmatpush1.bf16.msra.mxu0 0
      %4158 = vmatprep.subr.bf16.mxu0 0
      %4159 = vmatpush1.bf16.msra.mxu0 0
      %4160 = vmatprep.subr.bf16.mxu0 0
      %4161 = vmatpush1.bf16.msra.mxu0 0
      %4162 = vmatprep.subr.bf16.mxu0 0
      %4163 = vmatpush1.bf16.msra.mxu0 0
      %4164 = vmatprep.subr.bf16.mxu0 0
      %4165 = vmatpush1.bf16.msra.mxu0 0
      %4166 = vmatprep.subr.bf16.mxu0 0
      %4167 = vmatpush1.bf16.msra.mxu0 0
      %4168 = vmatprep.subr.bf16.mxu0 0
      %4169 = vmatpush1.bf16.msra.mxu0 0
      %4170 = vmatprep.subr.bf16.mxu0 0
      %4171 = vmatpush1.bf16.msra.mxu0 0
      %4172 = vmatprep.subr.bf16.mxu0 0
      %4173 = vmatpush1.bf16.msra.mxu0 0
      %4174 = vmatprep.mubr.bf16.mxu0 0
      %4175 = vmatmul.mubr.bf16.gmra.mrb[0].mxu0 %v4116
      %v4176 = vpop.f32.mrb[0].mxu0
      %v4177 = vadd.f32 %v3960, %v4176
      %v4178 = vpop.f32.mrb[0].mxu0
      %v4179 = vadd.f32 %v3962, %v4178
      %v4180 = vpop.f32.mrb[0].mxu0
      %v4181 = vpop.f32.mrb[0].mxu0
      %4182 = vdwg.mxu0
      %4183 = vmatprep.subr.bf16.mxu0 %v4128
      %4184 = vmatpush1.bf16.msra.mxu0 %v4125
      %4185 = vmatprep.subr.bf16.mxu0 0
      %4186 = vmatpush1.bf16.msra.mxu0 0
      %4187 = vmatprep.subr.bf16.mxu0 0
      %4188 = vmatpush1.bf16.msra.mxu0 0
      %4189 = vmatprep.subr.bf16.mxu0 0
      %4190 = vmatpush1.bf16.msra.mxu0 0
      %4191 = vmatprep.subr.bf16.mxu0 0
      %4192 = vmatpush1.bf16.msra.mxu0 0
      %4193 = vmatprep.subr.bf16.mxu0 0
      %4194 = vmatpush1.bf16.msra.mxu0 0
      %4195 = vmatprep.subr.bf16.mxu0 0
      %4196 = vmatpush1.bf16.msra.mxu0 0
      %4197 = vmatprep.subr.bf16.mxu0 0
      %4198 = vmatpush1.bf16.msra.mxu0 0
      %4199 = vmatprep.subr.bf16.mxu0 0
      %4200 = vmatpush1.bf16.msra.mxu0 0
      %4201 = vmatprep.subr.bf16.mxu0 0
      %4202 = vmatpush1.bf16.msra.mxu0 0
      %4203 = vmatprep.subr.bf16.mxu0 0
      %4204 = vmatpush1.bf16.msra.mxu0 0
      %4205 = vmatprep.subr.bf16.mxu0 0
      %4206 = vmatpush1.bf16.msra.mxu0 0
      %4207 = vmatprep.subr.bf16.mxu0 0
      %4208 = vmatpush1.bf16.msra.mxu0 0
      %4209 = vmatprep.subr.bf16.mxu0 0
      %4210 = vmatpush1.bf16.msra.mxu0 0
      %4211 = vmatprep.subr.bf16.mxu0 0
      %4212 = vmatpush1.bf16.msra.mxu0 0
      %4213 = vmatprep.subr.bf16.mxu0 0
      %4214 = vmatpush1.bf16.msra.mxu0 0
      %4215 = vmatprep.mubr.bf16.mxu0 0
      %4216 = vmatmul.mubr.bf16.gmra.mrb[0].mxu0 %v4116
      %v4217 = vpop.f32.mrb[0].mxu0
      %v4218 = vadd.f32 %v4001, %v4217
      %v4219 = vpop.f32.mrb[0].mxu0
      %v4220 = vadd.f32 %v4003, %v4219
      %v4221 = vpop.f32.mrb[0].mxu0
      %v4222 = vpop.f32.mrb[0].mxu0
      %4223 = vdwg.mxu0
      %4224 = vmatprep.subr.bf16.mxu0 %v4134
      %4225 = vmatpush1.bf16.msra.mxu0 %v4131
      %4226 = vmatprep.subr.bf16.mxu0 0
      %4227 = vmatpush1.bf16.msra.mxu0 0
      %4228 = vmatprep.subr.bf16.mxu0 0
      %4229 = vmatpush1.bf16.msra.mxu0 0
      %4230 = vmatprep.subr.bf16.mxu0 0
      %4231 = vmatpush1.bf16.msra.mxu0 0
      %4232 = vmatprep.subr.bf16.mxu0 0
      %4233 = vmatpush1.bf16.msra.mxu0 0
      %4234 = vmatprep.subr.bf16.mxu0 0
      %4235 = vmatpush1.bf16.msra.mxu0 0
      %4236 = vmatprep.subr.bf16.mxu0 0
      %4237 = vmatpush1.bf16.msra.mxu0 0
      %4238 = vmatprep.subr.bf16.mxu0 0
      %4239 = vmatpush1.bf16.msra.mxu0 0
      %4240 = vmatprep.subr.bf16.mxu0 0
      %4241 = vmatpush1.bf16.msra.mxu0 0
      %4242 = vmatprep.subr.bf16.mxu0 0
      %4243 = vmatpush1.bf16.msra.mxu0 0
      %4244 = vmatprep.subr.bf16.mxu0 0
      %4245 = vmatpush1.bf16.msra.mxu0 0
      %4246 = vmatprep.subr.bf16.mxu0 0
      %4247 = vmatpush1.bf16.msra.mxu0 0
      %4248 = vmatprep.subr.bf16.mxu0 0
      %4249 = vmatpush1.bf16.msra.mxu0 0
      %4250 = vmatprep.subr.bf16.mxu0 0
      %4251 = vmatpush1.bf16.msra.mxu0 0
      %4252 = vmatprep.subr.bf16.mxu0 0
      %4253 = vmatpush1.bf16.msra.mxu0 0
      %4254 = vmatprep.subr.bf16.mxu0 0
      %4255 = vmatpush1.bf16.msra.mxu0 0
      %4256 = vmatprep.mubr.bf16.mxu0 0
      %4257 = vmatmul.mubr.bf16.gmra.mrb[0].mxu0 %v4116
      %v4258 = vpop.f32.mrb[0].mxu0
      %v4259 = vadd.f32 %v4042, %v4258
      %v4260 = vpop.f32.mrb[0].mxu0
      %v4261 = vadd.f32 %v4044, %v4260
      %v4262 = vpop.f32.mrb[0].mxu0
      %v4263 = vpop.f32.mrb[0].mxu0
      %4264 = vdwg.mxu0
      %4265 = vmatprep.subr.bf16.mxu0 %v4140
      %4266 = vmatpush1.bf16.msra.mxu0 %v4137
      %4267 = vmatprep.subr.bf16.mxu0 0
      %4268 = vmatpush1.bf16.msra.mxu0 0
      %4269 = vmatprep.subr.bf16.mxu0 0
      %4270 = vmatpush1.bf16.msra.mxu0 0
      %4271 = vmatprep.subr.bf16.mxu0 0
      %4272 = vmatpush1.bf16.msra.mxu0 0
      %4273 = vmatprep.subr.bf16.mxu0 0
      %4274 = vmatpush1.bf16.msra.mxu0 0
      %4275 = vmatprep.subr.bf16.mxu0 0
      %4276 = vmatpush1.bf16.msra.mxu0 0
      %4277 = vmatprep.subr.bf16.mxu0 0
      %4278 = vmatpush1.bf16.msra.mxu0 0
      %4279 = vmatprep.subr.bf16.mxu0 0
      %4280 = vmatpush1.bf16.msra.mxu0 0
      %4281 = vmatprep.subr.bf16.mxu0 0
      %4282 = vmatpush1.bf16.msra.mxu0 0
      %4283 = vmatprep.subr.bf16.mxu0 0
      %4284 = vmatpush1.bf16.msra.mxu0 0
      %4285 = vmatprep.subr.bf16.mxu0 0
      %4286 = vmatpush1.bf16.msra.mxu0 0
      %4287 = vmatprep.subr.bf16.mxu0 0
      %4288 = vmatpush1.bf16.msra.mxu0 0
      %4289 = vmatprep.subr.bf16.mxu0 0
      %4290 = vmatpush1.bf16.msra.mxu0 0
      %4291 = vmatprep.subr.bf16.mxu0 0
      %4292 = vmatpush1.bf16.msra.mxu0 0
      %4293 = vmatprep.subr.bf16.mxu0 0
      %4294 = vmatpush1.bf16.msra.mxu0 0
      %4295 = vmatprep.subr.bf16.mxu0 0
      %4296 = vmatpush1.bf16.msra.mxu0 0
      %4297 = vmatprep.mubr.bf16.mxu0 0
      %4298 = vmatmul.mubr.bf16.gmra.mrb[0].mxu0 %v4116
      %v4299 = vpop.f32.mrb[0].mxu0
      %v4300 = vadd.f32 %v4083, %v4299
      %v4301 = vpop.f32.mrb[0].mxu0
      %v4302 = vadd.f32 %v4085, %v4301
      %v4303 = vpop.f32.mrb[0].mxu0
      %v4304 = vpop.f32.mrb[0].mxu0
      %4305 = vdwg.mxu0
      %s4306 = scalar_lea.vmem %s3, 32
      %v4307 = vld [vmem:[%s4306] sm:$0xf]
      %4308 = vrot.lane.b32.xlu0 %v2535, 62
      %v4309 = vpop.permute.xlu0 %4308
      %4310 = vrot.lane.b32.xlu0 %v2536, 62
      %v4311 = vpop.permute.xlu0 %4310
      %4312 = vrot.lane.b32.xlu0 %v2537, 62
      %v4313 = vpop.permute.xlu0 %4312
      %4314 = vrot.lane.b32.xlu0 %v2538, 62
      %v4315 = vpop.permute.xlu0 %4314
      %4316 = vrot.lane.b32.xlu0 %v2539, 62
      %v4317 = vpop.permute.xlu0 %4316
      %4318 = vrot.lane.b32.xlu0 %v2540, 62
      %v4319 = vpop.permute.xlu0 %4318
      %4320 = vrot.lane.b32.xlu0 %v2541, 62
      %v4321 = vpop.permute.xlu0 %4320
      %4322 = vrot.lane.b32.xlu0 %v2542, 62
      %v4323 = vpop.permute.xlu0 %4322
      %4324 = vrot.lane.b32.xlu0 %v2543, 62
      %v4325 = vpop.permute.xlu0 %4324
      %v4326 = vsel %vm2201, %v4309, %v4311
      %v4327 = vsel %vm2201, %v4311, %v4313
      %v4328 = vsel %vm2201, %v4313, %v4315
      %v4329 = vsel %vm2201, %v4315, %v4317
      %v4330 = vsel %vm2201, %v4317, %v4319
      %v4331 = vsel %vm2201, %v4319, %v4321
      %v4332 = vsel %vm2201, %v4321, %v4323
      %v4333 = vsel %vm2201, %v4323, %v4325
      %v4335 = vsel %vm437, %v4307, 0
      %v4338 = vsel %vm441, %v4326, 0
      %v4341 = vsel %vm441, %v4327, 0
      %v4344 = vsel %vm441, %v4328, 0
      %v4347 = vsel %vm441, %v4329, 0
      %v4350 = vsel %vm441, %v4330, 0
      %v4353 = vsel %vm441, %v4331, 0
      %v4356 = vsel %vm441, %v4332, 0
      %v4359 = vsel %vm441, %v4333, 0
      %4361 = vmatprep.subr.bf16.mxu0 %v4341
      %4362 = vmatpush1.bf16.msra.mxu0 %v4338
      %4363 = vmatprep.subr.bf16.mxu0 0
      %4364 = vmatpush1.bf16.msra.mxu0 0
      %4365 = vmatprep.subr.bf16.mxu0 0
      %4366 = vmatpush1.bf16.msra.mxu0 0
      %4367 = vmatprep.subr.bf16.mxu0 0
      %4368 = vmatpush1.bf16.msra.mxu0 0
      %4369 = vmatprep.subr.bf16.mxu0 0
      %4370 = vmatpush1.bf16.msra.mxu0 0
      %4371 = vmatprep.subr.bf16.mxu0 0
      %4372 = vmatpush1.bf16.msra.mxu0 0
      %4373 = vmatprep.subr.bf16.mxu0 0
      %4374 = vmatpush1.bf16.msra.mxu0 0
      %4375 = vmatprep.subr.bf16.mxu0 0
      %4376 = vmatpush1.bf16.msra.mxu0 0
      %4377 = vmatprep.subr.bf16.mxu0 0
      %4378 = vmatpush1.bf16.msra.mxu0 0
      %4379 = vmatprep.subr.bf16.mxu0 0
      %4380 = vmatpush1.bf16.msra.mxu0 0
      %4381 = vmatprep.subr.bf16.mxu0 0
      %4382 = vmatpush1.bf16.msra.mxu0 0
      %4383 = vmatprep.subr.bf16.mxu0 0
      %4384 = vmatpush1.bf16.msra.mxu0 0
      %4385 = vmatprep.subr.bf16.mxu0 0
      %4386 = vmatpush1.bf16.msra.mxu0 0
      %4387 = vmatprep.subr.bf16.mxu0 0
      %4388 = vmatpush1.bf16.msra.mxu0 0
      %4389 = vmatprep.subr.bf16.mxu0 0
      %4390 = vmatpush1.bf16.msra.mxu0 0
      %4391 = vmatprep.subr.bf16.mxu0 0
      %4392 = vmatpush1.bf16.msra.mxu0 0
      %4393 = vmatprep.mubr.bf16.mxu0 0
      %4394 = vmatmul.mubr.bf16.gmra.mrb[0].mxu0 %v4335
      %v4395 = vpop.f32.mrb[0].mxu0
      %v4396 = vadd.f32 0.0, %v4395
      %v4397 = vpop.f32.mrb[0].mxu0
      %v4398 = vadd.f32 0.0, %v4397
      %v4399 = vpop.f32.mrb[0].mxu0
      %v4400 = vpop.f32.mrb[0].mxu0
      %4401 = vdwg.mxu0
      %4402 = vmatprep.subr.bf16.mxu0 %v4347
      %4403 = vmatpush1.bf16.msra.mxu0 %v4344
      %4404 = vmatprep.subr.bf16.mxu0 0
      %4405 = vmatpush1.bf16.msra.mxu0 0
      %4406 = vmatprep.subr.bf16.mxu0 0
      %4407 = vmatpush1.bf16.msra.mxu0 0
      %4408 = vmatprep.subr.bf16.mxu0 0
      %4409 = vmatpush1.bf16.msra.mxu0 0
      %4410 = vmatprep.subr.bf16.mxu0 0
      %4411 = vmatpush1.bf16.msra.mxu0 0
      %4412 = vmatprep.subr.bf16.mxu0 0
      %4413 = vmatpush1.bf16.msra.mxu0 0
      %4414 = vmatprep.subr.bf16.mxu0 0
      %4415 = vmatpush1.bf16.msra.mxu0 0
      %4416 = vmatprep.subr.bf16.mxu0 0
      %4417 = vmatpush1.bf16.msra.mxu0 0
      %4418 = vmatprep.subr.bf16.mxu0 0
      %4419 = vmatpush1.bf16.msra.mxu0 0
      %4420 = vmatprep.subr.bf16.mxu0 0
      %4421 = vmatpush1.bf16.msra.mxu0 0
      %4422 = vmatprep.subr.bf16.mxu0 0
      %4423 = vmatpush1.bf16.msra.mxu0 0
      %4424 = vmatprep.subr.bf16.mxu0 0
      %4425 = vmatpush1.bf16.msra.mxu0 0
      %4426 = vmatprep.subr.bf16.mxu0 0
      %4427 = vmatpush1.bf16.msra.mxu0 0
      %4428 = vmatprep.subr.bf16.mxu0 0
      %4429 = vmatpush1.bf16.msra.mxu0 0
      %4430 = vmatprep.subr.bf16.mxu0 0
      %4431 = vmatpush1.bf16.msra.mxu0 0
      %4432 = vmatprep.subr.bf16.mxu0 0
      %4433 = vmatpush1.bf16.msra.mxu0 0
      %4434 = vmatprep.mubr.bf16.mxu0 0
      %4435 = vmatmul.mubr.bf16.gmra.mrb[0].mxu0 %v4335
      %v4436 = vpop.f32.mrb[0].mxu0
      %v4437 = vadd.f32 0.0, %v4436
      %v4438 = vpop.f32.mrb[0].mxu0
      %v4439 = vadd.f32 0.0, %v4438
      %v4440 = vpop.f32.mrb[0].mxu0
      %v4441 = vpop.f32.mrb[0].mxu0
      %4442 = vdwg.mxu0
      %4443 = vmatprep.subr.bf16.mxu0 %v4353
      %4444 = vmatpush1.bf16.msra.mxu0 %v4350
      %4445 = vmatprep.subr.bf16.mxu0 0
      %4446 = vmatpush1.bf16.msra.mxu0 0
      %4447 = vmatprep.subr.bf16.mxu0 0
      %4448 = vmatpush1.bf16.msra.mxu0 0
      %4449 = vmatprep.subr.bf16.mxu0 0
      %4450 = vmatpush1.bf16.msra.mxu0 0
      %4451 = vmatprep.subr.bf16.mxu0 0
      %4452 = vmatpush1.bf16.msra.mxu0 0
      %4453 = vmatprep.subr.bf16.mxu0 0
      %4454 = vmatpush1.bf16.msra.mxu0 0
      %4455 = vmatprep.subr.bf16.mxu0 0
      %4456 = vmatpush1.bf16.msra.mxu0 0
      %4457 = vmatprep.subr.bf16.mxu0 0
      %4458 = vmatpush1.bf16.msra.mxu0 0
      %4459 = vmatprep.subr.bf16.mxu0 0
      %4460 = vmatpush1.bf16.msra.mxu0 0
      %4461 = vmatprep.subr.bf16.mxu0 0
      %4462 = vmatpush1.bf16.msra.mxu0 0
      %4463 = vmatprep.subr.bf16.mxu0 0
      %4464 = vmatpush1.bf16.msra.mxu0 0
      %4465 = vmatprep.subr.bf16.mxu0 0
      %4466 = vmatpush1.bf16.msra.mxu0 0
      %4467 = vmatprep.subr.bf16.mxu0 0
      %4468 = vmatpush1.bf16.msra.mxu0 0
      %4469 = vmatprep.subr.bf16.mxu0 0
      %4470 = vmatpush1.bf16.msra.mxu0 0
      %4471 = vmatprep.subr.bf16.mxu0 0
      %4472 = vmatpush1.bf16.msra.mxu0 0
      %4473 = vmatprep.subr.bf16.mxu0 0
      %4474 = vmatpush1.bf16.msra.mxu0 0
      %4475 = vmatprep.mubr.bf16.mxu0 0
      %4476 = vmatmul.mubr.bf16.gmra.mrb[0].mxu0 %v4335
      %v4477 = vpop.f32.mrb[0].mxu0
      %v4478 = vadd.f32 0.0, %v4477
      %v4479 = vpop.f32.mrb[0].mxu0
      %v4480 = vadd.f32 0.0, %v4479
      %v4481 = vpop.f32.mrb[0].mxu0
      %v4482 = vpop.f32.mrb[0].mxu0
      %4483 = vdwg.mxu0
      %4484 = vmatprep.subr.bf16.mxu0 %v4359
      %4485 = vmatpush1.bf16.msra.mxu0 %v4356
      %4486 = vmatprep.subr.bf16.mxu0 0
      %4487 = vmatpush1.bf16.msra.mxu0 0
      %4488 = vmatprep.subr.bf16.mxu0 0
      %4489 = vmatpush1.bf16.msra.mxu0 0
      %4490 = vmatprep.subr.bf16.mxu0 0
      %4491 = vmatpush1.bf16.msra.mxu0 0
      %4492 = vmatprep.subr.bf16.mxu0 0
      %4493 = vmatpush1.bf16.msra.mxu0 0
      %4494 = vmatprep.subr.bf16.mxu0 0
      %4495 = vmatpush1.bf16.msra.mxu0 0
      %4496 = vmatprep.subr.bf16.mxu0 0
      %4497 = vmatpush1.bf16.msra.mxu0 0
      %4498 = vmatprep.subr.bf16.mxu0 0
      %4499 = vmatpush1.bf16.msra.mxu0 0
      %4500 = vmatprep.subr.bf16.mxu0 0
      %4501 = vmatpush1.bf16.msra.mxu0 0
      %4502 = vmatprep.subr.bf16.mxu0 0
      %4503 = vmatpush1.bf16.msra.mxu0 0
      %4504 = vmatprep.subr.bf16.mxu0 0
      %4505 = vmatpush1.bf16.msra.mxu0 0
      %4506 = vmatprep.subr.bf16.mxu0 0
      %4507 = vmatpush1.bf16.msra.mxu0 0
      %4508 = vmatprep.subr.bf16.mxu0 0
      %4509 = vmatpush1.bf16.msra.mxu0 0
      %4510 = vmatprep.subr.bf16.mxu0 0
      %4511 = vmatpush1.bf16.msra.mxu0 0
      %4512 = vmatprep.subr.bf16.mxu0 0
      %4513 = vmatpush1.bf16.msra.mxu0 0
      %4514 = vmatprep.subr.bf16.mxu0 0
      %4515 = vmatpush1.bf16.msra.mxu0 0
      %4516 = vmatprep.mubr.bf16.mxu0 0
      %4517 = vmatmul.mubr.bf16.gmra.mrb[0].mxu0 %v4335
      %v4518 = vpop.f32.mrb[0].mxu0
      %v4519 = vadd.f32 0.0, %v4518
      %v4520 = vpop.f32.mrb[0].mxu0
      %v4521 = vadd.f32 0.0, %v4520
      %v4522 = vpop.f32.mrb[0].mxu0
      %v4523 = vpop.f32.mrb[0].mxu0
      %4524 = vdwg.mxu0
      %v4525 = vadd.f32 %v4177, %v4396
      %v4526 = vadd.f32 %v4179, %v4398
      %v4527 = vadd.f32 %v4218, %v4437
      %v4528 = vadd.f32 %v4220, %v4439
      %v4529 = vadd.f32 %v4259, %v4478
      %v4530 = vadd.f32 %v4261, %v4480
      %v4531 = vadd.f32 %v4300, %v4519
      %v4532 = vadd.f32 %v4302, %v4521
      %v4533 = vmul.f32 %v4525, %v371
      %v4534 = vmul.f32 %v4526, %v372
      %v4535 = vmul.f32 %v4527, %v373
      %v4536 = vmul.f32 %v4528, %v374
      %v4537 = vmul.f32 %v4529, %v375
      %v4538 = vmul.f32 %v4530, %v376
      %v4539 = vmul.f32 %v4531, %v377
      %v4540 = vmul.f32 %v4532, %v378
      %v4541 = vadd.f32 %v3860, %v4533
      %v4542 = vadd.f32 %v3861, %v4534
      %v4543 = vadd.f32 %v3862, %v4535
      %v4544 = vadd.f32 %v3863, %v4536
      %v4545 = vadd.f32 %v3864, %v4537
      %v4546 = vadd.f32 %v3865, %v4538
      %v4547 = vadd.f32 %v3866, %v4539
      %v4548 = vadd.f32 %v3867, %v4540
      %v4549 = vld [vmem:[%s4] sm:$0xff]
      %4551 = vset.pattern.permute.xlu0 0
      %4552 = vperm.xlu0 %4551, %v4549
      %v4553 = vpop.permute.xlu0 %4552
      %v4555 = vadd.f32 %v4541, %v4553
      %v4556 = vadd.f32 %v4542, %v4553
      %v4557 = vadd.f32 %v4543, %v4553
      %v4558 = vadd.f32 %v4544, %v4553
      %v4559 = vadd.f32 %v4545, %v4553
      %v4560 = vadd.f32 %v4546, %v4553
      %v4561 = vadd.f32 %v4547, %v4553
      %v4562 = vadd.f32 %v4548, %v4553
      %v4563 = vmax.f32 %v4555, 0.0
      %v4564 = vmax.f32 %v4556, 0.0
      %v4565 = vmax.f32 %v4557, 0.0
      %v4566 = vmax.f32 %v4558, 0.0
      %v4567 = vmax.f32 %v4559, 0.0
      %v4568 = vmax.f32 %v4560, 0.0
      %v4569 = vmax.f32 %v4561, 0.0
      %v4570 = vmax.f32 %v4562, 0.0
      %4571 = vst [vmem:[%s224] sm:$0xff] %v4563
      %4572 = vst [vmem:[%s224 + $0x8] sm:$0xff] %v4564
      %4573 = vst [vmem:[%s224 + $0x10] sm:$0xff] %v4565
      %4574 = vst [vmem:[%s224 + $0x18] sm:$0xff] %v4566
      %4575 = vst [vmem:[%s224 + $0x20] sm:$0xff] %v4567
      %4576 = vst [vmem:[%s224 + $0x28] sm:$0xff] %v4568
      %4577 = vst [vmem:[%s224 + $0x30] sm:$0xff] %v4569
      %4578 = vst [vmem:[%s224 + $0x38] sm:$0xff] %v4570
      %p4579 = scmp.lt.s32.totalorder %s16, 1
      %s4580 = scalar_select %p4579, %s16, 1
      %s4581 = smul.addr %s4580, 8
      %s4582 = smul.addr %s4581, 8
      %s4583 = scalar_lea.vmem %s5, %s4582
      // Predicated region
      $region41: #{decoder_block_forward.1} parent=39 // pred_check
        %p4584 = pneg %p144
      $region42: #{decoder_block_forward.1} parent=39 // pred_check_branch
        %4586 = sbr.rel (%p4584) target = $region44
      $region43: #{decoder_block_forward.1} parent=39 // pred_region
        _
      $region44: #{decoder_block_forward.1} parent=39 // pred_fallthru
        _
    $region40: #{decoder_block_forward.1} parent=5 // pred_fallthru
      _
    %p4587 = scmp.le.s32.totalorder 2, %s11
    // Predicated region
    $region45: #{decoder_block_forward.1} parent=5 // pred_check
      %p4588 = pneg %p4587
    $region46: #{decoder_block_forward.1} parent=5 // pred_check_branch
      %4590 = sbr.rel (%p4588) target = $region48
    $region47: #{decoder_block_forward.1} parent=5 // pred_region
      %s4591 = ssub.s32 %s11, 2
      // Predicated region
      $region49: #{decoder_block_forward.1} parent=47 // pred_check
        %p4592 = pneg %p150
      $region50: #{decoder_block_forward.1} parent=47 // pred_check_branch
        %4594 = sbr.rel (%p4592) target = $region52
      $region51: #{decoder_block_forward.1} parent=47 // pred_region
        %p4595 = scmp.lt.s32.totalorder %s17, 1
        %s4596 = scalar_select %p4595, %s17, 1
        %s4597 = smul.addr %s4596, 8
        %s4598 = smul.addr %s4597, 8
        %s4599 = scalar_lea.vmem %s5, %s4598
      $region52: #{decoder_block_forward.1} parent=47 // pred_fallthru
        _
    $region48: #{decoder_block_forward.1} parent=5 // pred_fallthru
      _
  $region6: #{decoder_block_forward.1} parent=0 // loop_footer
    %s15 = sadd.s32 1, %s11
  $region7: #{decoder_block_forward.1} parent=0 // loop_footer_branch
    %10 = sbr.rel target = $region3
  $region8: #{decoder_block_forward.1} parent=0 // loop_exit
    _

</llo_original>
